<compile_context>
chip_gen: v5e
topology: v5e:2x2
jax: 0.10.0
libtpu: 0.0.40
codegen_flags: <defaults>
</compile_context>

<pallas_src>
import functools

import jax
import jax.numpy as jnp
from jax import lax
from jax.experimental import pallas as pl
from jax.experimental.pallas import tpu as pltpu


# ----------------------------------------------------------------------------
# Fused kernel: conv stack -> hoisted q_r -> K VI sweeps -> critic + obs MLP.
# Everything is a 2-D matmul on lane-dense (NB, features) activations.
# ----------------------------------------------------------------------------
def _vin_kernel(x_ref, m1_ref, b1_ref, m2_ref, b2_ref, m3_ref, b3_ref,
                mq_ref, cw_ref, wc_ref, bc_ref,
                obs_ref, wf1_ref, bf1_ref, wf2_ref, bf2_ref,
                critic_ref, action_ref,
                *, K, HW):
    NB = x_ref.shape[0]
    LQ = cw_ref.shape[1] // HW

    def mm(a, b):
        return jnp.dot(a, b, preferred_element_type=jnp.float32)

    def relu(z):
        return jnp.maximum(z, 0.0)

    # --- conv stack: each layer is one MXU matmul (BN folded into the operator,
    #     bias pre-broadcast to the [pixel*channel] layout) ---------------------
    a = x_ref[...].reshape(NB, x_ref.shape[2])                  # (NB, HW*Cin)
    a = relu(mm(a, m1_ref[...]) + b1_ref[...])                  # (NB, HW*C0)
    a = relu(mm(a, m2_ref[...]) + b2_ref[...])                  # (NB, HW*C1)
    a = relu(mm(a, m3_ref[...]) + b3_ref[...])                  # (NB, HW*C2)

    # --- hoisted q_r = conv5x5(conv1x1(h3, wr), wq); output layout [a*HW + p] ---
    q_r = mm(a, mq_ref[...])                                    # (NB, LQ*HW)

    def max_over_actions(q):
        v = q[:, 0:HW]
        for a_idx in range(1, LQ):
            v = jnp.maximum(v, q[:, a_idx * HW:(a_idx + 1) * HW])
        return v                                                # (NB, HW)

    # --- K value-iteration sweeps, all on the MXU:
    #     q = q_r + conv5x5(v, w)  ==  q_r + V @ Cw ;  v = max_a q --------------
    # (Python unroll is fine for small K; switch to lax.fori_loop if K grows.)
    cw = cw_ref[...]                                            # (HW, LQ*HW)
    v = max_over_actions(q_r)
    for _ in range(K):
        v = max_over_actions(q_r + mm(v, cw))

    # --- critic head: batched (NB, HW) @ (HW, 1) --------------------------------
    critic = mm(v, wc_ref[...]) + bc_ref[...]                   # (NB, 1)
    critic_ref[...] = critic.reshape(NB, 1, 1)

    # --- action head: relu(fc2(relu(fc1(obs)))) ---------------------------------
    o = obs_ref[...].reshape(NB, obs_ref.shape[2])
    hfc = relu(mm(o, wf1_ref[...]) + bf1_ref[...])
    act = relu(mm(hfc, wf2_ref[...]) + bf2_ref[...])
    action_ref[...] = act.reshape(NB, 1, act.shape[1])


# ----------------------------------------------------------------------------
# Host-side (wrapper) construction of dense conv operators.
# These are weight-only transforms, done once outside the kernel.
# ----------------------------------------------------------------------------
def _window_idx(H, W, kh, kw):
    ys = jnp.arange(H)
    xs = jnp.arange(W)
    dy = ys[:, None] - ys[None, :] + kh // 2          # dy[y_in, y_out] = y_in - y_out + kh//2
    dx = xs[:, None] - xs[None, :] + kw // 2
    my = (dy >= 0) & (dy < kh)
    mx = (dx >= 0) & (dx < kw)
    return jnp.clip(dy, 0, kh - 1), jnp.clip(dx, 0, kw - 1), my, mx


def conv_as_matmul_op(w, H, W, out_layout="pc"):
    """Dense operator for a 'same'-padded conv with HWIO weight w (kh,kw,Cin,Cout).

    Rows are laid out [p_in*Cin + ci].  Columns:
      out_layout == "pc": [p_out*Cout + co]   (activation layout of the conv stack)
      out_layout == "cp": [co*HW + p_out]     (q layout: action-major, pixel-minor)
    """
    kh, kw, cin, cout = w.shape
    dy, dx, my, mx = _window_idx(H, W, kh, kw)
    # t[y_in, y_out, x_in, x_out, ci, co] = w[y_in-y_out+kh//2, x_in-x_out+kw//2, ci, co]
    t = w[dy[:, :, None, None], dx[None, None, :, :], :, :]
    mask = (my[:, :, None, None] & mx[None, None, :, :])[..., None, None]
    t = jnp.where(mask, t, 0.0)
    if out_layout == "pc":
        t = jnp.transpose(t, (0, 2, 4, 1, 3, 5))      # (y_in, x_in, ci, y_out, x_out, co)
    else:
        t = jnp.transpose(t, (0, 2, 4, 5, 1, 3))      # (y_in, x_in, ci, co, y_out, x_out)
    return t.reshape(H * W * cin, H * W * cout)


# ----------------------------------------------------------------------------
# Wrapper: layout conversion, BN/conv folding, operator build, pallas_call glue
# ----------------------------------------------------------------------------
def vin_forward(x_nchw, obs, p, *, K, NB=None):
    N, Cin, H, W = x_nchw.shape
    HW = H * W
    C2 = p['w3'].shape[3]
    OBS = p['wf1'].shape[0]
    ACT = p['wf2'].shape[1]

    # dense conv operators (weight preprocessing; one MXU matmul per layer in-kernel)
    m1 = conv_as_matmul_op(p['w1'], H, W)                        # (HW*Cin, HW*C0)
    m2 = conv_as_matmul_op(p['w2'], H, W)                        # (HW*C0, HW*C1)
    m3 = conv_as_matmul_op(p['w3'], H, W)                        # (HW*C1, HW*C2)
    b1f = jnp.tile(p['b1'], (1, HW))                             # (1, HW*C0), layout [p*C0+co]
    b2f = jnp.tile(p['b2'], (1, HW))
    b3f = jnp.tile(p['b3'], (1, HW))
    # fold the 1x1 reward conv into the 5x5 q conv: w_comb[dy,dx,c,a] = wr[c]*wq[dy,dx,0,a]
    w_comb = p['wr'].reshape(1, 1, C2, 1) * p['wq']              # (5,5,C2,LQ)
    mq = conv_as_matmul_op(w_comb, H, W, out_layout="cp")        # (HW*C2, LQ*HW)
    cw = conv_as_matmul_op(p['ww'], H, W, out_layout="cp")       # (HW,    LQ*HW)

    # batch blocking: default keeps the grid length at 2 (both v7x cores busy);
    # on v5e/v6e a caller can pass NB=N for a single grid step.
    if NB is None:
        NB = max(1, N // 2)
    G = -(-N // NB)
    N_pad = G * NB

    x = jnp.transpose(x_nchw, (0, 2, 3, 1)).astype(jnp.float32)  # NCHW -> NHWC
    x = x.reshape(N, 1, HW * Cin)                                # layout [p*Cin + c]
    obs3 = obs.astype(jnp.float32).reshape(N, 1, OBS)
    if N_pad != N:
        x = jnp.pad(x, ((0, N_pad - N), (0, 0), (0, 0)))
        obs3 = jnp.pad(obs3, ((0, N_pad - N), (0, 0), (0, 0)))

    inputs = (x, m1, b1f, m2, b2f, m3, b3f, mq, cw,
              p['wc'], p['bc'], obs3, p['wf1'], p['bf1'], p['wf2'], p['bf2'])

    def const_spec(arr):
        zeros = (0,) * arr.ndim
        return pl.BlockSpec(arr.shape, lambda b, zeros=zeros: zeros)

    def batch_spec(feat):
        return pl.BlockSpec((NB, 1, feat), lambda b: (b, 0, 0))

    in_specs = ([batch_spec(HW * Cin)]
                + [const_spec(a) for a in inputs[1:11]]
                + [batch_spec(OBS)]
                + [const_spec(a) for a in inputs[12:]])

    grid_spec = pltpu.PrefetchScalarGridSpec(
        num_scalar_prefetch=0,
        grid=(G,),
        in_specs=in_specs,
        out_specs=(batch_spec(1), batch_spec(ACT)))

    critic3, action3 = pl.pallas_call(
        functools.partial(_vin_kernel, K=K, HW=HW),
        out_shape=(jax.ShapeDtypeStruct((N_pad, 1, 1), jnp.float32),
                   jax.ShapeDtypeStruct((N_pad, 1, ACT), jnp.float32)),
        grid_spec=grid_spec,
        compiler_params=pltpu.CompilerParams(
            dimension_semantics=("parallel",)),
    )(*inputs)

    return critic3.reshape(N_pad, 1)[:N], action3.reshape(N_pad, ACT)[:N]


# ----------------------------------------------------------------------------
# Deterministic parameter construction (shapes follow VIN.__init__)
# ----------------------------------------------------------------------------
def make_params(key, Cin, l_h, l_q, H, W, obs_dim=24, eps=1e-5):
    ks = iter(jax.random.split(key, 32))

    def nrm(shape, scale=0.1):
        return scale * jax.random.normal(next(ks), shape, dtype=jnp.float32)

    def conv_bn(cin, cout):
        w = nrm((3, 3, cin, cout), 0.2)            # HWIO
        b = nrm((cout,), 0.1)
        gamma = 1.0 + nrm((cout,), 0.1)
        beta = nrm((cout,), 0.1)
        mean = nrm((cout,), 0.1)
        var = 0.5 + jnp.abs(nrm((cout,), 0.2))
        scale = gamma / jnp.sqrt(var + eps)        # eval-mode BN folded into conv
        return w * scale[None, None, None, :], ((b - mean) * scale + beta).reshape(1, cout)

    w1, b1 = conv_bn(Cin, l_h[0])
    w2, b2 = conv_bn(l_h[0], l_h[1])
    w3, b3 = conv_bn(l_h[1], l_h[2])
    wr = nrm((1, l_h[2]), 0.2)                     # self.r: 1x1 conv, no bias
    wq = nrm((5, 5, 1, l_q), 0.2)                  # self.q weight (HWIO)
    ww = nrm((5, 5, 1, l_q), 0.2)                  # self.w parameter (zeros in torch init;
                                                   # random here so the v-path is exercised)
    F = H * W                                      # critic_features
    return dict(w1=w1, b1=b1, w2=w2, b2=b2, w3=w3, b3=b3, wr=wr, wq=wq, ww=ww,
                wf1=nrm((obs_dim, 100), 0.2), bf1=nrm((1, 100), 0.1),
                wf2=nrm((100, 10), 0.2), bf2=nrm((1, 10), 0.1),
                wc=nrm((F, 1), 0.2), bc=nrm((1, 1), 0.1))


# ----------------------------------------------------------------------------
# Pure-JAX reference (lax.conv) for correctness checking
# ----------------------------------------------------------------------------
def reference_forward(x_nchw, obs, p, *, K):
    dn = ('NHWC', 'HWIO', 'NHWC')
    prec = lax.Precision.HIGHEST
    x = jnp.transpose(x_nchw, (0, 2, 3, 1))

    def conv(z, w, pad):
        return lax.conv_general_dilated(z, w, (1, 1), [(pad, pad), (pad, pad)],
                                        dimension_numbers=dn, precision=prec)

    h = jax.nn.relu(conv(x, p['w1'], 1) + p['b1'])
    h = jax.nn.relu(conv(h, p['w2'], 1) + p['b2'])
    h = jax.nn.relu(conv(h, p['w3'], 1) + p['b3'])
    r = conv(h, p['wr'].reshape(1, 1, -1, 1), 0)
    q = conv(r, p['wq'], 2)
    v = jnp.max(q, axis=3, keepdims=True)
    for _ in range(K):                               # (K-1) loop + final step
        q = conv(r, p['wq'], 2) + conv(v, p['ww'], 2)
        v = jnp.max(q, axis=3, keepdims=True)
    vf = v.reshape(v.shape[0], -1)
    critic = jnp.dot(vf, p['wc'], precision=prec) + p['bc']
    hf = jax.nn.relu(jnp.dot(obs, p['wf1'], precision=prec) + p['bf1'])
    act = jax.nn.relu(jnp.dot(hf, p['wf2'], precision=prec) + p['bf2'])
    return critic, act


if __name__ == "__main__":
    # Hyper-params: Input_Channels=4, First_Hidden_Channels=(8,8,8), Q_Channels=8,
    # K=3, critic_features=H*W=64, obs feature dim fixed at 24 by fc1.
    N, Cin, H, W = 2, 4, 8, 8
    l_h = (8, 8, 8)
    l_q = 8
    K = 3

    key = jax.random.PRNGKey(0)
    kx, kobs, kp = jax.random.split(key, 3)
    x = jax.random.normal(kx, (N, Cin, H, W), dtype=jnp.float32)   # NCHW, like torch
    obs = jax.random.normal(kobs, (N, 24), dtype=jnp.float32)
    params = make_params(kp, Cin, l_h, l_q, H, W)

    critic, action = vin_forward(x, obs, params, K=K)
    jax.block_until_ready((critic, action))

    critic_ref, action_ref = reference_forward(x, obs, params, K=K)
    assert critic.shape == (N, 1) and action.shape == (N, 10)
    assert bool(jnp.allclose(critic, critic_ref, atol=2e-3, rtol=2e-3)), "critic mismatch"
    assert bool(jnp.allclose(action, action_ref, atol=2e-3, rtol=2e-3)), "action mismatch"
    print("KERNEL_OK")
</pallas_src>

<mosaic_0001>
module attributes {stable_mosaic.version = 11 : i64} {
  func.func @_vin_kernel(%arg0: i32, %arg1: memref<1x1x256xf32, #tpu.memory_space<vmem>>, %arg2: memref<256x512xf32, #tpu.memory_space<vmem>>, %arg3: memref<1x512xf32, #tpu.memory_space<vmem>>, %arg4: memref<512x512xf32, #tpu.memory_space<vmem>>, %arg5: memref<1x512xf32, #tpu.memory_space<vmem>>, %arg6: memref<512x512xf32, #tpu.memory_space<vmem>>, %arg7: memref<1x512xf32, #tpu.memory_space<vmem>>, %arg8: memref<512x512xf32, #tpu.memory_space<vmem>>, %arg9: memref<64x512xf32, #tpu.memory_space<vmem>>, %arg10: memref<64x1xf32, #tpu.memory_space<vmem>>, %arg11: memref<1x1xf32, #tpu.memory_space<vmem>>, %arg12: memref<1x1x24xf32, #tpu.memory_space<vmem>>, %arg13: memref<24x100xf32, #tpu.memory_space<vmem>>, %arg14: memref<1x100xf32, #tpu.memory_space<vmem>>, %arg15: memref<100x10xf32, #tpu.memory_space<vmem>>, %arg16: memref<1x10xf32, #tpu.memory_space<vmem>>, %arg17: memref<1x1x1xf32, #tpu.memory_space<vmem>>, %arg18: memref<1x1x10xf32, #tpu.memory_space<vmem>>) attributes {dimension_semantics = [#tpu.dimension_semantics<parallel>], iteration_bounds = array<i64: 2>, scalar_prefetch = 0 : i64, scratch_operands = 0 : i64, tpu.core_type = #tpu.core_type<tc>, window_params = [{transform_indices = @transform_0, window_bounds = array<i64: 1, 1, 256>}, {pipeline_mode = #tpu.pipeline_mode<synchronous>, transform_indices = @transform_1, window_bounds = array<i64: 256, 512>}, {pipeline_mode = #tpu.pipeline_mode<synchronous>, transform_indices = @transform_2, window_bounds = array<i64: 1, 512>}, {pipeline_mode = #tpu.pipeline_mode<synchronous>, transform_indices = @transform_3, window_bounds = array<i64: 512, 512>}, {pipeline_mode = #tpu.pipeline_mode<synchronous>, transform_indices = @transform_4, window_bounds = array<i64: 1, 512>}, {pipeline_mode = #tpu.pipeline_mode<synchronous>, transform_indices = @transform_5, window_bounds = array<i64: 512, 512>}, {pipeline_mode = #tpu.pipeline_mode<synchronous>, transform_indices = @transform_6, window_bounds = array<i64: 1, 512>}, {pipeline_mode = #tpu.pipeline_mode<synchronous>, transform_indices = @transform_7, window_bounds = array<i64: 512, 512>}, {pipeline_mode = #tpu.pipeline_mode<synchronous>, transform_indices = @transform_8, window_bounds = array<i64: 64, 512>}, {pipeline_mode = #tpu.pipeline_mode<synchronous>, transform_indices = @transform_9, window_bounds = array<i64: 64, 1>}, {pipeline_mode = #tpu.pipeline_mode<synchronous>, transform_indices = @transform_10, window_bounds = array<i64: 1, 1>}, {transform_indices = @transform_11, window_bounds = array<i64: 1, 1, 24>}, {pipeline_mode = #tpu.pipeline_mode<synchronous>, transform_indices = @transform_12, window_bounds = array<i64: 24, 100>}, {pipeline_mode = #tpu.pipeline_mode<synchronous>, transform_indices = @transform_13, window_bounds = array<i64: 1, 100>}, {pipeline_mode = #tpu.pipeline_mode<synchronous>, transform_indices = @transform_14, window_bounds = array<i64: 100, 10>}, {pipeline_mode = #tpu.pipeline_mode<synchronous>, transform_indices = @transform_15, window_bounds = array<i64: 1, 10>}, {transform_indices = @transform_16, window_bounds = array<i64: 1, 1, 1>}, {transform_indices = @transform_17, window_bounds = array<i64: 1, 1, 10>}]} {
    %c0 = arith.constant 0 : index
    %c0_0 = arith.constant 0 : index
    %c0_1 = arith.constant 0 : index
    %0 = vector.load %arg1[%c0, %c0_0, %c0_1] : memref<1x1x256xf32, #tpu.memory_space<vmem>>, vector<1x1x256xf32>
    %1 = vector.shape_cast %0 : vector<1x1x256xf32> to vector<1x256xf32>
    %c0_2 = arith.constant 0 : index
    %c0_3 = arith.constant 0 : index
    %2 = vector.load %arg2[%c0_2, %c0_3] : memref<256x512xf32, #tpu.memory_space<vmem>>, vector<256x512xf32>
    %cst = arith.constant dense<0.000000e+00> : vector<1x512xf32>
    %3 = tpu.matmul %1, %2, %cst {dimension_numbers = #tpu.dot_dimension_numbers<[1], [0], [0], [1], [0, 0, 1, 1], [], []>} : vector<1x256xf32>, vector<256x512xf32>, vector<1x512xf32> -> vector<1x512xf32>
    %c0_4 = arith.constant 0 : index
    %c0_5 = arith.constant 0 : index
    %4 = vector.load %arg3[%c0_4, %c0_5] : memref<1x512xf32, #tpu.memory_space<vmem>>, vector<1x512xf32>
    %5 = arith.addf %3, %4 : vector<1x512xf32>
    %cst_6 = arith.constant 0.000000e+00 : f32
    %6 = vector.broadcast %cst_6 : f32 to vector<1x512xf32>
    %7 = arith.maximumf %5, %6 : vector<1x512xf32>
    %c0_7 = arith.constant 0 : index
    %c0_8 = arith.constant 0 : index
    %8 = vector.load %arg4[%c0_7, %c0_8] : memref<512x512xf32, #tpu.memory_space<vmem>>, vector<512x512xf32>
    %cst_9 = arith.constant dense<0.000000e+00> : vector<1x512xf32>
    %9 = tpu.matmul %7, %8, %cst_9 {dimension_numbers = #tpu.dot_dimension_numbers<[1], [0], [0], [1], [0, 0, 1, 1], [], []>} : vector<1x512xf32>, vector<512x512xf32>, vector<1x512xf32> -> vector<1x512xf32>
    %c0_10 = arith.constant 0 : index
    %c0_11 = arith.constant 0 : index
    %10 = vector.load %arg5[%c0_10, %c0_11] : memref<1x512xf32, #tpu.memory_space<vmem>>, vector<1x512xf32>
    %11 = arith.addf %9, %10 : vector<1x512xf32>
    %cst_12 = arith.constant 0.000000e+00 : f32
    %12 = vector.broadcast %cst_12 : f32 to vector<1x512xf32>
    %13 = arith.maximumf %11, %12 : vector<1x512xf32>
    %c0_13 = arith.constant 0 : index
    %c0_14 = arith.constant 0 : index
    %14 = vector.load %arg6[%c0_13, %c0_14] : memref<512x512xf32, #tpu.memory_space<vmem>>, vector<512x512xf32>
    %cst_15 = arith.constant dense<0.000000e+00> : vector<1x512xf32>
    %15 = tpu.matmul %13, %14, %cst_15 {dimension_numbers = #tpu.dot_dimension_numbers<[1], [0], [0], [1], [0, 0, 1, 1], [], []>} : vector<1x512xf32>, vector<512x512xf32>, vector<1x512xf32> -> vector<1x512xf32>
    %c0_16 = arith.constant 0 : index
    %c0_17 = arith.constant 0 : index
    %16 = vector.load %arg7[%c0_16, %c0_17] : memref<1x512xf32, #tpu.memory_space<vmem>>, vector<1x512xf32>
    %17 = arith.addf %15, %16 : vector<1x512xf32>
    %cst_18 = arith.constant 0.000000e+00 : f32
    %18 = vector.broadcast %cst_18 : f32 to vector<1x512xf32>
    %19 = arith.maximumf %17, %18 : vector<1x512xf32>
    %c0_19 = arith.constant 0 : index
    %c0_20 = arith.constant 0 : index
    %20 = vector.load %arg8[%c0_19, %c0_20] : memref<512x512xf32, #tpu.memory_space<vmem>>, vector<512x512xf32>
    %cst_21 = arith.constant dense<0.000000e+00> : vector<1x512xf32>
    %21 = tpu.matmul %19, %20, %cst_21 {dimension_numbers = #tpu.dot_dimension_numbers<[1], [0], [0], [1], [0, 0, 1, 1], [], []>} : vector<1x512xf32>, vector<512x512xf32>, vector<1x512xf32> -> vector<1x512xf32>
    %c0_22 = arith.constant 0 : index
    %c0_23 = arith.constant 0 : index
    %22 = vector.load %arg9[%c0_22, %c0_23] : memref<64x512xf32, #tpu.memory_space<vmem>>, vector<64x512xf32>
    %23 = vector.extract_strided_slice %21 {offsets = [0, 0], sizes = [1, 64], strides = [1, 1]} : vector<1x512xf32> to vector<1x64xf32>
    %24 = vector.extract_strided_slice %21 {offsets = [0, 64], sizes = [1, 64], strides = [1, 1]} : vector<1x512xf32> to vector<1x64xf32>
    %25 = arith.maximumf %23, %24 : vector<1x64xf32>
    %26 = vector.extract_strided_slice %21 {offsets = [0, 128], sizes = [1, 64], strides = [1, 1]} : vector<1x512xf32> to vector<1x64xf32>
    %27 = arith.maximumf %25, %26 : vector<1x64xf32>
    %28 = vector.extract_strided_slice %21 {offsets = [0, 192], sizes = [1, 64], strides = [1, 1]} : vector<1x512xf32> to vector<1x64xf32>
    %29 = arith.maximumf %27, %28 : vector<1x64xf32>
    %30 = vector.extract_strided_slice %21 {offsets = [0, 256], sizes = [1, 64], strides = [1, 1]} : vector<1x512xf32> to vector<1x64xf32>
    %31 = arith.maximumf %29, %30 : vector<1x64xf32>
    %32 = vector.extract_strided_slice %21 {offsets = [0, 320], sizes = [1, 64], strides = [1, 1]} : vector<1x512xf32> to vector<1x64xf32>
    %33 = arith.maximumf %31, %32 : vector<1x64xf32>
    %34 = vector.extract_strided_slice %21 {offsets = [0, 384], sizes = [1, 64], strides = [1, 1]} : vector<1x512xf32> to vector<1x64xf32>
    %35 = arith.maximumf %33, %34 : vector<1x64xf32>
    %36 = vector.extract_strided_slice %21 {offsets = [0, 448], sizes = [1, 64], strides = [1, 1]} : vector<1x512xf32> to vector<1x64xf32>
    %37 = arith.maximumf %35, %36 : vector<1x64xf32>
    %cst_24 = arith.constant dense<0.000000e+00> : vector<1x512xf32>
    %38 = tpu.matmul %37, %22, %cst_24 {dimension_numbers = #tpu.dot_dimension_numbers<[1], [0], [0], [1], [0, 0, 1, 1], [], []>} : vector<1x64xf32>, vector<64x512xf32>, vector<1x512xf32> -> vector<1x512xf32>
    %39 = arith.addf %21, %38 : vector<1x512xf32>
    %40 = vector.extract_strided_slice %39 {offsets = [0, 0], sizes = [1, 64], strides = [1, 1]} : vector<1x512xf32> to vector<1x64xf32>
    %41 = vector.extract_strided_slice %39 {offsets = [0, 64], sizes = [1, 64], strides = [1, 1]} : vector<1x512xf32> to vector<1x64xf32>
    %42 = arith.maximumf %40, %41 : vector<1x64xf32>
    %43 = vector.extract_strided_slice %39 {offsets = [0, 128], sizes = [1, 64], strides = [1, 1]} : vector<1x512xf32> to vector<1x64xf32>
    %44 = arith.maximumf %42, %43 : vector<1x64xf32>
    %45 = vector.extract_strided_slice %39 {offsets = [0, 192], sizes = [1, 64], strides = [1, 1]} : vector<1x512xf32> to vector<1x64xf32>
    %46 = arith.maximumf %44, %45 : vector<1x64xf32>
    %47 = vector.extract_strided_slice %39 {offsets = [0, 256], sizes = [1, 64], strides = [1, 1]} : vector<1x512xf32> to vector<1x64xf32>
    %48 = arith.maximumf %46, %47 : vector<1x64xf32>
    %49 = vector.extract_strided_slice %39 {offsets = [0, 320], sizes = [1, 64], strides = [1, 1]} : vector<1x512xf32> to vector<1x64xf32>
    %50 = arith.maximumf %48, %49 : vector<1x64xf32>
    %51 = vector.extract_strided_slice %39 {offsets = [0, 384], sizes = [1, 64], strides = [1, 1]} : vector<1x512xf32> to vector<1x64xf32>
    %52 = arith.maximumf %50, %51 : vector<1x64xf32>
    %53 = vector.extract_strided_slice %39 {offsets = [0, 448], sizes = [1, 64], strides = [1, 1]} : vector<1x512xf32> to vector<1x64xf32>
    %54 = arith.maximumf %52, %53 : vector<1x64xf32>
    %cst_25 = arith.constant dense<0.000000e+00> : vector<1x512xf32>
    %55 = tpu.matmul %54, %22, %cst_25 {dimension_numbers = #tpu.dot_dimension_numbers<[1], [0], [0], [1], [0, 0, 1, 1], [], []>} : vector<1x64xf32>, vector<64x512xf32>, vector<1x512xf32> -> vector<1x512xf32>
    %56 = arith.addf %21, %55 : vector<1x512xf32>
    %57 = vector.extract_strided_slice %56 {offsets = [0, 0], sizes = [1, 64], strides = [1, 1]} : vector<1x512xf32> to vector<1x64xf32>
    %58 = vector.extract_strided_slice %56 {offsets = [0, 64], sizes = [1, 64], strides = [1, 1]} : vector<1x512xf32> to vector<1x64xf32>
    %59 = arith.maximumf %57, %58 : vector<1x64xf32>
    %60 = vector.extract_strided_slice %56 {offsets = [0, 128], sizes = [1, 64], strides = [1, 1]} : vector<1x512xf32> to vector<1x64xf32>
    %61 = arith.maximumf %59, %60 : vector<1x64xf32>
    %62 = vector.extract_strided_slice %56 {offsets = [0, 192], sizes = [1, 64], strides = [1, 1]} : vector<1x512xf32> to vector<1x64xf32>
    %63 = arith.maximumf %61, %62 : vector<1x64xf32>
    %64 = vector.extract_strided_slice %56 {offsets = [0, 256], sizes = [1, 64], strides = [1, 1]} : vector<1x512xf32> to vector<1x64xf32>
    %65 = arith.maximumf %63, %64 : vector<1x64xf32>
    %66 = vector.extract_strided_slice %56 {offsets = [0, 320], sizes = [1, 64], strides = [1, 1]} : vector<1x512xf32> to vector<1x64xf32>
    %67 = arith.maximumf %65, %66 : vector<1x64xf32>
    %68 = vector.extract_strided_slice %56 {offsets = [0, 384], sizes = [1, 64], strides = [1, 1]} : vector<1x512xf32> to vector<1x64xf32>
    %69 = arith.maximumf %67, %68 : vector<1x64xf32>
    %70 = vector.extract_strided_slice %56 {offsets = [0, 448], sizes = [1, 64], strides = [1, 1]} : vector<1x512xf32> to vector<1x64xf32>
    %71 = arith.maximumf %69, %70 : vector<1x64xf32>
    %cst_26 = arith.constant dense<0.000000e+00> : vector<1x512xf32>
    %72 = tpu.matmul %71, %22, %cst_26 {dimension_numbers = #tpu.dot_dimension_numbers<[1], [0], [0], [1], [0, 0, 1, 1], [], []>} : vector<1x64xf32>, vector<64x512xf32>, vector<1x512xf32> -> vector<1x512xf32>
    %73 = arith.addf %21, %72 : vector<1x512xf32>
    %74 = vector.extract_strided_slice %73 {offsets = [0, 0], sizes = [1, 64], strides = [1, 1]} : vector<1x512xf32> to vector<1x64xf32>
    %75 = vector.extract_strided_slice %73 {offsets = [0, 64], sizes = [1, 64], strides = [1, 1]} : vector<1x512xf32> to vector<1x64xf32>
    %76 = arith.maximumf %74, %75 : vector<1x64xf32>
    %77 = vector.extract_strided_slice %73 {offsets = [0, 128], sizes = [1, 64], strides = [1, 1]} : vector<1x512xf32> to vector<1x64xf32>
    %78 = arith.maximumf %76, %77 : vector<1x64xf32>
    %79 = vector.extract_strided_slice %73 {offsets = [0, 192], sizes = [1, 64], strides = [1, 1]} : vector<1x512xf32> to vector<1x64xf32>
    %80 = arith.maximumf %78, %79 : vector<1x64xf32>
    %81 = vector.extract_strided_slice %73 {offsets = [0, 256], sizes = [1, 64], strides = [1, 1]} : vector<1x512xf32> to vector<1x64xf32>
    %82 = arith.maximumf %80, %81 : vector<1x64xf32>
    %83 = vector.extract_strided_slice %73 {offsets = [0, 320], sizes = [1, 64], strides = [1, 1]} : vector<1x512xf32> to vector<1x64xf32>
    %84 = arith.maximumf %82, %83 : vector<1x64xf32>
    %85 = vector.extract_strided_slice %73 {offsets = [0, 384], sizes = [1, 64], strides = [1, 1]} : vector<1x512xf32> to vector<1x64xf32>
    %86 = arith.maximumf %84, %85 : vector<1x64xf32>
    %87 = vector.extract_strided_slice %73 {offsets = [0, 448], sizes = [1, 64], strides = [1, 1]} : vector<1x512xf32> to vector<1x64xf32>
    %88 = arith.maximumf %86, %87 : vector<1x64xf32>
    %c0_27 = arith.constant 0 : index
    %c0_28 = arith.constant 0 : index
    %89 = vector.load %arg10[%c0_27, %c0_28] : memref<64x1xf32, #tpu.memory_space<vmem>>, vector<64x1xf32>
    %cst_29 = arith.constant dense<0.000000e+00> : vector<1x1xf32>
    %90 = tpu.matmul %88, %89, %cst_29 {dimension_numbers = #tpu.dot_dimension_numbers<[1], [0], [0], [1], [0, 0, 1, 1], [], []>} : vector<1x64xf32>, vector<64x1xf32>, vector<1x1xf32> -> vector<1x1xf32>
    %c0_30 = arith.constant 0 : index
    %c0_31 = arith.constant 0 : index
    %91 = vector.load %arg11[%c0_30, %c0_31] : memref<1x1xf32, #tpu.memory_space<vmem>>, vector<1x1xf32>
    %92 = arith.addf %90, %91 : vector<1x1xf32>
    %93 = vector.shape_cast %92 : vector<1x1xf32> to vector<1x1x1xf32>
    %c0_32 = arith.constant 0 : index
    %c0_33 = arith.constant 0 : index
    %c0_34 = arith.constant 0 : index
    %94 = vector.load %arg17[%c0_32, %c0_33, %c0_34] : memref<1x1x1xf32, #tpu.memory_space<vmem>>, vector<1x1x1xf32>
    tpu.vector_store %arg17[%c0_32, %c0_33, %c0_34], %93 {strides = array<i32>} : memref<1x1x1xf32, #tpu.memory_space<vmem>>, vector<1x1x1xf32>,
    %c0_35 = arith.constant 0 : index
    %c0_36 = arith.constant 0 : index
    %c0_37 = arith.constant 0 : index
    %95 = vector.load %arg12[%c0_35, %c0_36, %c0_37] : memref<1x1x24xf32, #tpu.memory_space<vmem>>, vector<1x1x24xf32>
    %96 = vector.shape_cast %95 : vector<1x1x24xf32> to vector<1x24xf32>
    %c0_38 = arith.constant 0 : index
    %c0_39 = arith.constant 0 : index
    %97 = vector.load %arg13[%c0_38, %c0_39] : memref<24x100xf32, #tpu.memory_space<vmem>>, vector<24x100xf32>
    %cst_40 = arith.constant dense<0.000000e+00> : vector<1x100xf32>
    %98 = tpu.matmul %96, %97, %cst_40 {dimension_numbers = #tpu.dot_dimension_numbers<[1], [0], [0], [1], [0, 0, 1, 1], [], []>} : vector<1x24xf32>, vector<24x100xf32>, vector<1x100xf32> -> vector<1x100xf32>
    %c0_41 = arith.constant 0 : index
    %c0_42 = arith.constant 0 : index
    %99 = vector.load %arg14[%c0_41, %c0_42] : memref<1x100xf32, #tpu.memory_space<vmem>>, vector<1x100xf32>
    %100 = arith.addf %98, %99 : vector<1x100xf32>
    %cst_43 = arith.constant 0.000000e+00 : f32
    %101 = vector.broadcast %cst_43 : f32 to vector<1x100xf32>
    %102 = arith.maximumf %100, %101 : vector<1x100xf32>
    %c0_44 = arith.constant 0 : index
    %c0_45 = arith.constant 0 : index
    %103 = vector.load %arg15[%c0_44, %c0_45] : memref<100x10xf32, #tpu.memory_space<vmem>>, vector<100x10xf32>
    %cst_46 = arith.constant dense<0.000000e+00> : vector<1x10xf32>
    %104 = tpu.matmul %102, %103, %cst_46 {dimension_numbers = #tpu.dot_dimension_numbers<[1], [0], [0], [1], [0, 0, 1, 1], [], []>} : vector<1x100xf32>, vector<100x10xf32>, vector<1x10xf32> -> vector<1x10xf32>
    %c0_47 = arith.constant 0 : index
    %c0_48 = arith.constant 0 : index
    %105 = vector.load %arg16[%c0_47, %c0_48] : memref<1x10xf32, #tpu.memory_space<vmem>>, vector<1x10xf32>
    %106 = arith.addf %104, %105 : vector<1x10xf32>
    %cst_49 = arith.constant 0.000000e+00 : f32
    %107 = vector.broadcast %cst_49 : f32 to vector<1x10xf32>
    %108 = arith.maximumf %106, %107 : vector<1x10xf32>
    %109 = vector.shape_cast %108 : vector<1x10xf32> to vector<1x1x10xf32>
    %c0_50 = arith.constant 0 : index
    %c0_51 = arith.constant 0 : index
    %c0_52 = arith.constant 0 : index
    %110 = vector.load %arg18[%c0_50, %c0_51, %c0_52] : memref<1x1x10xf32, #tpu.memory_space<vmem>>, vector<1x1x10xf32>
    tpu.vector_store %arg18[%c0_50, %c0_51, %c0_52], %109 {strides = array<i32>} : memref<1x1x10xf32, #tpu.memory_space<vmem>>, vector<1x1x10xf32>,
    return
  }
  func.func @transform_0(%arg0: i32) -> (i32, i32, i32) {
    %c0_i32 = arith.constant 0 : i32
    %c0_i32_0 = arith.constant 0 : i32
    %c0_i32_1 = arith.constant 0 : i32
    return %arg0, %c0_i32, %c0_i32_0 : i32, i32, i32
  }
  func.func @transform_1(%arg0: i32) -> (i32, i32) {
    %c0_i32 = arith.constant 0 : i32
    %c0_i32_0 = arith.constant 0 : i32
    %c0_i32_1 = arith.constant 0 : i32
    return %c0_i32, %c0_i32_0 : i32, i32
  }
  func.func @transform_2(%arg0: i32) -> (i32, i32) {
    %c0_i32 = arith.constant 0 : i32
    %c0_i32_0 = arith.constant 0 : i32
    %c0_i32_1 = arith.constant 0 : i32
    return %c0_i32, %c0_i32_0 : i32, i32
  }
  func.func @transform_3(%arg0: i32) -> (i32, i32) {
    %c0_i32 = arith.constant 0 : i32
    %c0_i32_0 = arith.constant 0 : i32
    %c0_i32_1 = arith.constant 0 : i32
    return %c0_i32, %c0_i32_0 : i32, i32
  }
  func.func @transform_4(%arg0: i32) -> (i32, i32) {
    %c0_i32 = arith.constant 0 : i32
    %c0_i32_0 = arith.constant 0 : i32
    %c0_i32_1 = arith.constant 0 : i32
    return %c0_i32, %c0_i32_0 : i32, i32
  }
  func.func @transform_5(%arg0: i32) -> (i32, i32) {
    %c0_i32 = arith.constant 0 : i32
    %c0_i32_0 = arith.constant 0 : i32
    %c0_i32_1 = arith.constant 0 : i32
    return %c0_i32, %c0_i32_0 : i32, i32
  }
  func.func @transform_6(%arg0: i32) -> (i32, i32) {
    %c0_i32 = arith.constant 0 : i32
    %c0_i32_0 = arith.constant 0 : i32
    %c0_i32_1 = arith.constant 0 : i32
    return %c0_i32, %c0_i32_0 : i32, i32
  }
  func.func @transform_7(%arg0: i32) -> (i32, i32) {
    %c0_i32 = arith.constant 0 : i32
    %c0_i32_0 = arith.constant 0 : i32
    %c0_i32_1 = arith.constant 0 : i32
    return %c0_i32, %c0_i32_0 : i32, i32
  }
  func.func @transform_8(%arg0: i32) -> (i32, i32) {
    %c0_i32 = arith.constant 0 : i32
    %c0_i32_0 = arith.constant 0 : i32
    %c0_i32_1 = arith.constant 0 : i32
    return %c0_i32, %c0_i32_0 : i32, i32
  }
  func.func @transform_9(%arg0: i32) -> (i32, i32) {
    %c0_i32 = arith.constant 0 : i32
    %c0_i32_0 = arith.constant 0 : i32
    %c0_i32_1 = arith.constant 0 : i32
    return %c0_i32, %c0_i32_0 : i32, i32
  }
  func.func @transform_10(%arg0: i32) -> (i32, i32) {
    %c0_i32 = arith.constant 0 : i32
    %c0_i32_0 = arith.constant 0 : i32
    %c0_i32_1 = arith.constant 0 : i32
    return %c0_i32, %c0_i32_0 : i32, i32
  }
  func.func @transform_11(%arg0: i32) -> (i32, i32, i32) {
    %c0_i32 = arith.constant 0 : i32
    %c0_i32_0 = arith.constant 0 : i32
    %c0_i32_1 = arith.constant 0 : i32
    return %arg0, %c0_i32, %c0_i32_0 : i32, i32, i32
  }
  func.func @transform_12(%arg0: i32) -> (i32, i32) {
    %c0_i32 = arith.constant 0 : i32
    %c0_i32_0 = arith.constant 0 : i32
    %c0_i32_1 = arith.constant 0 : i32
    return %c0_i32, %c0_i32_0 : i32, i32
  }
  func.func @transform_13(%arg0: i32) -> (i32, i32) {
    %c0_i32 = arith.constant 0 : i32
    %c0_i32_0 = arith.constant 0 : i32
    %c0_i32_1 = arith.constant 0 : i32
    return %c0_i32, %c0_i32_0 : i32, i32
  }
  func.func @transform_14(%arg0: i32) -> (i32, i32) {
    %c0_i32 = arith.constant 0 : i32
    %c0_i32_0 = arith.constant 0 : i32
    %c0_i32_1 = arith.constant 0 : i32
    return %c0_i32, %c0_i32_0 : i32, i32
  }
  func.func @transform_15(%arg0: i32) -> (i32, i32) {
    %c0_i32 = arith.constant 0 : i32
    %c0_i32_0 = arith.constant 0 : i32
    %c0_i32_1 = arith.constant 0 : i32
    return %c0_i32, %c0_i32_0 : i32, i32
  }
  func.func @transform_16(%arg0: i32) -> (i32, i32, i32) {
    %c0_i32 = arith.constant 0 : i32
    %c0_i32_0 = arith.constant 0 : i32
    %c0_i32_1 = arith.constant 0 : i32
    return %arg0, %c0_i32, %c0_i32_0 : i32, i32, i32
  }
  func.func @transform_17(%arg0: i32) -> (i32, i32, i32) {
    %c0_i32 = arith.constant 0 : i32
    %c0_i32_0 = arith.constant 0 : i32
    %c0_i32_1 = arith.constant 0 : i32
    return %arg0, %c0_i32, %c0_i32_0 : i32, i32, i32
  }
}

</mosaic_0001>

<llo_original>
// kernel: tpu_custom_call.1
$region0: #{tpu_custom_call.1}
  #allocation0 [shape = 'u32[]', space=smem, size = 0x4, offset = 0x4, fixed_abs, tag = 'smem constant byte address 0x4 - core index']
  #allocation1 [shape = 'u32[72,128]{1,0:T(1,128)}', space=vmem, size = 0x9000, scoped, tag = 'internal scratch']
  #allocation2 [shape = 'f32[1,1]{1,0:T(1,128)S(1)}', space=vmem, size = 0x200, scoped, tag = 'scoped memory for tpu_custom_call.1']
  %s0 = inlined_call_operand.vmem [shape: f32[2,1,256], index: 0, kind: input, shape index: {}]
  %s1 = inlined_call_operand.hbm [shape: f32[256,512], index: 1, kind: input, shape index: {}]
  %s2 = inlined_call_operand.vmem [shape: f32[1,512], index: 2, kind: input, shape index: {}]
  %s3 = inlined_call_operand.hbm [shape: f32[512,512], index: 3, kind: input, shape index: {}]
  %s4 = inlined_call_operand.vmem [shape: f32[1,512], index: 4, kind: input, shape index: {}]
  %s5 = inlined_call_operand.hbm [shape: f32[512,512], index: 5, kind: input, shape index: {}]
  %s6 = inlined_call_operand.vmem [shape: f32[1,512], index: 6, kind: input, shape index: {}]
  %s7 = inlined_call_operand.hbm [shape: f32[512,512], index: 7, kind: input, shape index: {}]
  %s8 = inlined_call_operand.hbm [shape: f32[64,512], index: 8, kind: input, shape index: {}]
  %s9 = inlined_call_operand.vmem [shape: f32[64,1], index: 9, kind: input, shape index: {}]
  %s10 = inlined_call_operand.<no memory space> [shape: f32[1,1], index: 10, kind: input, shape index: {}]
  %s11 = inlined_call_operand.vmem [shape: f32[2,1,24], index: 11, kind: input, shape index: {}]
  %s12 = inlined_call_operand.vmem [shape: f32[24,100], index: 12, kind: input, shape index: {}]
  %s13 = inlined_call_operand.vmem [shape: f32[1,100], index: 13, kind: input, shape index: {}]
  %s14 = inlined_call_operand.vmem [shape: f32[100,10], index: 14, kind: input, shape index: {}]
  %s15 = inlined_call_operand.vmem [shape: f32[1,10], index: 15, kind: input, shape index: {}]
  %s16 = inlined_call_operand.vmem [shape: f32[2,1,1], index: 16, kind: output, shape index: {0}]
  %s17 = inlined_call_operand.hbm [shape: f32[2,1,10], index: 17, kind: output, shape index: {1}]
  %18 = xla_tuple %s16, %s17
  %s19 = sld [smem:[#allocation0]]
  $region125: #{tpu_custom_call.1} parent=0
    _
  %s21 = ssub.s32 1, %s19
  %s22 = scalar_select 0, %s21, %s19
  %v23 = vstv %s10
  %24 = vst [vmem:[#allocation2] sm:$0x1] %v23
  $region1: #{tpu_custom_call.1} parent=0
    #allocation3 [shape = 'u8[524288]{0}', space=vmem, size = 0x80000, scoped, tag = 'input window, operand 1, single buffered']
    #allocation4 [shape = 's32[2]{0}', space=sflag, size = 0x8, scoped, tag = 'scoped memory for tpu_custom_call.1']
    #allocation5 [shape = 's32[2]{0}', space=sflag, size = 0x8, scoped, tag = 'scoped memory for tpu_custom_call.1']
    #allocation6 [shape = 'u8[1048576]{0}', space=vmem, size = 0x100000, scoped, tag = 'input window, operand 3, single buffered']
    #allocation7 [shape = 's32[1]{0}', space=sflag, size = 0x4, scoped, tag = 'scoped memory for tpu_custom_call.1']
    #allocation8 [shape = 'u8[1048576]{0}', space=vmem, size = 0x100000, scoped, tag = 'input window, operand 5, single buffered']
    #allocation9 [shape = 'u8[1048576]{0}', space=vmem, size = 0x100000, scoped, tag = 'input window, operand 7, single buffered']
    #allocation10 [shape = 's32[1]{0}', space=sflag, size = 0x4, scoped, tag = 'scoped memory for tpu_custom_call.1']
    #allocation11 [shape = 'u8[131072]{0}', space=vmem, size = 0x20000, scoped, tag = 'input window, operand 8, single buffered']
    #allocation12 [shape = 'u8[1024]{0}', space=vmem, size = 0x400, scoped, tag = 'output window, operand 1']
    %25 = vsyncpa [#allocation4], 0
    %26 = vsyncpa [#allocation7], 0
    %27 = vsyncpa [#allocation10], 0
    %28 = vsyncpa [#allocation5], 0
    %s29 = scalar_lea.sflag [#allocation5], 1
    %30 = vsyncpa %s29, 0
    loop: start=0, step=1, limit=4
    $region2: #{tpu_custom_call.1} parent=1 // loop_pre_header
      _
    $region3: #{tpu_custom_call.1} parent=1 // loop_header
      %s32 = sphi 0, %s36
      %p33 = scmp.ge.s32.totalorder %s32, 4
      %s42 = sphi 0, %s44
      %s45 = sphi 0, %s42
      %s46 = sphi 0, %s45
      %s62 = sphi 0, %s46
      %s66 = sphi 0, %s66
      %s68 = sphi 0, %s66
      %s69 = sphi 0, %s68
      %s83 = sphi 0, %s69
      %s87 = sphi 0, %s87
      %s89 = sphi 0, %s87
      %s90 = sphi 0, %s89
      %s104 = sphi 0, %s90
      %s108 = sphi 0, %s108
      %s110 = sphi 0, %s108
      %s111 = sphi 0, %s110
      %s125 = sphi 0, %s111
      %s129 = sphi 0, %s129
      %s131 = sphi 0, %s129
      %s132 = sphi 0, %s131
      %s146 = sphi 0, %s132
      %s150 = sphi 0, %s150
      %s152 = sphi 0, %s150
      %s153 = sphi 0, %s152
      %s167 = sphi 0, %s153
      %s171 = sphi 0, %s171
      %s173 = sphi 0, %s171
      %s174 = sphi 0, %s173
      %s188 = sphi 0, %s174
      %s192 = sphi 0, %s192
      %s194 = sphi 0, %s192
      %s195 = sphi 0, %s194
      %s209 = sphi 0, %s195
      %s213 = sphi 0, %s213
      %s215 = sphi 0, %s213
      %s216 = sphi 0, %s215
      %s230 = sphi 0, %s216
      %s234 = sphi 0, %s234
      %s236 = sphi 0, %s234
      %s237 = sphi 0, %s236
      %s251 = sphi 0, %s237
      %s255 = sphi 0, %s255
      %s257 = sphi 0, %s255
      %s258 = sphi 0, %s257
      %s272 = sphi 0, %s258
      %s278 = sphi 0, %s280
      %s281 = sphi 0, %s278
      %s282 = sphi 0, %s281
      %s298 = sphi 0, %s282
      %s302 = sphi 0, %s302
      %s304 = sphi 0, %s302
      %s305 = sphi 0, %s304
      %s319 = sphi 0, %s305
      %s323 = sphi 0, %s323
      %s325 = sphi 0, %s323
      %s326 = sphi 0, %s325
      %s340 = sphi 0, %s326
      %s344 = sphi 0, %s344
      %s346 = sphi 0, %s344
      %s347 = sphi 0, %s346
      %s361 = sphi 0, %s347
      %s365 = sphi 0, %s365
      %s367 = sphi 0, %s365
      %s368 = sphi 0, %s367
      %s382 = sphi 0, %s368
      %s388 = sphi 0, %s390
      %s391 = sphi 0, %s388
      %s392 = sphi 0, %s391
      %s408 = sphi 0, %s392
      %s414 = sphi 0, %s416
      %s417 = sphi 0, %s414
      %s418 = sphi 0, %s417
      %s434 = sphi 0, %s418
    $region4: #{tpu_custom_call.1} parent=1 // loop_header_branch
      %35 = sbr.rel (%p33) target = $region8
    $region5: #{tpu_custom_call.1} parent=1 // loop_body
      %s37 = ssub.s32 %s32, 1
      %s38 = ssub.s32 %s32, 2
      %s39 = sadd.s32 %s32, 1
      %s40 = ssub.s32 %s32, %s39
      %p41 = scmp.eq.s32.totalorder %s40, 0
      %s43 = sadd.s32 %s42, 1
      %s44 = scalar_select %p41, %s42, %s43
      %p47 = pneg %p41
      %p48 = scmp.eq.s32.totalorder %s32, 1
      %p49 = por %p47, %p48
      %p50 = scmp.ne.s32.totalorder %s42, %s45
      %p51 = scmp.eq.s32.totalorder %s32, 0
      %p52 = por %p50, %p51
      %p53 = scmp.ne.s32.totalorder %s42, %s45
      %p54 = scmp.eq.s32.totalorder %s37, 1
      %p55 = por %p53, %p54
      %p56 = scmp.ne.s32.totalorder %s45, %s46
      %p57 = scmp.eq.s32.totalorder %s37, 0
      %p58 = por %p56, %p57
      %p59 = scmp.ne.s32.totalorder %s45, %s46
      %p60 = scmp.eq.s32.totalorder %s38, 1
      %p61 = por %p59, %p60
      %p63 = scmp.ne.s32.totalorder %s46, %s62
      %p64 = scmp.eq.s32.totalorder %s38, 0
      %p65 = por %p63, %p64
      %s67 = sadd.s32 %s66, 1
      %p70 = scmp.eq.s32.totalorder %s32, 1
      %p71 = scmp.ne.s32.totalorder %s66, %s68
      %p72 = scmp.eq.s32.totalorder %s32, 0
      %p73 = por %p71, %p72
      %p74 = scmp.ne.s32.totalorder %s66, %s68
      %p75 = scmp.eq.s32.totalorder %s37, 1
      %p76 = por %p74, %p75
      %p77 = scmp.ne.s32.totalorder %s68, %s69
      %p78 = scmp.eq.s32.totalorder %s37, 0
      %p79 = por %p77, %p78
      %p80 = scmp.ne.s32.totalorder %s68, %s69
      %p81 = scmp.eq.s32.totalorder %s38, 1
      %p82 = por %p80, %p81
      %p84 = scmp.ne.s32.totalorder %s69, %s83
      %p85 = scmp.eq.s32.totalorder %s38, 0
      %p86 = por %p84, %p85
      %s88 = sadd.s32 %s87, 1
      %p91 = scmp.eq.s32.totalorder %s32, 1
      %p92 = scmp.ne.s32.totalorder %s87, %s89
      %p93 = scmp.eq.s32.totalorder %s32, 0
      %p94 = por %p92, %p93
      %p95 = scmp.ne.s32.totalorder %s87, %s89
      %p96 = scmp.eq.s32.totalorder %s37, 1
      %p97 = por %p95, %p96
      %p98 = scmp.ne.s32.totalorder %s89, %s90
      %p99 = scmp.eq.s32.totalorder %s37, 0
      %p100 = por %p98, %p99
      %p101 = scmp.ne.s32.totalorder %s89, %s90
      %p102 = scmp.eq.s32.totalorder %s38, 1
      %p103 = por %p101, %p102
      %p105 = scmp.ne.s32.totalorder %s90, %s104
      %p106 = scmp.eq.s32.totalorder %s38, 0
      %p107 = por %p105, %p106
      %s109 = sadd.s32 %s108, 1
      %p112 = scmp.eq.s32.totalorder %s32, 1
      %p113 = scmp.ne.s32.totalorder %s108, %s110
      %p114 = scmp.eq.s32.totalorder %s32, 0
      %p115 = por %p113, %p114
      %p116 = scmp.ne.s32.totalorder %s108, %s110
      %p117 = scmp.eq.s32.totalorder %s37, 1
      %p118 = por %p116, %p117
      %p119 = scmp.ne.s32.totalorder %s110, %s111
      %p120 = scmp.eq.s32.totalorder %s37, 0
      %p121 = por %p119, %p120
      %p122 = scmp.ne.s32.totalorder %s110, %s111
      %p123 = scmp.eq.s32.totalorder %s38, 1
      %p124 = por %p122, %p123
      %p126 = scmp.ne.s32.totalorder %s111, %s125
      %p127 = scmp.eq.s32.totalorder %s38, 0
      %p128 = por %p126, %p127
      %s130 = sadd.s32 %s129, 1
      %p133 = scmp.eq.s32.totalorder %s32, 1
      %p134 = scmp.ne.s32.totalorder %s129, %s131
      %p135 = scmp.eq.s32.totalorder %s32, 0
      %p136 = por %p134, %p135
      %p137 = scmp.ne.s32.totalorder %s129, %s131
      %p138 = scmp.eq.s32.totalorder %s37, 1
      %p139 = por %p137, %p138
      %p140 = scmp.ne.s32.totalorder %s131, %s132
      %p141 = scmp.eq.s32.totalorder %s37, 0
      %p142 = por %p140, %p141
      %p143 = scmp.ne.s32.totalorder %s131, %s132
      %p144 = scmp.eq.s32.totalorder %s38, 1
      %p145 = por %p143, %p144
      %p147 = scmp.ne.s32.totalorder %s132, %s146
      %p148 = scmp.eq.s32.totalorder %s38, 0
      %p149 = por %p147, %p148
      %s151 = sadd.s32 %s150, 1
      %p154 = scmp.eq.s32.totalorder %s32, 1
      %p155 = scmp.ne.s32.totalorder %s150, %s152
      %p156 = scmp.eq.s32.totalorder %s32, 0
      %p157 = por %p155, %p156
      %p158 = scmp.ne.s32.totalorder %s150, %s152
      %p159 = scmp.eq.s32.totalorder %s37, 1
      %p160 = por %p158, %p159
      %p161 = scmp.ne.s32.totalorder %s152, %s153
      %p162 = scmp.eq.s32.totalorder %s37, 0
      %p163 = por %p161, %p162
      %p164 = scmp.ne.s32.totalorder %s152, %s153
      %p165 = scmp.eq.s32.totalorder %s38, 1
      %p166 = por %p164, %p165
      %p168 = scmp.ne.s32.totalorder %s153, %s167
      %p169 = scmp.eq.s32.totalorder %s38, 0
      %p170 = por %p168, %p169
      %s172 = sadd.s32 %s171, 1
      %p175 = scmp.eq.s32.totalorder %s32, 1
      %p176 = scmp.ne.s32.totalorder %s171, %s173
      %p177 = scmp.eq.s32.totalorder %s32, 0
      %p178 = por %p176, %p177
      %p179 = scmp.ne.s32.totalorder %s171, %s173
      %p180 = scmp.eq.s32.totalorder %s37, 1
      %p181 = por %p179, %p180
      %p182 = scmp.ne.s32.totalorder %s173, %s174
      %p183 = scmp.eq.s32.totalorder %s37, 0
      %p184 = por %p182, %p183
      %p185 = scmp.ne.s32.totalorder %s173, %s174
      %p186 = scmp.eq.s32.totalorder %s38, 1
      %p187 = por %p185, %p186
      %p189 = scmp.ne.s32.totalorder %s174, %s188
      %p190 = scmp.eq.s32.totalorder %s38, 0
      %p191 = por %p189, %p190
      %s193 = sadd.s32 %s192, 1
      %p196 = scmp.eq.s32.totalorder %s32, 1
      %p197 = scmp.ne.s32.totalorder %s192, %s194
      %p198 = scmp.eq.s32.totalorder %s32, 0
      %p199 = por %p197, %p198
      %p200 = scmp.ne.s32.totalorder %s192, %s194
      %p201 = scmp.eq.s32.totalorder %s37, 1
      %p202 = por %p200, %p201
      %p203 = scmp.ne.s32.totalorder %s194, %s195
      %p204 = scmp.eq.s32.totalorder %s37, 0
      %p205 = por %p203, %p204
      %p206 = scmp.ne.s32.totalorder %s194, %s195
      %p207 = scmp.eq.s32.totalorder %s38, 1
      %p208 = por %p206, %p207
      %p210 = scmp.ne.s32.totalorder %s195, %s209
      %p211 = scmp.eq.s32.totalorder %s38, 0
      %p212 = por %p210, %p211
      %s214 = sadd.s32 %s213, 1
      %p217 = scmp.eq.s32.totalorder %s32, 1
      %p218 = scmp.ne.s32.totalorder %s213, %s215
      %p219 = scmp.eq.s32.totalorder %s32, 0
      %p220 = por %p218, %p219
      %p221 = scmp.ne.s32.totalorder %s213, %s215
      %p222 = scmp.eq.s32.totalorder %s37, 1
      %p223 = por %p221, %p222
      %p224 = scmp.ne.s32.totalorder %s215, %s216
      %p225 = scmp.eq.s32.totalorder %s37, 0
      %p226 = por %p224, %p225
      %p227 = scmp.ne.s32.totalorder %s215, %s216
      %p228 = scmp.eq.s32.totalorder %s38, 1
      %p229 = por %p227, %p228
      %p231 = scmp.ne.s32.totalorder %s216, %s230
      %p232 = scmp.eq.s32.totalorder %s38, 0
      %p233 = por %p231, %p232
      %s235 = sadd.s32 %s234, 1
      %p238 = scmp.eq.s32.totalorder %s32, 1
      %p239 = scmp.ne.s32.totalorder %s234, %s236
      %p240 = scmp.eq.s32.totalorder %s32, 0
      %p241 = por %p239, %p240
      %p242 = scmp.ne.s32.totalorder %s234, %s236
      %p243 = scmp.eq.s32.totalorder %s37, 1
      %p244 = por %p242, %p243
      %p245 = scmp.ne.s32.totalorder %s236, %s237
      %p246 = scmp.eq.s32.totalorder %s37, 0
      %p247 = por %p245, %p246
      %p248 = scmp.ne.s32.totalorder %s236, %s237
      %p249 = scmp.eq.s32.totalorder %s38, 1
      %p250 = por %p248, %p249
      %p252 = scmp.ne.s32.totalorder %s237, %s251
      %p253 = scmp.eq.s32.totalorder %s38, 0
      %p254 = por %p252, %p253
      %s256 = sadd.s32 %s255, 1
      %p259 = scmp.eq.s32.totalorder %s32, 1
      %p260 = scmp.ne.s32.totalorder %s255, %s257
      %p261 = scmp.eq.s32.totalorder %s32, 0
      %p262 = por %p260, %p261
      %p263 = scmp.ne.s32.totalorder %s255, %s257
      %p264 = scmp.eq.s32.totalorder %s37, 1
      %p265 = por %p263, %p264
      %p266 = scmp.ne.s32.totalorder %s257, %s258
      %p267 = scmp.eq.s32.totalorder %s37, 0
      %p268 = por %p266, %p267
      %p269 = scmp.ne.s32.totalorder %s257, %s258
      %p270 = scmp.eq.s32.totalorder %s38, 1
      %p271 = por %p269, %p270
      %p273 = scmp.ne.s32.totalorder %s258, %s272
      %p274 = scmp.eq.s32.totalorder %s38, 0
      %p275 = por %p273, %p274
      %s276 = ssub.s32 %s32, %s39
      %p277 = scmp.eq.s32.totalorder %s276, 0
      %s279 = sadd.s32 %s278, 1
      %s280 = scalar_select %p277, %s278, %s279
      %p283 = pneg %p277
      %p284 = scmp.eq.s32.totalorder %s32, 1
      %p285 = por %p283, %p284
      %p286 = scmp.ne.s32.totalorder %s278, %s281
      %p287 = scmp.eq.s32.totalorder %s32, 0
      %p288 = por %p286, %p287
      %p289 = scmp.ne.s32.totalorder %s278, %s281
      %p290 = scmp.eq.s32.totalorder %s37, 1
      %p291 = por %p289, %p290
      %p292 = scmp.ne.s32.totalorder %s281, %s282
      %p293 = scmp.eq.s32.totalorder %s37, 0
      %p294 = por %p292, %p293
      %p295 = scmp.ne.s32.totalorder %s281, %s282
      %p296 = scmp.eq.s32.totalorder %s38, 1
      %p297 = por %p295, %p296
      %p299 = scmp.ne.s32.totalorder %s282, %s298
      %p300 = scmp.eq.s32.totalorder %s38, 0
      %p301 = por %p299, %p300
      %s303 = sadd.s32 %s302, 1
      %p306 = scmp.eq.s32.totalorder %s32, 1
      %p307 = scmp.ne.s32.totalorder %s302, %s304
      %p308 = scmp.eq.s32.totalorder %s32, 0
      %p309 = por %p307, %p308
      %p310 = scmp.ne.s32.totalorder %s302, %s304
      %p311 = scmp.eq.s32.totalorder %s37, 1
      %p312 = por %p310, %p311
      %p313 = scmp.ne.s32.totalorder %s304, %s305
      %p314 = scmp.eq.s32.totalorder %s37, 0
      %p315 = por %p313, %p314
      %p316 = scmp.ne.s32.totalorder %s304, %s305
      %p317 = scmp.eq.s32.totalorder %s38, 1
      %p318 = por %p316, %p317
      %p320 = scmp.ne.s32.totalorder %s305, %s319
      %p321 = scmp.eq.s32.totalorder %s38, 0
      %p322 = por %p320, %p321
      %s324 = sadd.s32 %s323, 1
      %p327 = scmp.eq.s32.totalorder %s32, 1
      %p328 = scmp.ne.s32.totalorder %s323, %s325
      %p329 = scmp.eq.s32.totalorder %s32, 0
      %p330 = por %p328, %p329
      %p331 = scmp.ne.s32.totalorder %s323, %s325
      %p332 = scmp.eq.s32.totalorder %s37, 1
      %p333 = por %p331, %p332
      %p334 = scmp.ne.s32.totalorder %s325, %s326
      %p335 = scmp.eq.s32.totalorder %s37, 0
      %p336 = por %p334, %p335
      %p337 = scmp.ne.s32.totalorder %s325, %s326
      %p338 = scmp.eq.s32.totalorder %s38, 1
      %p339 = por %p337, %p338
      %p341 = scmp.ne.s32.totalorder %s326, %s340
      %p342 = scmp.eq.s32.totalorder %s38, 0
      %p343 = por %p341, %p342
      %s345 = sadd.s32 %s344, 1
      %p348 = scmp.eq.s32.totalorder %s32, 1
      %p349 = scmp.ne.s32.totalorder %s344, %s346
      %p350 = scmp.eq.s32.totalorder %s32, 0
      %p351 = por %p349, %p350
      %p352 = scmp.ne.s32.totalorder %s344, %s346
      %p353 = scmp.eq.s32.totalorder %s37, 1
      %p354 = por %p352, %p353
      %p355 = scmp.ne.s32.totalorder %s346, %s347
      %p356 = scmp.eq.s32.totalorder %s37, 0
      %p357 = por %p355, %p356
      %p358 = scmp.ne.s32.totalorder %s346, %s347
      %p359 = scmp.eq.s32.totalorder %s38, 1
      %p360 = por %p358, %p359
      %p362 = scmp.ne.s32.totalorder %s347, %s361
      %p363 = scmp.eq.s32.totalorder %s38, 0
      %p364 = por %p362, %p363
      %s366 = sadd.s32 %s365, 1
      %p369 = scmp.eq.s32.totalorder %s32, 1
      %p370 = scmp.ne.s32.totalorder %s365, %s367
      %p371 = scmp.eq.s32.totalorder %s32, 0
      %p372 = por %p370, %p371
      %p373 = scmp.ne.s32.totalorder %s365, %s367
      %p374 = scmp.eq.s32.totalorder %s37, 1
      %p375 = por %p373, %p374
      %p376 = scmp.ne.s32.totalorder %s367, %s368
      %p377 = scmp.eq.s32.totalorder %s37, 0
      %p378 = por %p376, %p377
      %p379 = scmp.ne.s32.totalorder %s367, %s368
      %p380 = scmp.eq.s32.totalorder %s38, 1
      %p381 = por %p379, %p380
      %p383 = scmp.ne.s32.totalorder %s368, %s382
      %p384 = scmp.eq.s32.totalorder %s38, 0
      %p385 = por %p383, %p384
      %s386 = ssub.s32 %s32, %s39
      %p387 = scmp.eq.s32.totalorder %s386, 0
      %s389 = sadd.s32 %s388, 1
      %s390 = scalar_select %p387, %s388, %s389
      %p393 = pneg %p387
      %p394 = scmp.eq.s32.totalorder %s32, 1
      %p395 = por %p393, %p394
      %p396 = scmp.ne.s32.totalorder %s388, %s391
      %p397 = scmp.eq.s32.totalorder %s32, 0
      %p398 = por %p396, %p397
      %p399 = scmp.ne.s32.totalorder %s388, %s391
      %p400 = scmp.eq.s32.totalorder %s37, 1
      %p401 = por %p399, %p400
      %p402 = scmp.ne.s32.totalorder %s391, %s392
      %p403 = scmp.eq.s32.totalorder %s37, 0
      %p404 = por %p402, %p403
      %p405 = scmp.ne.s32.totalorder %s391, %s392
      %p406 = scmp.eq.s32.totalorder %s38, 1
      %p407 = por %p405, %p406
      %p409 = scmp.ne.s32.totalorder %s392, %s408
      %p410 = scmp.eq.s32.totalorder %s38, 0
      %p411 = por %p409, %p410
      %s412 = ssub.s32 %s32, %s39
      %p413 = scmp.eq.s32.totalorder %s412, 0
      %s415 = sadd.s32 %s414, 1
      %s416 = scalar_select %p413, %s414, %s415
      %p419 = pneg %p413
      %p420 = scmp.eq.s32.totalorder %s32, 1
      %p421 = por %p419, %p420
      %p422 = scmp.ne.s32.totalorder %s414, %s417
      %p423 = scmp.eq.s32.totalorder %s32, 0
      %p424 = por %p422, %p423
      %p425 = scmp.ne.s32.totalorder %s414, %s417
      %p426 = scmp.eq.s32.totalorder %s37, 1
      %p427 = por %p425, %p426
      %p428 = scmp.ne.s32.totalorder %s417, %s418
      %p429 = scmp.eq.s32.totalorder %s37, 0
      %p430 = por %p428, %p429
      %p431 = scmp.ne.s32.totalorder %s417, %s418
      %p432 = scmp.eq.s32.totalorder %s38, 1
      %p433 = por %p431, %p432
      %p435 = scmp.ne.s32.totalorder %s418, %s434
      %p436 = scmp.eq.s32.totalorder %s38, 0
      %p437 = por %p435, %p436
      %p438 = scmp.le.s32.totalorder 1, %s32
      %p439 = scmp.lt.s32.totalorder %s32, 3
      %p440 = pnand %p438, %p439
      %p441 = pneg %p440
      // Predicated region
      $region9: #{tpu_custom_call.1} parent=5 // pred_check
        _
      $region10: #{tpu_custom_call.1} parent=5 // pred_check_branch
        %443 = sbr.rel (%p440) target = $region12
      $region11: #{tpu_custom_call.1} parent=5 // pred_region
        %s444 = ssub.s32 %s32, 1
        // Predicated region
        $region13: #{tpu_custom_call.1} parent=11 // pred_check
          %p445 = pneg %p79
        $region14: #{tpu_custom_call.1} parent=11 // pred_check_branch
          %447 = sbr.rel (%p445) target = $region16
        $region15: #{tpu_custom_call.1} parent=11 // pred_region
          %449 = vsyncadd [#allocation4], 0
          %s450 = sshll.u32 %s1, 4
          %s451 = int_to_ptr.hbm [resolvable:$true] %s450
          %s452 = sshll.u32 [#allocation3], 4
          %s453 = int_to_ptr.vmem [resolvable:$true] %s452
          %458 = dma.hbm_to_vmem [thread:$0]  %s451, 16384, %s453, [#allocation4], 512, 512, 32
        $region16: #{tpu_custom_call.1} parent=11 // pred_fallthru
          _
        // Predicated region
        $region17: #{tpu_custom_call.1} parent=11 // pred_check
          %p459 = pneg %p100
        $region18: #{tpu_custom_call.1} parent=11 // pred_check_branch
          %461 = sbr.rel (%p459) target = $region20
        $region19: #{tpu_custom_call.1} parent=11 // pred_region
          _
        $region20: #{tpu_custom_call.1} parent=11 // pred_fallthru
          _
        // Predicated region
        $region21: #{tpu_custom_call.1} parent=11 // pred_check
          %p462 = pneg %p121
        $region22: #{tpu_custom_call.1} parent=11 // pred_check_branch
          %464 = sbr.rel (%p462) target = $region24
        $region23: #{tpu_custom_call.1} parent=11 // pred_region
          %466 = vsyncadd [#allocation7], 0
          %s467 = sshll.u32 %s3, 4
          %s468 = int_to_ptr.hbm [resolvable:$true] %s467
          %s469 = sshll.u32 [#allocation6], 4
          %s470 = int_to_ptr.vmem [resolvable:$true] %s469
          %475 = dma.hbm_to_vmem [thread:$0]  %s468, 32768, %s470, [#allocation7], 512, 512, 32
        $region24: #{tpu_custom_call.1} parent=11 // pred_fallthru
          _
        // Predicated region
        $region25: #{tpu_custom_call.1} parent=11 // pred_check
          %p476 = pneg %p142
        $region26: #{tpu_custom_call.1} parent=11 // pred_check_branch
          %478 = sbr.rel (%p476) target = $region28
        $region27: #{tpu_custom_call.1} parent=11 // pred_region
          _
        $region28: #{tpu_custom_call.1} parent=11 // pred_fallthru
          _
        // Predicated region
        $region29: #{tpu_custom_call.1} parent=11 // pred_check
          %p479 = pneg %p163
        $region30: #{tpu_custom_call.1} parent=11 // pred_check_branch
          %481 = sbr.rel (%p479) target = $region32
        $region31: #{tpu_custom_call.1} parent=11 // pred_region
          %483 = vsyncadd [#allocation7], 0
          %s484 = sshll.u32 %s5, 4
          %s485 = int_to_ptr.hbm [resolvable:$true] %s484
          %s486 = sshll.u32 [#allocation8], 4
          %s487 = int_to_ptr.vmem [resolvable:$true] %s486
          %492 = dma.hbm_to_vmem [thread:$0]  %s485, 32768, %s487, [#allocation7], 512, 512, 32
        $region32: #{tpu_custom_call.1} parent=11 // pred_fallthru
          _
        // Predicated region
        $region33: #{tpu_custom_call.1} parent=11 // pred_check
          %p493 = pneg %p184
        $region34: #{tpu_custom_call.1} parent=11 // pred_check_branch
          %495 = sbr.rel (%p493) target = $region36
        $region35: #{tpu_custom_call.1} parent=11 // pred_region
          _
        $region36: #{tpu_custom_call.1} parent=11 // pred_fallthru
          _
        // Predicated region
        $region37: #{tpu_custom_call.1} parent=11 // pred_check
          %p496 = pneg %p205
        $region38: #{tpu_custom_call.1} parent=11 // pred_check_branch
          %498 = sbr.rel (%p496) target = $region40
        $region39: #{tpu_custom_call.1} parent=11 // pred_region
          %500 = vsyncadd [#allocation10], 0
          %s501 = sshll.u32 %s7, 4
          %s502 = int_to_ptr.hbm [resolvable:$true] %s501
          %s503 = sshll.u32 [#allocation9], 4
          %s504 = int_to_ptr.vmem [resolvable:$true] %s503
          %509 = dma.hbm_to_vmem [thread:$0]  %s502, 32768, %s504, [#allocation10], 512, 512, 32
        $region40: #{tpu_custom_call.1} parent=11 // pred_fallthru
          _
        // Predicated region
        $region41: #{tpu_custom_call.1} parent=11 // pred_check
          %p510 = pneg %p226
        $region42: #{tpu_custom_call.1} parent=11 // pred_check_branch
          %512 = sbr.rel (%p510) target = $region44
        $region43: #{tpu_custom_call.1} parent=11 // pred_region
          %514 = vsyncadd [#allocation10], 0
          %s515 = sshll.u32 %s8, 4
          %s516 = int_to_ptr.hbm [resolvable:$true] %s515
          %s517 = sshll.u32 [#allocation11], 4
          %s518 = int_to_ptr.vmem [resolvable:$true] %s517
          %523 = dma.hbm_to_vmem [thread:$0]  %s516, 4096, %s518, [#allocation10], 512, 512, 32
        $region44: #{tpu_custom_call.1} parent=11 // pred_fallthru
          _
        // Predicated region
        $region45: #{tpu_custom_call.1} parent=11 // pred_check
          %p524 = pneg %p247
        $region46: #{tpu_custom_call.1} parent=11 // pred_check_branch
          %526 = sbr.rel (%p524) target = $region48
        $region47: #{tpu_custom_call.1} parent=11 // pred_region
          _
        $region48: #{tpu_custom_call.1} parent=11 // pred_fallthru
          _
        // Predicated region
        $region49: #{tpu_custom_call.1} parent=11 // pred_check
          %p527 = pneg %p268
        $region50: #{tpu_custom_call.1} parent=11 // pred_check_branch
          %529 = sbr.rel (%p527) target = $region52
        $region51: #{tpu_custom_call.1} parent=11 // pred_region
          _
        $region52: #{tpu_custom_call.1} parent=11 // pred_fallthru
          _
        // Predicated region
        $region53: #{tpu_custom_call.1} parent=11 // pred_check
          %p530 = pneg %p315
        $region54: #{tpu_custom_call.1} parent=11 // pred_check_branch
          %532 = sbr.rel (%p530) target = $region56
        $region55: #{tpu_custom_call.1} parent=11 // pred_region
          _
        $region56: #{tpu_custom_call.1} parent=11 // pred_fallthru
          _
        // Predicated region
        $region57: #{tpu_custom_call.1} parent=11 // pred_check
          %p533 = pneg %p336
        $region58: #{tpu_custom_call.1} parent=11 // pred_check_branch
          %535 = sbr.rel (%p533) target = $region60
        $region59: #{tpu_custom_call.1} parent=11 // pred_region
          _
        $region60: #{tpu_custom_call.1} parent=11 // pred_fallthru
          _
        // Predicated region
        $region61: #{tpu_custom_call.1} parent=11 // pred_check
          %p536 = pneg %p357
        $region62: #{tpu_custom_call.1} parent=11 // pred_check_branch
          %538 = sbr.rel (%p536) target = $region64
        $region63: #{tpu_custom_call.1} parent=11 // pred_region
          _
        $region64: #{tpu_custom_call.1} parent=11 // pred_fallthru
          _
        // Predicated region
        $region65: #{tpu_custom_call.1} parent=11 // pred_check
          %p539 = pneg %p378
        $region66: #{tpu_custom_call.1} parent=11 // pred_check_branch
          %541 = sbr.rel (%p539) target = $region68
        $region67: #{tpu_custom_call.1} parent=11 // pred_region
          _
        $region68: #{tpu_custom_call.1} parent=11 // pred_fallthru
          _
      $region12: #{tpu_custom_call.1} parent=5 // pred_fallthru
        _
      %p542 = scmp.lt.s32.totalorder %s32, 2
      // Predicated region
      $region69: #{tpu_custom_call.1} parent=5 // pred_check
        %p543 = pneg %p542
      $region70: #{tpu_custom_call.1} parent=5 // pred_check_branch
        %545 = sbr.rel (%p543) target = $region72
      $region71: #{tpu_custom_call.1} parent=5 // pred_region
        // Predicated region
        $region73: #{tpu_custom_call.1} parent=71 // pred_check
          %p546 = pneg %p52
        $region74: #{tpu_custom_call.1} parent=71 // pred_check_branch
          %548 = sbr.rel (%p546) target = $region76
        $region75: #{tpu_custom_call.1} parent=71 // pred_region
          %p549 = scmp.lt.s32.totalorder %s32, 1
          %s550 = scalar_select %p549, %s32, 1
          %s551 = smul.addr %s550, 2
          %s552 = scalar_lea.vmem %s0, %s551
        $region76: #{tpu_custom_call.1} parent=71 // pred_fallthru
          _
        // Predicated region
        $region77: #{tpu_custom_call.1} parent=71 // pred_check
          %p553 = pneg %p288
        $region78: #{tpu_custom_call.1} parent=71 // pred_check_branch
          %555 = sbr.rel (%p553) target = $region80
        $region79: #{tpu_custom_call.1} parent=71 // pred_region
          %p556 = scmp.lt.s32.totalorder %s32, 1
          %s557 = scalar_select %p556, %s32, 1
          %s558 = scalar_lea.vmem %s11, %s557
        $region80: #{tpu_custom_call.1} parent=71 // pred_fallthru
          _
      $region72: #{tpu_custom_call.1} parent=5 // pred_fallthru
        _
      %p559 = scmp.le.s32.totalorder 1, %s32
      %p560 = scmp.lt.s32.totalorder %s32, 3
      %p561 = pnand %p559, %p560
      %p562 = pneg %p561
      // Predicated region
      $region81: #{tpu_custom_call.1} parent=5 // pred_check
        _
      $region82: #{tpu_custom_call.1} parent=5 // pred_check_branch
        %564 = sbr.rel (%p561) target = $region84
      $region83: #{tpu_custom_call.1} parent=5 // pred_region
        %s565 = ssub.s32 %s32, 1
        // Predicated region
        $region85: #{tpu_custom_call.1} parent=83 // pred_check
          %p566 = pneg %p79
        $region86: #{tpu_custom_call.1} parent=83 // pred_check_branch
          %568 = sbr.rel (%p566) target = $region88
        $region87: #{tpu_custom_call.1} parent=83 // pred_region
          %570 = dma.done [#allocation4], 16384
        $region88: #{tpu_custom_call.1} parent=83 // pred_fallthru
          _
        // Predicated region
        $region89: #{tpu_custom_call.1} parent=83 // pred_check
          %p571 = pneg %p121
        $region90: #{tpu_custom_call.1} parent=83 // pred_check_branch
          %573 = sbr.rel (%p571) target = $region92
        $region91: #{tpu_custom_call.1} parent=83 // pred_region
          %575 = dma.done [#allocation7], 32768
        $region92: #{tpu_custom_call.1} parent=83 // pred_fallthru
          _
        // Predicated region
        $region93: #{tpu_custom_call.1} parent=83 // pred_check
          %p576 = pneg %p163
        $region94: #{tpu_custom_call.1} parent=83 // pred_check_branch
          %578 = sbr.rel (%p576) target = $region96
        $region95: #{tpu_custom_call.1} parent=83 // pred_region
          %580 = dma.done [#allocation7], 32768
        $region96: #{tpu_custom_call.1} parent=83 // pred_fallthru
          _
        // Predicated region
        $region97: #{tpu_custom_call.1} parent=83 // pred_check
          %p581 = pneg %p205
        $region98: #{tpu_custom_call.1} parent=83 // pred_check_branch
          %583 = sbr.rel (%p581) target = $region100
        $region99: #{tpu_custom_call.1} parent=83 // pred_region
          %585 = dma.done [#allocation10], 32768
        $region100: #{tpu_custom_call.1} parent=83 // pred_fallthru
          _
        // Predicated region
        $region101: #{tpu_custom_call.1} parent=83 // pred_check
          %p586 = pneg %p226
        $region102: #{tpu_custom_call.1} parent=83 // pred_check_branch
          %588 = sbr.rel (%p586) target = $region104
        $region103: #{tpu_custom_call.1} parent=83 // pred_region
          %590 = dma.done [#allocation10], 4096
        $region104: #{tpu_custom_call.1} parent=83 // pred_fallthru
          _
        %p591 = scmp.lt.s32.totalorder %s37, 1
        %s592 = scalar_select %p591, %s37, 1
        %s593 = smul.addr %s592, 2
        %s594 = scalar_lea.vmem %s0, %s593
        %p595 = pneg %p58
        %p596 = pneg %p55
        %p597 = pneg %p79
        %p598 = pneg %p76
        %p599 = pneg %p100
        %p600 = pneg %p97
        %p601 = pneg %p121
        %p602 = pneg %p118
        %p603 = pneg %p142
        %p604 = pneg %p139
        %p605 = pneg %p163
        %p606 = pneg %p160
        %p607 = pneg %p184
        %p608 = pneg %p181
        %p609 = pneg %p205
        %p610 = pneg %p202
        %p611 = pneg %p226
        %p612 = pneg %p223
        %p613 = pneg %p247
        %p614 = pneg %p244
        %p615 = pneg %p268
        %p616 = pneg %p265
        %p617 = scmp.lt.s32.totalorder %s37, 1
        %s618 = scalar_select %p617, %s37, 1
        %s619 = scalar_lea.vmem %s11, %s618
        %p620 = pneg %p294
        %p621 = pneg %p291
        %p622 = pneg %p315
        %p623 = pneg %p312
        %p624 = pneg %p336
        %p625 = pneg %p333
        %p626 = pneg %p357
        %p627 = pneg %p354
        %p628 = pneg %p378
        %p629 = pneg %p375
        %p630 = pneg %p404
        %p631 = pneg %p401
        %p632 = scmp.lt.s32.totalorder %s37, 1
        %s633 = scalar_select %p632, %s37, 1
        %s634 = scalar_lea.vmem %s16, %s633
        %p635 = pneg %p430
        %p636 = pneg %p427
        %s637 = sand.u32 %s417, 1
        %s638 = scalar_lea.sflag [#allocation5], %s637
        %s639 = sand.u32 %s417, 1
        %s640 = scalar_lea.vmem [#allocation12], %s639
        %p641 = scmp.lt.s32.totalorder %s37, 1
        %s642 = scalar_select %p641, %s37, 1
        %s643 = smul.addr %s642, 2
        %s644 = scalar_lea.vmem %s0, %s643
        %p645 = scmp.lt.s32.totalorder %s37, 1
        %s646 = scalar_select %p645, %s37, 1
        %s647 = scalar_lea.vmem %s11, %s646
        %p648 = scmp.lt.s32.totalorder %s37, 1
        %s649 = scalar_select %p648, %s37, 1
        %s650 = scalar_lea.vmem %s16, %s649
        %v651 = vld [vmem:[%s644] sm:$0x3]
        %v652 = vld [vmem:[#allocation3] sm:$0xff]
        %v653 = vld [vmem:[#allocation3 + $0x8] sm:$0xff]
        %v654 = vld [vmem:[#allocation3 + $0x10] sm:$0xff]
        %v655 = vld [vmem:[#allocation3 + $0x18] sm:$0xff]
        %v656 = vld [vmem:[#allocation3 + $0x20] sm:$0xff]
        %v657 = vld [vmem:[#allocation3 + $0x28] sm:$0xff]
        %v658 = vld [vmem:[#allocation3 + $0x30] sm:$0xff]
        %v659 = vld [vmem:[#allocation3 + $0x38] sm:$0xff]
        %v660 = vld [vmem:[#allocation3 + $0x40] sm:$0xff]
        %v661 = vld [vmem:[#allocation3 + $0x48] sm:$0xff]
        %v662 = vld [vmem:[#allocation3 + $0x50] sm:$0xff]
        %v663 = vld [vmem:[#allocation3 + $0x58] sm:$0xff]
        %v664 = vld [vmem:[#allocation3 + $0x60] sm:$0xff]
        %v665 = vld [vmem:[#allocation3 + $0x68] sm:$0xff]
        %v666 = vld [vmem:[#allocation3 + $0x70] sm:$0xff]
        %v667 = vld [vmem:[#allocation3 + $0x78] sm:$0xff]
        %v668 = vld [vmem:[#allocation3 + $0x80] sm:$0xff]
        %v669 = vld [vmem:[#allocation3 + $0x88] sm:$0xff]
        %v670 = vld [vmem:[#allocation3 + $0x90] sm:$0xff]
        %v671 = vld [vmem:[#allocation3 + $0x98] sm:$0xff]
        %v672 = vld [vmem:[#allocation3 + $0xa0] sm:$0xff]
        %v673 = vld [vmem:[#allocation3 + $0xa8] sm:$0xff]
        %v674 = vld [vmem:[#allocation3 + $0xb0] sm:$0xff]
        %v675 = vld [vmem:[#allocation3 + $0xb8] sm:$0xff]
        %v676 = vld [vmem:[#allocation3 + $0xc0] sm:$0xff]
        %v677 = vld [vmem:[#allocation3 + $0xc8] sm:$0xff]
        %v678 = vld [vmem:[#allocation3 + $0xd0] sm:$0xff]
        %v679 = vld [vmem:[#allocation3 + $0xd8] sm:$0xff]
        %v680 = vld [vmem:[#allocation3 + $0xe0] sm:$0xff]
        %v681 = vld [vmem:[#allocation3 + $0xe8] sm:$0xff]
        %v682 = vld [vmem:[#allocation3 + $0xf0] sm:$0xff]
        %v683 = vld [vmem:[#allocation3 + $0xf8] sm:$0xff]
        %v684 = vld [vmem:[#allocation3 + $0x100] sm:$0xff]
        %v685 = vld [vmem:[#allocation3 + $0x108] sm:$0xff]
        %v686 = vld [vmem:[#allocation3 + $0x110] sm:$0xff]
        %v687 = vld [vmem:[#allocation3 + $0x118] sm:$0xff]
        %v688 = vld [vmem:[#allocation3 + $0x120] sm:$0xff]
        %v689 = vld [vmem:[#allocation3 + $0x128] sm:$0xff]
        %v690 = vld [vmem:[#allocation3 + $0x130] sm:$0xff]
        %v691 = vld [vmem:[#allocation3 + $0x138] sm:$0xff]
        %v692 = vld [vmem:[#allocation3 + $0x140] sm:$0xff]
        %v693 = vld [vmem:[#allocation3 + $0x148] sm:$0xff]
        %v694 = vld [vmem:[#allocation3 + $0x150] sm:$0xff]
        %v695 = vld [vmem:[#allocation3 + $0x158] sm:$0xff]
        %v696 = vld [vmem:[#allocation3 + $0x160] sm:$0xff]
        %v697 = vld [vmem:[#allocation3 + $0x168] sm:$0xff]
        %v698 = vld [vmem:[#allocation3 + $0x170] sm:$0xff]
        %v699 = vld [vmem:[#allocation3 + $0x178] sm:$0xff]
        %v700 = vld [vmem:[#allocation3 + $0x180] sm:$0xff]
        %v701 = vld [vmem:[#allocation3 + $0x188] sm:$0xff]
        %v702 = vld [vmem:[#allocation3 + $0x190] sm:$0xff]
        %v703 = vld [vmem:[#allocation3 + $0x198] sm:$0xff]
        %v704 = vld [vmem:[#allocation3 + $0x1a0] sm:$0xff]
        %v705 = vld [vmem:[#allocation3 + $0x1a8] sm:$0xff]
        %v706 = vld [vmem:[#allocation3 + $0x1b0] sm:$0xff]
        %v707 = vld [vmem:[#allocation3 + $0x1b8] sm:$0xff]
        %v708 = vld [vmem:[#allocation3 + $0x1c0] sm:$0xff]
        %v709 = vld [vmem:[#allocation3 + $0x1c8] sm:$0xff]
        %v710 = vld [vmem:[#allocation3 + $0x1d0] sm:$0xff]
        %v711 = vld [vmem:[#allocation3 + $0x1d8] sm:$0xff]
        %v712 = vld [vmem:[#allocation3 + $0x1e0] sm:$0xff]
        %v713 = vld [vmem:[#allocation3 + $0x1e8] sm:$0xff]
        %v714 = vld [vmem:[#allocation3 + $0x1f0] sm:$0xff]
        %v715 = vld [vmem:[#allocation3 + $0x1f8] sm:$0xff]
        %v716 = vld [vmem:[#allocation3 + $0x200] sm:$0xff]
        %v717 = vld [vmem:[#allocation3 + $0x208] sm:$0xff]
        %v718 = vld [vmem:[#allocation3 + $0x210] sm:$0xff]
        %v719 = vld [vmem:[#allocation3 + $0x218] sm:$0xff]
        %v720 = vld [vmem:[#allocation3 + $0x220] sm:$0xff]
        %v721 = vld [vmem:[#allocation3 + $0x228] sm:$0xff]
        %v722 = vld [vmem:[#allocation3 + $0x230] sm:$0xff]
        %v723 = vld [vmem:[#allocation3 + $0x238] sm:$0xff]
        %v724 = vld [vmem:[#allocation3 + $0x240] sm:$0xff]
        %v725 = vld [vmem:[#allocation3 + $0x248] sm:$0xff]
        %v726 = vld [vmem:[#allocation3 + $0x250] sm:$0xff]
        %v727 = vld [vmem:[#allocation3 + $0x258] sm:$0xff]
        %v728 = vld [vmem:[#allocation3 + $0x260] sm:$0xff]
        %v729 = vld [vmem:[#allocation3 + $0x268] sm:$0xff]
        %v730 = vld [vmem:[#allocation3 + $0x270] sm:$0xff]
        %v731 = vld [vmem:[#allocation3 + $0x278] sm:$0xff]
        %v732 = vld [vmem:[#allocation3 + $0x280] sm:$0xff]
        %v733 = vld [vmem:[#allocation3 + $0x288] sm:$0xff]
        %v734 = vld [vmem:[#allocation3 + $0x290] sm:$0xff]
        %v735 = vld [vmem:[#allocation3 + $0x298] sm:$0xff]
        %v736 = vld [vmem:[#allocation3 + $0x2a0] sm:$0xff]
        %v737 = vld [vmem:[#allocation3 + $0x2a8] sm:$0xff]
        %v738 = vld [vmem:[#allocation3 + $0x2b0] sm:$0xff]
        %v739 = vld [vmem:[#allocation3 + $0x2b8] sm:$0xff]
        %v740 = vld [vmem:[#allocation3 + $0x2c0] sm:$0xff]
        %v741 = vld [vmem:[#allocation3 + $0x2c8] sm:$0xff]
        %v742 = vld [vmem:[#allocation3 + $0x2d0] sm:$0xff]
        %v743 = vld [vmem:[#allocation3 + $0x2d8] sm:$0xff]
        %v744 = vld [vmem:[#allocation3 + $0x2e0] sm:$0xff]
        %v745 = vld [vmem:[#allocation3 + $0x2e8] sm:$0xff]
        %v746 = vld [vmem:[#allocation3 + $0x2f0] sm:$0xff]
        %v747 = vld [vmem:[#allocation3 + $0x2f8] sm:$0xff]
        %v748 = vld [vmem:[#allocation3 + $0x300] sm:$0xff]
        %v749 = vld [vmem:[#allocation3 + $0x308] sm:$0xff]
        %v750 = vld [vmem:[#allocation3 + $0x310] sm:$0xff]
        %v751 = vld [vmem:[#allocation3 + $0x318] sm:$0xff]
        %v752 = vld [vmem:[#allocation3 + $0x320] sm:$0xff]
        %v753 = vld [vmem:[#allocation3 + $0x328] sm:$0xff]
        %v754 = vld [vmem:[#allocation3 + $0x330] sm:$0xff]
        %v755 = vld [vmem:[#allocation3 + $0x338] sm:$0xff]
        %v756 = vld [vmem:[#allocation3 + $0x340] sm:$0xff]
        %v757 = vld [vmem:[#allocation3 + $0x348] sm:$0xff]
        %v758 = vld [vmem:[#allocation3 + $0x350] sm:$0xff]
        %v759 = vld [vmem:[#allocation3 + $0x358] sm:$0xff]
        %v760 = vld [vmem:[#allocation3 + $0x360] sm:$0xff]
        %v761 = vld [vmem:[#allocation3 + $0x368] sm:$0xff]
        %v762 = vld [vmem:[#allocation3 + $0x370] sm:$0xff]
        %v763 = vld [vmem:[#allocation3 + $0x378] sm:$0xff]
        %v764 = vld [vmem:[#allocation3 + $0x380] sm:$0xff]
        %v765 = vld [vmem:[#allocation3 + $0x388] sm:$0xff]
        %v766 = vld [vmem:[#allocation3 + $0x390] sm:$0xff]
        %v767 = vld [vmem:[#allocation3 + $0x398] sm:$0xff]
        %v768 = vld [vmem:[#allocation3 + $0x3a0] sm:$0xff]
        %v769 = vld [vmem:[#allocation3 + $0x3a8] sm:$0xff]
        %v770 = vld [vmem:[#allocation3 + $0x3b0] sm:$0xff]
        %v771 = vld [vmem:[#allocation3 + $0x3b8] sm:$0xff]
        %v772 = vld [vmem:[#allocation3 + $0x3c0] sm:$0xff]
        %v773 = vld [vmem:[#allocation3 + $0x3c8] sm:$0xff]
        %v774 = vld [vmem:[#allocation3 + $0x3d0] sm:$0xff]
        %v775 = vld [vmem:[#allocation3 + $0x3d8] sm:$0xff]
        %v776 = vld [vmem:[#allocation3 + $0x3e0] sm:$0xff]
        %v777 = vld [vmem:[#allocation3 + $0x3e8] sm:$0xff]
        %v778 = vld [vmem:[#allocation3 + $0x3f0] sm:$0xff]
        %v779 = vld [vmem:[#allocation3 + $0x3f8] sm:$0xff]
        %v780 = vld [vmem:[%s2] sm:$0xf]
        %v782 = vperm.slane %v651, 0
        %v783 = vperm.slane %v651, 1
        %v787 = vperm.slane %v780, 0
        %v788 = vperm.slane %v780, 1
        %v789 = vperm.slane %v780, 2
        %v790 = vperm.slane %v780, 3
        %795 = vmatpush.msra.mxu0 %v712
        %796 = vmatpush.msra.mxu0 %v708
        %797 = vmatpush.msra.mxu0 %v704
        %798 = vmatpush.msra.mxu0 %v700
        %799 = vmatpush.msra.mxu0 %v696
        %800 = vmatpush.msra.mxu0 %v692
        %801 = vmatpush.msra.mxu0 %v688
        %802 = vmatpush.msra.mxu0 %v684
        %803 = vmatpush.msra.mxu0 %v680
        %804 = vmatpush.msra.mxu0 %v676
        %805 = vmatpush.msra.mxu0 %v672
        %806 = vmatpush.msra.mxu0 %v668
        %807 = vmatpush.msra.mxu0 %v664
        %808 = vmatpush.msra.mxu0 %v660
        %809 = vmatpush.msra.mxu0 %v656
        %810 = vmatpush.msra.mxu0 %v652
        %811 = vmatmul.f32.gmra.mxu0 %v782
        %v812 = vpop.f32.mrf.mxu0
        %v813 = vadd.f32 %v787, %v812
        %814 = vdwg.mxu0
        %815 = vmatpush.msra.mxu0 %v776
        %816 = vmatpush.msra.mxu0 %v772
        %817 = vmatpush.msra.mxu0 %v768
        %818 = vmatpush.msra.mxu0 %v764
        %819 = vmatpush.msra.mxu0 %v760
        %820 = vmatpush.msra.mxu0 %v756
        %821 = vmatpush.msra.mxu0 %v752
        %822 = vmatpush.msra.mxu0 %v748
        %823 = vmatpush.msra.mxu0 %v744
        %824 = vmatpush.msra.mxu0 %v740
        %825 = vmatpush.msra.mxu0 %v736
        %826 = vmatpush.msra.mxu0 %v732
        %827 = vmatpush.msra.mxu0 %v728
        %828 = vmatpush.msra.mxu0 %v724
        %829 = vmatpush.msra.mxu0 %v720
        %830 = vmatpush.msra.mxu0 %v716
        %831 = vmatmul.f32.gmra.mxu0 %v783
        %v832 = vpop.f32.mrf.mxu0
        %v833 = vadd.f32 %v813, %v832
        %834 = vdwg.mxu0
        %835 = vmatpush.msra.mxu0 %v713
        %836 = vmatpush.msra.mxu0 %v709
        %837 = vmatpush.msra.mxu0 %v705
        %838 = vmatpush.msra.mxu0 %v701
        %839 = vmatpush.msra.mxu0 %v697
        %840 = vmatpush.msra.mxu0 %v693
        %841 = vmatpush.msra.mxu0 %v689
        %842 = vmatpush.msra.mxu0 %v685
        %843 = vmatpush.msra.mxu0 %v681
        %844 = vmatpush.msra.mxu0 %v677
        %845 = vmatpush.msra.mxu0 %v673
        %846 = vmatpush.msra.mxu0 %v669
        %847 = vmatpush.msra.mxu0 %v665
        %848 = vmatpush.msra.mxu0 %v661
        %849 = vmatpush.msra.mxu0 %v657
        %850 = vmatpush.msra.mxu0 %v653
        %851 = vmatmul.f32.gmra.mxu0 %v782
        %v852 = vpop.f32.mrf.mxu0
        %v853 = vadd.f32 %v788, %v852
        %854 = vdwg.mxu0
        %855 = vmatpush.msra.mxu0 %v777
        %856 = vmatpush.msra.mxu0 %v773
        %857 = vmatpush.msra.mxu0 %v769
        %858 = vmatpush.msra.mxu0 %v765
        %859 = vmatpush.msra.mxu0 %v761
        %860 = vmatpush.msra.mxu0 %v757
        %861 = vmatpush.msra.mxu0 %v753
        %862 = vmatpush.msra.mxu0 %v749
        %863 = vmatpush.msra.mxu0 %v745
        %864 = vmatpush.msra.mxu0 %v741
        %865 = vmatpush.msra.mxu0 %v737
        %866 = vmatpush.msra.mxu0 %v733
        %867 = vmatpush.msra.mxu0 %v729
        %868 = vmatpush.msra.mxu0 %v725
        %869 = vmatpush.msra.mxu0 %v721
        %870 = vmatpush.msra.mxu0 %v717
        %871 = vmatmul.f32.gmra.mxu0 %v783
        %v872 = vpop.f32.mrf.mxu0
        %v873 = vadd.f32 %v853, %v872
        %874 = vdwg.mxu0
        %875 = vmatpush.msra.mxu0 %v714
        %876 = vmatpush.msra.mxu0 %v710
        %877 = vmatpush.msra.mxu0 %v706
        %878 = vmatpush.msra.mxu0 %v702
        %879 = vmatpush.msra.mxu0 %v698
        %880 = vmatpush.msra.mxu0 %v694
        %881 = vmatpush.msra.mxu0 %v690
        %882 = vmatpush.msra.mxu0 %v686
        %883 = vmatpush.msra.mxu0 %v682
        %884 = vmatpush.msra.mxu0 %v678
        %885 = vmatpush.msra.mxu0 %v674
        %886 = vmatpush.msra.mxu0 %v670
        %887 = vmatpush.msra.mxu0 %v666
        %888 = vmatpush.msra.mxu0 %v662
        %889 = vmatpush.msra.mxu0 %v658
        %890 = vmatpush.msra.mxu0 %v654
        %891 = vmatmul.f32.gmra.mxu0 %v782
        %v892 = vpop.f32.mrf.mxu0
        %v893 = vadd.f32 %v789, %v892
        %894 = vdwg.mxu0
        %895 = vmatpush.msra.mxu0 %v778
        %896 = vmatpush.msra.mxu0 %v774
        %897 = vmatpush.msra.mxu0 %v770
        %898 = vmatpush.msra.mxu0 %v766
        %899 = vmatpush.msra.mxu0 %v762
        %900 = vmatpush.msra.mxu0 %v758
        %901 = vmatpush.msra.mxu0 %v754
        %902 = vmatpush.msra.mxu0 %v750
        %903 = vmatpush.msra.mxu0 %v746
        %904 = vmatpush.msra.mxu0 %v742
        %905 = vmatpush.msra.mxu0 %v738
        %906 = vmatpush.msra.mxu0 %v734
        %907 = vmatpush.msra.mxu0 %v730
        %908 = vmatpush.msra.mxu0 %v726
        %909 = vmatpush.msra.mxu0 %v722
        %910 = vmatpush.msra.mxu0 %v718
        %911 = vmatmul.f32.gmra.mxu0 %v783
        %v912 = vpop.f32.mrf.mxu0
        %v913 = vadd.f32 %v893, %v912
        %914 = vdwg.mxu0
        %915 = vmatpush.msra.mxu0 %v715
        %916 = vmatpush.msra.mxu0 %v711
        %917 = vmatpush.msra.mxu0 %v707
        %918 = vmatpush.msra.mxu0 %v703
        %919 = vmatpush.msra.mxu0 %v699
        %920 = vmatpush.msra.mxu0 %v695
        %921 = vmatpush.msra.mxu0 %v691
        %922 = vmatpush.msra.mxu0 %v687
        %923 = vmatpush.msra.mxu0 %v683
        %924 = vmatpush.msra.mxu0 %v679
        %925 = vmatpush.msra.mxu0 %v675
        %926 = vmatpush.msra.mxu0 %v671
        %927 = vmatpush.msra.mxu0 %v667
        %928 = vmatpush.msra.mxu0 %v663
        %929 = vmatpush.msra.mxu0 %v659
        %930 = vmatpush.msra.mxu0 %v655
        %931 = vmatmul.f32.gmra.mxu0 %v782
        %v932 = vpop.f32.mrf.mxu0
        %v933 = vadd.f32 %v790, %v932
        %934 = vdwg.mxu0
        %935 = vmatpush.msra.mxu0 %v779
        %936 = vmatpush.msra.mxu0 %v775
        %937 = vmatpush.msra.mxu0 %v771
        %938 = vmatpush.msra.mxu0 %v767
        %939 = vmatpush.msra.mxu0 %v763
        %940 = vmatpush.msra.mxu0 %v759
        %941 = vmatpush.msra.mxu0 %v755
        %942 = vmatpush.msra.mxu0 %v751
        %943 = vmatpush.msra.mxu0 %v747
        %944 = vmatpush.msra.mxu0 %v743
        %945 = vmatpush.msra.mxu0 %v739
        %946 = vmatpush.msra.mxu0 %v735
        %947 = vmatpush.msra.mxu0 %v731
        %948 = vmatpush.msra.mxu0 %v727
        %949 = vmatpush.msra.mxu0 %v723
        %950 = vmatpush.msra.mxu0 %v719
        %951 = vmatmul.f32.gmra.mxu0 %v783
        %v952 = vpop.f32.mrf.mxu0
        %v953 = vadd.f32 %v933, %v952
        %954 = vdwg.mxu0
        %v955 = vmax.f32 %v833, 0.0
        %v956 = vmax.f32 %v873, 0.0
        %v957 = vmax.f32 %v913, 0.0
        %v958 = vmax.f32 %v953, 0.0
        %v959 = vld [vmem:[#allocation6] sm:$0xff]
        %v960 = vld [vmem:[#allocation6 + $0x8] sm:$0xff]
        %v961 = vld [vmem:[#allocation6 + $0x10] sm:$0xff]
        %v962 = vld [vmem:[#allocation6 + $0x18] sm:$0xff]
        %v963 = vld [vmem:[#allocation6 + $0x20] sm:$0xff]
        %v964 = vld [vmem:[#allocation6 + $0x28] sm:$0xff]
        %v965 = vld [vmem:[#allocation6 + $0x30] sm:$0xff]
        %v966 = vld [vmem:[#allocation6 + $0x38] sm:$0xff]
        %v967 = vld [vmem:[#allocation6 + $0x40] sm:$0xff]
        %v968 = vld [vmem:[#allocation6 + $0x48] sm:$0xff]
        %v969 = vld [vmem:[#allocation6 + $0x50] sm:$0xff]
        %v970 = vld [vmem:[#allocation6 + $0x58] sm:$0xff]
        %v971 = vld [vmem:[#allocation6 + $0x60] sm:$0xff]
        %v972 = vld [vmem:[#allocation6 + $0x68] sm:$0xff]
        %v973 = vld [vmem:[#allocation6 + $0x70] sm:$0xff]
        %v974 = vld [vmem:[#allocation6 + $0x78] sm:$0xff]
        %v975 = vld [vmem:[#allocation6 + $0x80] sm:$0xff]
        %v976 = vld [vmem:[#allocation6 + $0x88] sm:$0xff]
        %v977 = vld [vmem:[#allocation6 + $0x90] sm:$0xff]
        %v978 = vld [vmem:[#allocation6 + $0x98] sm:$0xff]
        %v979 = vld [vmem:[#allocation6 + $0xa0] sm:$0xff]
        %v980 = vld [vmem:[#allocation6 + $0xa8] sm:$0xff]
        %v981 = vld [vmem:[#allocation6 + $0xb0] sm:$0xff]
        %v982 = vld [vmem:[#allocation6 + $0xb8] sm:$0xff]
        %v983 = vld [vmem:[#allocation6 + $0xc0] sm:$0xff]
        %v984 = vld [vmem:[#allocation6 + $0xc8] sm:$0xff]
        %v985 = vld [vmem:[#allocation6 + $0xd0] sm:$0xff]
        %v986 = vld [vmem:[#allocation6 + $0xd8] sm:$0xff]
        %v987 = vld [vmem:[#allocation6 + $0xe0] sm:$0xff]
        %v988 = vld [vmem:[#allocation6 + $0xe8] sm:$0xff]
        %v989 = vld [vmem:[#allocation6 + $0xf0] sm:$0xff]
        %v990 = vld [vmem:[#allocation6 + $0xf8] sm:$0xff]
        %v991 = vld [vmem:[#allocation6 + $0x100] sm:$0xff]
        %v992 = vld [vmem:[#allocation6 + $0x108] sm:$0xff]
        %v993 = vld [vmem:[#allocation6 + $0x110] sm:$0xff]
        %v994 = vld [vmem:[#allocation6 + $0x118] sm:$0xff]
        %v995 = vld [vmem:[#allocation6 + $0x120] sm:$0xff]
        %v996 = vld [vmem:[#allocation6 + $0x128] sm:$0xff]
        %v997 = vld [vmem:[#allocation6 + $0x130] sm:$0xff]
        %v998 = vld [vmem:[#allocation6 + $0x138] sm:$0xff]
        %v999 = vld [vmem:[#allocation6 + $0x140] sm:$0xff]
        %v1000 = vld [vmem:[#allocation6 + $0x148] sm:$0xff]
        %v1001 = vld [vmem:[#allocation6 + $0x150] sm:$0xff]
        %v1002 = vld [vmem:[#allocation6 + $0x158] sm:$0xff]
        %v1003 = vld [vmem:[#allocation6 + $0x160] sm:$0xff]
        %v1004 = vld [vmem:[#allocation6 + $0x168] sm:$0xff]
        %v1005 = vld [vmem:[#allocation6 + $0x170] sm:$0xff]
        %v1006 = vld [vmem:[#allocation6 + $0x178] sm:$0xff]
        %v1007 = vld [vmem:[#allocation6 + $0x180] sm:$0xff]
        %v1008 = vld [vmem:[#allocation6 + $0x188] sm:$0xff]
        %v1009 = vld [vmem:[#allocation6 + $0x190] sm:$0xff]
        %v1010 = vld [vmem:[#allocation6 + $0x198] sm:$0xff]
        %v1011 = vld [vmem:[#allocation6 + $0x1a0] sm:$0xff]
        %v1012 = vld [vmem:[#allocation6 + $0x1a8] sm:$0xff]
        %v1013 = vld [vmem:[#allocation6 + $0x1b0] sm:$0xff]
        %v1014 = vld [vmem:[#allocation6 + $0x1b8] sm:$0xff]
        %v1015 = vld [vmem:[#allocation6 + $0x1c0] sm:$0xff]
        %v1016 = vld [vmem:[#allocation6 + $0x1c8] sm:$0xff]
        %v1017 = vld [vmem:[#allocation6 + $0x1d0] sm:$0xff]
        %v1018 = vld [vmem:[#allocation6 + $0x1d8] sm:$0xff]
        %v1019 = vld [vmem:[#allocation6 + $0x1e0] sm:$0xff]
        %v1020 = vld [vmem:[#allocation6 + $0x1e8] sm:$0xff]
        %v1021 = vld [vmem:[#allocation6 + $0x1f0] sm:$0xff]
        %v1022 = vld [vmem:[#allocation6 + $0x1f8] sm:$0xff]
        %v1023 = vld [vmem:[#allocation6 + $0x200] sm:$0xff]
        %v1024 = vld [vmem:[#allocation6 + $0x208] sm:$0xff]
        %v1025 = vld [vmem:[#allocation6 + $0x210] sm:$0xff]
        %v1026 = vld [vmem:[#allocation6 + $0x218] sm:$0xff]
        %v1027 = vld [vmem:[#allocation6 + $0x220] sm:$0xff]
        %v1028 = vld [vmem:[#allocation6 + $0x228] sm:$0xff]
        %v1029 = vld [vmem:[#allocation6 + $0x230] sm:$0xff]
        %v1030 = vld [vmem:[#allocation6 + $0x238] sm:$0xff]
        %v1031 = vld [vmem:[#allocation6 + $0x240] sm:$0xff]
        %v1032 = vld [vmem:[#allocation6 + $0x248] sm:$0xff]
        %v1033 = vld [vmem:[#allocation6 + $0x250] sm:$0xff]
        %v1034 = vld [vmem:[#allocation6 + $0x258] sm:$0xff]
        %v1035 = vld [vmem:[#allocation6 + $0x260] sm:$0xff]
        %v1036 = vld [vmem:[#allocation6 + $0x268] sm:$0xff]
        %v1037 = vld [vmem:[#allocation6 + $0x270] sm:$0xff]
        %v1038 = vld [vmem:[#allocation6 + $0x278] sm:$0xff]
        %v1039 = vld [vmem:[#allocation6 + $0x280] sm:$0xff]
        %v1040 = vld [vmem:[#allocation6 + $0x288] sm:$0xff]
        %v1041 = vld [vmem:[#allocation6 + $0x290] sm:$0xff]
        %v1042 = vld [vmem:[#allocation6 + $0x298] sm:$0xff]
        %v1043 = vld [vmem:[#allocation6 + $0x2a0] sm:$0xff]
        %v1044 = vld [vmem:[#allocation6 + $0x2a8] sm:$0xff]
        %v1045 = vld [vmem:[#allocation6 + $0x2b0] sm:$0xff]
        %v1046 = vld [vmem:[#allocation6 + $0x2b8] sm:$0xff]
        %v1047 = vld [vmem:[#allocation6 + $0x2c0] sm:$0xff]
        %v1048 = vld [vmem:[#allocation6 + $0x2c8] sm:$0xff]
        %v1049 = vld [vmem:[#allocation6 + $0x2d0] sm:$0xff]
        %v1050 = vld [vmem:[#allocation6 + $0x2d8] sm:$0xff]
        %v1051 = vld [vmem:[#allocation6 + $0x2e0] sm:$0xff]
        %v1052 = vld [vmem:[#allocation6 + $0x2e8] sm:$0xff]
        %v1053 = vld [vmem:[#allocation6 + $0x2f0] sm:$0xff]
        %v1054 = vld [vmem:[#allocation6 + $0x2f8] sm:$0xff]
        %v1055 = vld [vmem:[#allocation6 + $0x300] sm:$0xff]
        %v1056 = vld [vmem:[#allocation6 + $0x308] sm:$0xff]
        %v1057 = vld [vmem:[#allocation6 + $0x310] sm:$0xff]
        %v1058 = vld [vmem:[#allocation6 + $0x318] sm:$0xff]
        %v1059 = vld [vmem:[#allocation6 + $0x320] sm:$0xff]
        %v1060 = vld [vmem:[#allocation6 + $0x328] sm:$0xff]
        %v1061 = vld [vmem:[#allocation6 + $0x330] sm:$0xff]
        %v1062 = vld [vmem:[#allocation6 + $0x338] sm:$0xff]
        %v1063 = vld [vmem:[#allocation6 + $0x340] sm:$0xff]
        %v1064 = vld [vmem:[#allocation6 + $0x348] sm:$0xff]
        %v1065 = vld [vmem:[#allocation6 + $0x350] sm:$0xff]
        %v1066 = vld [vmem:[#allocation6 + $0x358] sm:$0xff]
        %v1067 = vld [vmem:[#allocation6 + $0x360] sm:$0xff]
        %v1068 = vld [vmem:[#allocation6 + $0x368] sm:$0xff]
        %v1069 = vld [vmem:[#allocation6 + $0x370] sm:$0xff]
        %v1070 = vld [vmem:[#allocation6 + $0x378] sm:$0xff]
        %v1071 = vld [vmem:[#allocation6 + $0x380] sm:$0xff]
        %v1072 = vld [vmem:[#allocation6 + $0x388] sm:$0xff]
        %v1073 = vld [vmem:[#allocation6 + $0x390] sm:$0xff]
        %v1074 = vld [vmem:[#allocation6 + $0x398] sm:$0xff]
        %v1075 = vld [vmem:[#allocation6 + $0x3a0] sm:$0xff]
        %v1076 = vld [vmem:[#allocation6 + $0x3a8] sm:$0xff]
        %v1077 = vld [vmem:[#allocation6 + $0x3b0] sm:$0xff]
        %v1078 = vld [vmem:[#allocation6 + $0x3b8] sm:$0xff]
        %v1079 = vld [vmem:[#allocation6 + $0x3c0] sm:$0xff]
        %v1080 = vld [vmem:[#allocation6 + $0x3c8] sm:$0xff]
        %v1081 = vld [vmem:[#allocation6 + $0x3d0] sm:$0xff]
        %v1082 = vld [vmem:[#allocation6 + $0x3d8] sm:$0xff]
        %v1083 = vld [vmem:[#allocation6 + $0x3e0] sm:$0xff]
        %v1084 = vld [vmem:[#allocation6 + $0x3e8] sm:$0xff]
        %v1085 = vld [vmem:[#allocation6 + $0x3f0] sm:$0xff]
        %v1086 = vld [vmem:[#allocation6 + $0x3f8] sm:$0xff]
        %v1087 = vld [vmem:[#allocation6 + $0x400] sm:$0xff]
        %v1088 = vld [vmem:[#allocation6 + $0x408] sm:$0xff]
        %v1089 = vld [vmem:[#allocation6 + $0x410] sm:$0xff]
        %v1090 = vld [vmem:[#allocation6 + $0x418] sm:$0xff]
        %v1091 = vld [vmem:[#allocation6 + $0x420] sm:$0xff]
        %v1092 = vld [vmem:[#allocation6 + $0x428] sm:$0xff]
        %v1093 = vld [vmem:[#allocation6 + $0x430] sm:$0xff]
        %v1094 = vld [vmem:[#allocation6 + $0x438] sm:$0xff]
        %v1095 = vld [vmem:[#allocation6 + $0x440] sm:$0xff]
        %v1096 = vld [vmem:[#allocation6 + $0x448] sm:$0xff]
        %v1097 = vld [vmem:[#allocation6 + $0x450] sm:$0xff]
        %v1098 = vld [vmem:[#allocation6 + $0x458] sm:$0xff]
        %v1099 = vld [vmem:[#allocation6 + $0x460] sm:$0xff]
        %v1100 = vld [vmem:[#allocation6 + $0x468] sm:$0xff]
        %v1101 = vld [vmem:[#allocation6 + $0x470] sm:$0xff]
        %v1102 = vld [vmem:[#allocation6 + $0x478] sm:$0xff]
        %v1103 = vld [vmem:[#allocation6 + $0x480] sm:$0xff]
        %v1104 = vld [vmem:[#allocation6 + $0x488] sm:$0xff]
        %v1105 = vld [vmem:[#allocation6 + $0x490] sm:$0xff]
        %v1106 = vld [vmem:[#allocation6 + $0x498] sm:$0xff]
        %v1107 = vld [vmem:[#allocation6 + $0x4a0] sm:$0xff]
        %v1108 = vld [vmem:[#allocation6 + $0x4a8] sm:$0xff]
        %v1109 = vld [vmem:[#allocation6 + $0x4b0] sm:$0xff]
        %v1110 = vld [vmem:[#allocation6 + $0x4b8] sm:$0xff]
        %v1111 = vld [vmem:[#allocation6 + $0x4c0] sm:$0xff]
        %v1112 = vld [vmem:[#allocation6 + $0x4c8] sm:$0xff]
        %v1113 = vld [vmem:[#allocation6 + $0x4d0] sm:$0xff]
        %v1114 = vld [vmem:[#allocation6 + $0x4d8] sm:$0xff]
        %v1115 = vld [vmem:[#allocation6 + $0x4e0] sm:$0xff]
        %v1116 = vld [vmem:[#allocation6 + $0x4e8] sm:$0xff]
        %v1117 = vld [vmem:[#allocation6 + $0x4f0] sm:$0xff]
        %v1118 = vld [vmem:[#allocation6 + $0x4f8] sm:$0xff]
        %v1119 = vld [vmem:[#allocation6 + $0x500] sm:$0xff]
        %v1120 = vld [vmem:[#allocation6 + $0x508] sm:$0xff]
        %v1121 = vld [vmem:[#allocation6 + $0x510] sm:$0xff]
        %v1122 = vld [vmem:[#allocation6 + $0x518] sm:$0xff]
        %v1123 = vld [vmem:[#allocation6 + $0x520] sm:$0xff]
        %v1124 = vld [vmem:[#allocation6 + $0x528] sm:$0xff]
        %v1125 = vld [vmem:[#allocation6 + $0x530] sm:$0xff]
        %v1126 = vld [vmem:[#allocation6 + $0x538] sm:$0xff]
        %v1127 = vld [vmem:[#allocation6 + $0x540] sm:$0xff]
        %v1128 = vld [vmem:[#allocation6 + $0x548] sm:$0xff]
        %v1129 = vld [vmem:[#allocation6 + $0x550] sm:$0xff]
        %v1130 = vld [vmem:[#allocation6 + $0x558] sm:$0xff]
        %v1131 = vld [vmem:[#allocation6 + $0x560] sm:$0xff]
        %v1132 = vld [vmem:[#allocation6 + $0x568] sm:$0xff]
        %v1133 = vld [vmem:[#allocation6 + $0x570] sm:$0xff]
        %v1134 = vld [vmem:[#allocation6 + $0x578] sm:$0xff]
        %v1135 = vld [vmem:[#allocation6 + $0x580] sm:$0xff]
        %v1136 = vld [vmem:[#allocation6 + $0x588] sm:$0xff]
        %v1137 = vld [vmem:[#allocation6 + $0x590] sm:$0xff]
        %v1138 = vld [vmem:[#allocation6 + $0x598] sm:$0xff]
        %v1139 = vld [vmem:[#allocation6 + $0x5a0] sm:$0xff]
        %v1140 = vld [vmem:[#allocation6 + $0x5a8] sm:$0xff]
        %v1141 = vld [vmem:[#allocation6 + $0x5b0] sm:$0xff]
        %v1142 = vld [vmem:[#allocation6 + $0x5b8] sm:$0xff]
        %v1143 = vld [vmem:[#allocation6 + $0x5c0] sm:$0xff]
        %v1144 = vld [vmem:[#allocation6 + $0x5c8] sm:$0xff]
        %v1145 = vld [vmem:[#allocation6 + $0x5d0] sm:$0xff]
        %v1146 = vld [vmem:[#allocation6 + $0x5d8] sm:$0xff]
        %v1147 = vld [vmem:[#allocation6 + $0x5e0] sm:$0xff]
        %v1148 = vld [vmem:[#allocation6 + $0x5e8] sm:$0xff]
        %v1149 = vld [vmem:[#allocation6 + $0x5f0] sm:$0xff]
        %v1150 = vld [vmem:[#allocation6 + $0x5f8] sm:$0xff]
        %v1151 = vld [vmem:[#allocation6 + $0x600] sm:$0xff]
        %v1152 = vld [vmem:[#allocation6 + $0x608] sm:$0xff]
        %v1153 = vld [vmem:[#allocation6 + $0x610] sm:$0xff]
        %v1154 = vld [vmem:[#allocation6 + $0x618] sm:$0xff]
        %v1155 = vld [vmem:[#allocation6 + $0x620] sm:$0xff]
        %v1156 = vld [vmem:[#allocation6 + $0x628] sm:$0xff]
        %v1157 = vld [vmem:[#allocation6 + $0x630] sm:$0xff]
        %v1158 = vld [vmem:[#allocation6 + $0x638] sm:$0xff]
        %v1159 = vld [vmem:[#allocation6 + $0x640] sm:$0xff]
        %v1160 = vld [vmem:[#allocation6 + $0x648] sm:$0xff]
        %v1161 = vld [vmem:[#allocation6 + $0x650] sm:$0xff]
        %v1162 = vld [vmem:[#allocation6 + $0x658] sm:$0xff]
        %v1163 = vld [vmem:[#allocation6 + $0x660] sm:$0xff]
        %v1164 = vld [vmem:[#allocation6 + $0x668] sm:$0xff]
        %v1165 = vld [vmem:[#allocation6 + $0x670] sm:$0xff]
        %v1166 = vld [vmem:[#allocation6 + $0x678] sm:$0xff]
        %v1167 = vld [vmem:[#allocation6 + $0x680] sm:$0xff]
        %v1168 = vld [vmem:[#allocation6 + $0x688] sm:$0xff]
        %v1169 = vld [vmem:[#allocation6 + $0x690] sm:$0xff]
        %v1170 = vld [vmem:[#allocation6 + $0x698] sm:$0xff]
        %v1171 = vld [vmem:[#allocation6 + $0x6a0] sm:$0xff]
        %v1172 = vld [vmem:[#allocation6 + $0x6a8] sm:$0xff]
        %v1173 = vld [vmem:[#allocation6 + $0x6b0] sm:$0xff]
        %v1174 = vld [vmem:[#allocation6 + $0x6b8] sm:$0xff]
        %v1175 = vld [vmem:[#allocation6 + $0x6c0] sm:$0xff]
        %v1176 = vld [vmem:[#allocation6 + $0x6c8] sm:$0xff]
        %v1177 = vld [vmem:[#allocation6 + $0x6d0] sm:$0xff]
        %v1178 = vld [vmem:[#allocation6 + $0x6d8] sm:$0xff]
        %v1179 = vld [vmem:[#allocation6 + $0x6e0] sm:$0xff]
        %v1180 = vld [vmem:[#allocation6 + $0x6e8] sm:$0xff]
        %v1181 = vld [vmem:[#allocation6 + $0x6f0] sm:$0xff]
        %v1182 = vld [vmem:[#allocation6 + $0x6f8] sm:$0xff]
        %v1183 = vld [vmem:[#allocation6 + $0x700] sm:$0xff]
        %v1184 = vld [vmem:[#allocation6 + $0x708] sm:$0xff]
        %v1185 = vld [vmem:[#allocation6 + $0x710] sm:$0xff]
        %v1186 = vld [vmem:[#allocation6 + $0x718] sm:$0xff]
        %v1187 = vld [vmem:[#allocation6 + $0x720] sm:$0xff]
        %v1188 = vld [vmem:[#allocation6 + $0x728] sm:$0xff]
        %v1189 = vld [vmem:[#allocation6 + $0x730] sm:$0xff]
        %v1190 = vld [vmem:[#allocation6 + $0x738] sm:$0xff]
        %v1191 = vld [vmem:[#allocation6 + $0x740] sm:$0xff]
        %v1192 = vld [vmem:[#allocation6 + $0x748] sm:$0xff]
        %v1193 = vld [vmem:[#allocation6 + $0x750] sm:$0xff]
        %v1194 = vld [vmem:[#allocation6 + $0x758] sm:$0xff]
        %v1195 = vld [vmem:[#allocation6 + $0x760] sm:$0xff]
        %v1196 = vld [vmem:[#allocation6 + $0x768] sm:$0xff]
        %v1197 = vld [vmem:[#allocation6 + $0x770] sm:$0xff]
        %v1198 = vld [vmem:[#allocation6 + $0x778] sm:$0xff]
        %v1199 = vld [vmem:[#allocation6 + $0x780] sm:$0xff]
        %v1200 = vld [vmem:[#allocation6 + $0x788] sm:$0xff]
        %v1201 = vld [vmem:[#allocation6 + $0x790] sm:$0xff]
        %v1202 = vld [vmem:[#allocation6 + $0x798] sm:$0xff]
        %v1203 = vld [vmem:[#allocation6 + $0x7a0] sm:$0xff]
        %v1204 = vld [vmem:[#allocation6 + $0x7a8] sm:$0xff]
        %v1205 = vld [vmem:[#allocation6 + $0x7b0] sm:$0xff]
        %v1206 = vld [vmem:[#allocation6 + $0x7b8] sm:$0xff]
        %v1207 = vld [vmem:[#allocation6 + $0x7c0] sm:$0xff]
        %v1208 = vld [vmem:[#allocation6 + $0x7c8] sm:$0xff]
        %v1209 = vld [vmem:[#allocation6 + $0x7d0] sm:$0xff]
        %v1210 = vld [vmem:[#allocation6 + $0x7d8] sm:$0xff]
        %v1211 = vld [vmem:[#allocation6 + $0x7e0] sm:$0xff]
        %v1212 = vld [vmem:[#allocation6 + $0x7e8] sm:$0xff]
        %v1213 = vld [vmem:[#allocation6 + $0x7f0] sm:$0xff]
        %v1214 = vld [vmem:[#allocation6 + $0x7f8] sm:$0xff]
        %v1215 = vld [vmem:[%s4] sm:$0xf]
        %v1217 = vperm.slane %v1215, 0
        %v1218 = vperm.slane %v1215, 1
        %v1219 = vperm.slane %v1215, 2
        %v1220 = vperm.slane %v1215, 3
        %1225 = vmatpush.msra.mxu0 %v1019
        %1226 = vmatpush.msra.mxu0 %v1015
        %1227 = vmatpush.msra.mxu0 %v1011
        %1228 = vmatpush.msra.mxu0 %v1007
        %1229 = vmatpush.msra.mxu0 %v1003
        %1230 = vmatpush.msra.mxu0 %v999
        %1231 = vmatpush.msra.mxu0 %v995
        %1232 = vmatpush.msra.mxu0 %v991
        %1233 = vmatpush.msra.mxu0 %v987
        %1234 = vmatpush.msra.mxu0 %v983
        %1235 = vmatpush.msra.mxu0 %v979
        %1236 = vmatpush.msra.mxu0 %v975
        %1237 = vmatpush.msra.mxu0 %v971
        %1238 = vmatpush.msra.mxu0 %v967
        %1239 = vmatpush.msra.mxu0 %v963
        %1240 = vmatpush.msra.mxu0 %v959
        %1241 = vmatmul.f32.gmra.mxu0 %v955
        %v1242 = vpop.f32.mrf.mxu0
        %v1243 = vadd.f32 %v1217, %v1242
        %1244 = vdwg.mxu0
        %1245 = vmatpush.msra.mxu0 %v1083
        %1246 = vmatpush.msra.mxu0 %v1079
        %1247 = vmatpush.msra.mxu0 %v1075
        %1248 = vmatpush.msra.mxu0 %v1071
        %1249 = vmatpush.msra.mxu0 %v1067
        %1250 = vmatpush.msra.mxu0 %v1063
        %1251 = vmatpush.msra.mxu0 %v1059
        %1252 = vmatpush.msra.mxu0 %v1055
        %1253 = vmatpush.msra.mxu0 %v1051
        %1254 = vmatpush.msra.mxu0 %v1047
        %1255 = vmatpush.msra.mxu0 %v1043
        %1256 = vmatpush.msra.mxu0 %v1039
        %1257 = vmatpush.msra.mxu0 %v1035
        %1258 = vmatpush.msra.mxu0 %v1031
        %1259 = vmatpush.msra.mxu0 %v1027
        %1260 = vmatpush.msra.mxu0 %v1023
        %1261 = vmatmul.f32.gmra.mxu0 %v956
        %v1262 = vpop.f32.mrf.mxu0
        %v1263 = vadd.f32 %v1243, %v1262
        %1264 = vdwg.mxu0
        %1265 = vmatpush.msra.mxu0 %v1147
        %1266 = vmatpush.msra.mxu0 %v1143
        %1267 = vmatpush.msra.mxu0 %v1139
        %1268 = vmatpush.msra.mxu0 %v1135
        %1269 = vmatpush.msra.mxu0 %v1131
        %1270 = vmatpush.msra.mxu0 %v1127
        %1271 = vmatpush.msra.mxu0 %v1123
        %1272 = vmatpush.msra.mxu0 %v1119
        %1273 = vmatpush.msra.mxu0 %v1115
        %1274 = vmatpush.msra.mxu0 %v1111
        %1275 = vmatpush.msra.mxu0 %v1107
        %1276 = vmatpush.msra.mxu0 %v1103
        %1277 = vmatpush.msra.mxu0 %v1099
        %1278 = vmatpush.msra.mxu0 %v1095
        %1279 = vmatpush.msra.mxu0 %v1091
        %1280 = vmatpush.msra.mxu0 %v1087
        %1281 = vmatmul.f32.gmra.mxu0 %v957
        %v1282 = vpop.f32.mrf.mxu0
        %v1283 = vadd.f32 %v1263, %v1282
        %1284 = vdwg.mxu0
        %1285 = vmatpush.msra.mxu0 %v1211
        %1286 = vmatpush.msra.mxu0 %v1207
        %1287 = vmatpush.msra.mxu0 %v1203
        %1288 = vmatpush.msra.mxu0 %v1199
        %1289 = vmatpush.msra.mxu0 %v1195
        %1290 = vmatpush.msra.mxu0 %v1191
        %1291 = vmatpush.msra.mxu0 %v1187
        %1292 = vmatpush.msra.mxu0 %v1183
        %1293 = vmatpush.msra.mxu0 %v1179
        %1294 = vmatpush.msra.mxu0 %v1175
        %1295 = vmatpush.msra.mxu0 %v1171
        %1296 = vmatpush.msra.mxu0 %v1167
        %1297 = vmatpush.msra.mxu0 %v1163
        %1298 = vmatpush.msra.mxu0 %v1159
        %1299 = vmatpush.msra.mxu0 %v1155
        %1300 = vmatpush.msra.mxu0 %v1151
        %1301 = vmatmul.f32.gmra.mxu0 %v958
        %v1302 = vpop.f32.mrf.mxu0
        %v1303 = vadd.f32 %v1283, %v1302
        %1304 = vdwg.mxu0
        %1305 = vmatpush.msra.mxu0 %v1020
        %1306 = vmatpush.msra.mxu0 %v1016
        %1307 = vmatpush.msra.mxu0 %v1012
        %1308 = vmatpush.msra.mxu0 %v1008
        %1309 = vmatpush.msra.mxu0 %v1004
        %1310 = vmatpush.msra.mxu0 %v1000
        %1311 = vmatpush.msra.mxu0 %v996
        %1312 = vmatpush.msra.mxu0 %v992
        %1313 = vmatpush.msra.mxu0 %v988
        %1314 = vmatpush.msra.mxu0 %v984
        %1315 = vmatpush.msra.mxu0 %v980
        %1316 = vmatpush.msra.mxu0 %v976
        %1317 = vmatpush.msra.mxu0 %v972
        %1318 = vmatpush.msra.mxu0 %v968
        %1319 = vmatpush.msra.mxu0 %v964
        %1320 = vmatpush.msra.mxu0 %v960
        %1321 = vmatmul.f32.gmra.mxu0 %v955
        %v1322 = vpop.f32.mrf.mxu0
        %v1323 = vadd.f32 %v1218, %v1322
        %1324 = vdwg.mxu0
        %1325 = vmatpush.msra.mxu0 %v1084
        %1326 = vmatpush.msra.mxu0 %v1080
        %1327 = vmatpush.msra.mxu0 %v1076
        %1328 = vmatpush.msra.mxu0 %v1072
        %1329 = vmatpush.msra.mxu0 %v1068
        %1330 = vmatpush.msra.mxu0 %v1064
        %1331 = vmatpush.msra.mxu0 %v1060
        %1332 = vmatpush.msra.mxu0 %v1056
        %1333 = vmatpush.msra.mxu0 %v1052
        %1334 = vmatpush.msra.mxu0 %v1048
        %1335 = vmatpush.msra.mxu0 %v1044
        %1336 = vmatpush.msra.mxu0 %v1040
        %1337 = vmatpush.msra.mxu0 %v1036
        %1338 = vmatpush.msra.mxu0 %v1032
        %1339 = vmatpush.msra.mxu0 %v1028
        %1340 = vmatpush.msra.mxu0 %v1024
        %1341 = vmatmul.f32.gmra.mxu0 %v956
        %v1342 = vpop.f32.mrf.mxu0
        %v1343 = vadd.f32 %v1323, %v1342
        %1344 = vdwg.mxu0
        %1345 = vmatpush.msra.mxu0 %v1148
        %1346 = vmatpush.msra.mxu0 %v1144
        %1347 = vmatpush.msra.mxu0 %v1140
        %1348 = vmatpush.msra.mxu0 %v1136
        %1349 = vmatpush.msra.mxu0 %v1132
        %1350 = vmatpush.msra.mxu0 %v1128
        %1351 = vmatpush.msra.mxu0 %v1124
        %1352 = vmatpush.msra.mxu0 %v1120
        %1353 = vmatpush.msra.mxu0 %v1116
        %1354 = vmatpush.msra.mxu0 %v1112
        %1355 = vmatpush.msra.mxu0 %v1108
        %1356 = vmatpush.msra.mxu0 %v1104
        %1357 = vmatpush.msra.mxu0 %v1100
        %1358 = vmatpush.msra.mxu0 %v1096
        %1359 = vmatpush.msra.mxu0 %v1092
        %1360 = vmatpush.msra.mxu0 %v1088
        %1361 = vmatmul.f32.gmra.mxu0 %v957
        %v1362 = vpop.f32.mrf.mxu0
        %v1363 = vadd.f32 %v1343, %v1362
        %1364 = vdwg.mxu0
        %1365 = vmatpush.msra.mxu0 %v1212
        %1366 = vmatpush.msra.mxu0 %v1208
        %1367 = vmatpush.msra.mxu0 %v1204
        %1368 = vmatpush.msra.mxu0 %v1200
        %1369 = vmatpush.msra.mxu0 %v1196
        %1370 = vmatpush.msra.mxu0 %v1192
        %1371 = vmatpush.msra.mxu0 %v1188
        %1372 = vmatpush.msra.mxu0 %v1184
        %1373 = vmatpush.msra.mxu0 %v1180
        %1374 = vmatpush.msra.mxu0 %v1176
        %1375 = vmatpush.msra.mxu0 %v1172
        %1376 = vmatpush.msra.mxu0 %v1168
        %1377 = vmatpush.msra.mxu0 %v1164
        %1378 = vmatpush.msra.mxu0 %v1160
        %1379 = vmatpush.msra.mxu0 %v1156
        %1380 = vmatpush.msra.mxu0 %v1152
        %1381 = vmatmul.f32.gmra.mxu0 %v958
        %v1382 = vpop.f32.mrf.mxu0
        %v1383 = vadd.f32 %v1363, %v1382
        %1384 = vdwg.mxu0
        %1385 = vmatpush.msra.mxu0 %v1021
        %1386 = vmatpush.msra.mxu0 %v1017
        %1387 = vmatpush.msra.mxu0 %v1013
        %1388 = vmatpush.msra.mxu0 %v1009
        %1389 = vmatpush.msra.mxu0 %v1005
        %1390 = vmatpush.msra.mxu0 %v1001
        %1391 = vmatpush.msra.mxu0 %v997
        %1392 = vmatpush.msra.mxu0 %v993
        %1393 = vmatpush.msra.mxu0 %v989
        %1394 = vmatpush.msra.mxu0 %v985
        %1395 = vmatpush.msra.mxu0 %v981
        %1396 = vmatpush.msra.mxu0 %v977
        %1397 = vmatpush.msra.mxu0 %v973
        %1398 = vmatpush.msra.mxu0 %v969
        %1399 = vmatpush.msra.mxu0 %v965
        %1400 = vmatpush.msra.mxu0 %v961
        %1401 = vmatmul.f32.gmra.mxu0 %v955
        %v1402 = vpop.f32.mrf.mxu0
        %v1403 = vadd.f32 %v1219, %v1402
        %1404 = vdwg.mxu0
        %1405 = vmatpush.msra.mxu0 %v1085
        %1406 = vmatpush.msra.mxu0 %v1081
        %1407 = vmatpush.msra.mxu0 %v1077
        %1408 = vmatpush.msra.mxu0 %v1073
        %1409 = vmatpush.msra.mxu0 %v1069
        %1410 = vmatpush.msra.mxu0 %v1065
        %1411 = vmatpush.msra.mxu0 %v1061
        %1412 = vmatpush.msra.mxu0 %v1057
        %1413 = vmatpush.msra.mxu0 %v1053
        %1414 = vmatpush.msra.mxu0 %v1049
        %1415 = vmatpush.msra.mxu0 %v1045
        %1416 = vmatpush.msra.mxu0 %v1041
        %1417 = vmatpush.msra.mxu0 %v1037
        %1418 = vmatpush.msra.mxu0 %v1033
        %1419 = vmatpush.msra.mxu0 %v1029
        %1420 = vmatpush.msra.mxu0 %v1025
        %1421 = vmatmul.f32.gmra.mxu0 %v956
        %v1422 = vpop.f32.mrf.mxu0
        %v1423 = vadd.f32 %v1403, %v1422
        %1424 = vdwg.mxu0
        %1425 = vmatpush.msra.mxu0 %v1149
        %1426 = vmatpush.msra.mxu0 %v1145
        %1427 = vmatpush.msra.mxu0 %v1141
        %1428 = vmatpush.msra.mxu0 %v1137
        %1429 = vmatpush.msra.mxu0 %v1133
        %1430 = vmatpush.msra.mxu0 %v1129
        %1431 = vmatpush.msra.mxu0 %v1125
        %1432 = vmatpush.msra.mxu0 %v1121
        %1433 = vmatpush.msra.mxu0 %v1117
        %1434 = vmatpush.msra.mxu0 %v1113
        %1435 = vmatpush.msra.mxu0 %v1109
        %1436 = vmatpush.msra.mxu0 %v1105
        %1437 = vmatpush.msra.mxu0 %v1101
        %1438 = vmatpush.msra.mxu0 %v1097
        %1439 = vmatpush.msra.mxu0 %v1093
        %1440 = vmatpush.msra.mxu0 %v1089
        %1441 = vmatmul.f32.gmra.mxu0 %v957
        %v1442 = vpop.f32.mrf.mxu0
        %v1443 = vadd.f32 %v1423, %v1442
        %1444 = vdwg.mxu0
        %1445 = vmatpush.msra.mxu0 %v1213
        %1446 = vmatpush.msra.mxu0 %v1209
        %1447 = vmatpush.msra.mxu0 %v1205
        %1448 = vmatpush.msra.mxu0 %v1201
        %1449 = vmatpush.msra.mxu0 %v1197
        %1450 = vmatpush.msra.mxu0 %v1193
        %1451 = vmatpush.msra.mxu0 %v1189
        %1452 = vmatpush.msra.mxu0 %v1185
        %1453 = vmatpush.msra.mxu0 %v1181
        %1454 = vmatpush.msra.mxu0 %v1177
        %1455 = vmatpush.msra.mxu0 %v1173
        %1456 = vmatpush.msra.mxu0 %v1169
        %1457 = vmatpush.msra.mxu0 %v1165
        %1458 = vmatpush.msra.mxu0 %v1161
        %1459 = vmatpush.msra.mxu0 %v1157
        %1460 = vmatpush.msra.mxu0 %v1153
        %1461 = vmatmul.f32.gmra.mxu0 %v958
        %v1462 = vpop.f32.mrf.mxu0
        %v1463 = vadd.f32 %v1443, %v1462
        %1464 = vdwg.mxu0
        %1465 = vmatpush.msra.mxu0 %v1022
        %1466 = vmatpush.msra.mxu0 %v1018
        %1467 = vmatpush.msra.mxu0 %v1014
        %1468 = vmatpush.msra.mxu0 %v1010
        %1469 = vmatpush.msra.mxu0 %v1006
        %1470 = vmatpush.msra.mxu0 %v1002
        %1471 = vmatpush.msra.mxu0 %v998
        %1472 = vmatpush.msra.mxu0 %v994
        %1473 = vmatpush.msra.mxu0 %v990
        %1474 = vmatpush.msra.mxu0 %v986
        %1475 = vmatpush.msra.mxu0 %v982
        %1476 = vmatpush.msra.mxu0 %v978
        %1477 = vmatpush.msra.mxu0 %v974
        %1478 = vmatpush.msra.mxu0 %v970
        %1479 = vmatpush.msra.mxu0 %v966
        %1480 = vmatpush.msra.mxu0 %v962
        %1481 = vmatmul.f32.gmra.mxu0 %v955
        %v1482 = vpop.f32.mrf.mxu0
        %v1483 = vadd.f32 %v1220, %v1482
        %1484 = vdwg.mxu0
        %1485 = vmatpush.msra.mxu0 %v1086
        %1486 = vmatpush.msra.mxu0 %v1082
        %1487 = vmatpush.msra.mxu0 %v1078
        %1488 = vmatpush.msra.mxu0 %v1074
        %1489 = vmatpush.msra.mxu0 %v1070
        %1490 = vmatpush.msra.mxu0 %v1066
        %1491 = vmatpush.msra.mxu0 %v1062
        %1492 = vmatpush.msra.mxu0 %v1058
        %1493 = vmatpush.msra.mxu0 %v1054
        %1494 = vmatpush.msra.mxu0 %v1050
        %1495 = vmatpush.msra.mxu0 %v1046
        %1496 = vmatpush.msra.mxu0 %v1042
        %1497 = vmatpush.msra.mxu0 %v1038
        %1498 = vmatpush.msra.mxu0 %v1034
        %1499 = vmatpush.msra.mxu0 %v1030
        %1500 = vmatpush.msra.mxu0 %v1026
        %1501 = vmatmul.f32.gmra.mxu0 %v956
        %v1502 = vpop.f32.mrf.mxu0
        %v1503 = vadd.f32 %v1483, %v1502
        %1504 = vdwg.mxu0
        %1505 = vmatpush.msra.mxu0 %v1150
        %1506 = vmatpush.msra.mxu0 %v1146
        %1507 = vmatpush.msra.mxu0 %v1142
        %1508 = vmatpush.msra.mxu0 %v1138
        %1509 = vmatpush.msra.mxu0 %v1134
        %1510 = vmatpush.msra.mxu0 %v1130
        %1511 = vmatpush.msra.mxu0 %v1126
        %1512 = vmatpush.msra.mxu0 %v1122
        %1513 = vmatpush.msra.mxu0 %v1118
        %1514 = vmatpush.msra.mxu0 %v1114
        %1515 = vmatpush.msra.mxu0 %v1110
        %1516 = vmatpush.msra.mxu0 %v1106
        %1517 = vmatpush.msra.mxu0 %v1102
        %1518 = vmatpush.msra.mxu0 %v1098
        %1519 = vmatpush.msra.mxu0 %v1094
        %1520 = vmatpush.msra.mxu0 %v1090
        %1521 = vmatmul.f32.gmra.mxu0 %v957
        %v1522 = vpop.f32.mrf.mxu0
        %v1523 = vadd.f32 %v1503, %v1522
        %1524 = vdwg.mxu0
        %1525 = vmatpush.msra.mxu0 %v1214
        %1526 = vmatpush.msra.mxu0 %v1210
        %1527 = vmatpush.msra.mxu0 %v1206
        %1528 = vmatpush.msra.mxu0 %v1202
        %1529 = vmatpush.msra.mxu0 %v1198
        %1530 = vmatpush.msra.mxu0 %v1194
        %1531 = vmatpush.msra.mxu0 %v1190
        %1532 = vmatpush.msra.mxu0 %v1186
        %1533 = vmatpush.msra.mxu0 %v1182
        %1534 = vmatpush.msra.mxu0 %v1178
        %1535 = vmatpush.msra.mxu0 %v1174
        %1536 = vmatpush.msra.mxu0 %v1170
        %1537 = vmatpush.msra.mxu0 %v1166
        %1538 = vmatpush.msra.mxu0 %v1162
        %1539 = vmatpush.msra.mxu0 %v1158
        %1540 = vmatpush.msra.mxu0 %v1154
        %1541 = vmatmul.f32.gmra.mxu0 %v958
        %v1542 = vpop.f32.mrf.mxu0
        %v1543 = vadd.f32 %v1523, %v1542
        %1544 = vdwg.mxu0
        %v1545 = vmax.f32 %v1303, 0.0
        %v1546 = vmax.f32 %v1383, 0.0
        %v1547 = vmax.f32 %v1463, 0.0
        %v1548 = vmax.f32 %v1543, 0.0
        %v1549 = vld [vmem:[#allocation8] sm:$0xff]
        %v1550 = vld [vmem:[#allocation8 + $0x8] sm:$0xff]
        %v1551 = vld [vmem:[#allocation8 + $0x10] sm:$0xff]
        %v1552 = vld [vmem:[#allocation8 + $0x18] sm:$0xff]
        %v1553 = vld [vmem:[#allocation8 + $0x20] sm:$0xff]
        %v1554 = vld [vmem:[#allocation8 + $0x28] sm:$0xff]
        %v1555 = vld [vmem:[#allocation8 + $0x30] sm:$0xff]
        %v1556 = vld [vmem:[#allocation8 + $0x38] sm:$0xff]
        %v1557 = vld [vmem:[#allocation8 + $0x40] sm:$0xff]
        %v1558 = vld [vmem:[#allocation8 + $0x48] sm:$0xff]
        %v1559 = vld [vmem:[#allocation8 + $0x50] sm:$0xff]
        %v1560 = vld [vmem:[#allocation8 + $0x58] sm:$0xff]
        %v1561 = vld [vmem:[#allocation8 + $0x60] sm:$0xff]
        %v1562 = vld [vmem:[#allocation8 + $0x68] sm:$0xff]
        %v1563 = vld [vmem:[#allocation8 + $0x70] sm:$0xff]
        %v1564 = vld [vmem:[#allocation8 + $0x78] sm:$0xff]
        %v1565 = vld [vmem:[#allocation8 + $0x80] sm:$0xff]
        %v1566 = vld [vmem:[#allocation8 + $0x88] sm:$0xff]
        %v1567 = vld [vmem:[#allocation8 + $0x90] sm:$0xff]
        %v1568 = vld [vmem:[#allocation8 + $0x98] sm:$0xff]
        %v1569 = vld [vmem:[#allocation8 + $0xa0] sm:$0xff]
        %v1570 = vld [vmem:[#allocation8 + $0xa8] sm:$0xff]
        %v1571 = vld [vmem:[#allocation8 + $0xb0] sm:$0xff]
        %v1572 = vld [vmem:[#allocation8 + $0xb8] sm:$0xff]
        %v1573 = vld [vmem:[#allocation8 + $0xc0] sm:$0xff]
        %v1574 = vld [vmem:[#allocation8 + $0xc8] sm:$0xff]
        %v1575 = vld [vmem:[#allocation8 + $0xd0] sm:$0xff]
        %v1576 = vld [vmem:[#allocation8 + $0xd8] sm:$0xff]
        %v1577 = vld [vmem:[#allocation8 + $0xe0] sm:$0xff]
        %v1578 = vld [vmem:[#allocation8 + $0xe8] sm:$0xff]
        %v1579 = vld [vmem:[#allocation8 + $0xf0] sm:$0xff]
        %v1580 = vld [vmem:[#allocation8 + $0xf8] sm:$0xff]
        %v1581 = vld [vmem:[#allocation8 + $0x100] sm:$0xff]
        %v1582 = vld [vmem:[#allocation8 + $0x108] sm:$0xff]
        %v1583 = vld [vmem:[#allocation8 + $0x110] sm:$0xff]
        %v1584 = vld [vmem:[#allocation8 + $0x118] sm:$0xff]
        %v1585 = vld [vmem:[#allocation8 + $0x120] sm:$0xff]
        %v1586 = vld [vmem:[#allocation8 + $0x128] sm:$0xff]
        %v1587 = vld [vmem:[#allocation8 + $0x130] sm:$0xff]
        %v1588 = vld [vmem:[#allocation8 + $0x138] sm:$0xff]
        %v1589 = vld [vmem:[#allocation8 + $0x140] sm:$0xff]
        %v1590 = vld [vmem:[#allocation8 + $0x148] sm:$0xff]
        %v1591 = vld [vmem:[#allocation8 + $0x150] sm:$0xff]
        %v1592 = vld [vmem:[#allocation8 + $0x158] sm:$0xff]
        %v1593 = vld [vmem:[#allocation8 + $0x160] sm:$0xff]
        %v1594 = vld [vmem:[#allocation8 + $0x168] sm:$0xff]
        %v1595 = vld [vmem:[#allocation8 + $0x170] sm:$0xff]
        %v1596 = vld [vmem:[#allocation8 + $0x178] sm:$0xff]
        %v1597 = vld [vmem:[#allocation8 + $0x180] sm:$0xff]
        %v1598 = vld [vmem:[#allocation8 + $0x188] sm:$0xff]
        %v1599 = vld [vmem:[#allocation8 + $0x190] sm:$0xff]
        %v1600 = vld [vmem:[#allocation8 + $0x198] sm:$0xff]
        %v1601 = vld [vmem:[#allocation8 + $0x1a0] sm:$0xff]
        %v1602 = vld [vmem:[#allocation8 + $0x1a8] sm:$0xff]
        %v1603 = vld [vmem:[#allocation8 + $0x1b0] sm:$0xff]
        %v1604 = vld [vmem:[#allocation8 + $0x1b8] sm:$0xff]
        %v1605 = vld [vmem:[#allocation8 + $0x1c0] sm:$0xff]
        %v1606 = vld [vmem:[#allocation8 + $0x1c8] sm:$0xff]
        %v1607 = vld [vmem:[#allocation8 + $0x1d0] sm:$0xff]
        %v1608 = vld [vmem:[#allocation8 + $0x1d8] sm:$0xff]
        %v1609 = vld [vmem:[#allocation8 + $0x1e0] sm:$0xff]
        %v1610 = vld [vmem:[#allocation8 + $0x1e8] sm:$0xff]
        %v1611 = vld [vmem:[#allocation8 + $0x1f0] sm:$0xff]
        %v1612 = vld [vmem:[#allocation8 + $0x1f8] sm:$0xff]
        %v1613 = vld [vmem:[#allocation8 + $0x200] sm:$0xff]
        %v1614 = vld [vmem:[#allocation8 + $0x208] sm:$0xff]
        %v1615 = vld [vmem:[#allocation8 + $0x210] sm:$0xff]
        %v1616 = vld [vmem:[#allocation8 + $0x218] sm:$0xff]
        %v1617 = vld [vmem:[#allocation8 + $0x220] sm:$0xff]
        %v1618 = vld [vmem:[#allocation8 + $0x228] sm:$0xff]
        %v1619 = vld [vmem:[#allocation8 + $0x230] sm:$0xff]
        %v1620 = vld [vmem:[#allocation8 + $0x238] sm:$0xff]
        %v1621 = vld [vmem:[#allocation8 + $0x240] sm:$0xff]
        %v1622 = vld [vmem:[#allocation8 + $0x248] sm:$0xff]
        %v1623 = vld [vmem:[#allocation8 + $0x250] sm:$0xff]
        %v1624 = vld [vmem:[#allocation8 + $0x258] sm:$0xff]
        %v1625 = vld [vmem:[#allocation8 + $0x260] sm:$0xff]
        %v1626 = vld [vmem:[#allocation8 + $0x268] sm:$0xff]
        %v1627 = vld [vmem:[#allocation8 + $0x270] sm:$0xff]
        %v1628 = vld [vmem:[#allocation8 + $0x278] sm:$0xff]
        %v1629 = vld [vmem:[#allocation8 + $0x280] sm:$0xff]
        %v1630 = vld [vmem:[#allocation8 + $0x288] sm:$0xff]
        %v1631 = vld [vmem:[#allocation8 + $0x290] sm:$0xff]
        %v1632 = vld [vmem:[#allocation8 + $0x298] sm:$0xff]
        %v1633 = vld [vmem:[#allocation8 + $0x2a0] sm:$0xff]
        %v1634 = vld [vmem:[#allocation8 + $0x2a8] sm:$0xff]
        %v1635 = vld [vmem:[#allocation8 + $0x2b0] sm:$0xff]
        %v1636 = vld [vmem:[#allocation8 + $0x2b8] sm:$0xff]
        %v1637 = vld [vmem:[#allocation8 + $0x2c0] sm:$0xff]
        %v1638 = vld [vmem:[#allocation8 + $0x2c8] sm:$0xff]
        %v1639 = vld [vmem:[#allocation8 + $0x2d0] sm:$0xff]
        %v1640 = vld [vmem:[#allocation8 + $0x2d8] sm:$0xff]
        %v1641 = vld [vmem:[#allocation8 + $0x2e0] sm:$0xff]
        %v1642 = vld [vmem:[#allocation8 + $0x2e8] sm:$0xff]
        %v1643 = vld [vmem:[#allocation8 + $0x2f0] sm:$0xff]
        %v1644 = vld [vmem:[#allocation8 + $0x2f8] sm:$0xff]
        %v1645 = vld [vmem:[#allocation8 + $0x300] sm:$0xff]
        %v1646 = vld [vmem:[#allocation8 + $0x308] sm:$0xff]
        %v1647 = vld [vmem:[#allocation8 + $0x310] sm:$0xff]
        %v1648 = vld [vmem:[#allocation8 + $0x318] sm:$0xff]
        %v1649 = vld [vmem:[#allocation8 + $0x320] sm:$0xff]
        %v1650 = vld [vmem:[#allocation8 + $0x328] sm:$0xff]
        %v1651 = vld [vmem:[#allocation8 + $0x330] sm:$0xff]
        %v1652 = vld [vmem:[#allocation8 + $0x338] sm:$0xff]
        %v1653 = vld [vmem:[#allocation8 + $0x340] sm:$0xff]
        %v1654 = vld [vmem:[#allocation8 + $0x348] sm:$0xff]
        %v1655 = vld [vmem:[#allocation8 + $0x350] sm:$0xff]
        %v1656 = vld [vmem:[#allocation8 + $0x358] sm:$0xff]
        %v1657 = vld [vmem:[#allocation8 + $0x360] sm:$0xff]
        %v1658 = vld [vmem:[#allocation8 + $0x368] sm:$0xff]
        %v1659 = vld [vmem:[#allocation8 + $0x370] sm:$0xff]
        %v1660 = vld [vmem:[#allocation8 + $0x378] sm:$0xff]
        %v1661 = vld [vmem:[#allocation8 + $0x380] sm:$0xff]
        %v1662 = vld [vmem:[#allocation8 + $0x388] sm:$0xff]
        %v1663 = vld [vmem:[#allocation8 + $0x390] sm:$0xff]
        %v1664 = vld [vmem:[#allocation8 + $0x398] sm:$0xff]
        %v1665 = vld [vmem:[#allocation8 + $0x3a0] sm:$0xff]
        %v1666 = vld [vmem:[#allocation8 + $0x3a8] sm:$0xff]
        %v1667 = vld [vmem:[#allocation8 + $0x3b0] sm:$0xff]
        %v1668 = vld [vmem:[#allocation8 + $0x3b8] sm:$0xff]
        %v1669 = vld [vmem:[#allocation8 + $0x3c0] sm:$0xff]
        %v1670 = vld [vmem:[#allocation8 + $0x3c8] sm:$0xff]
        %v1671 = vld [vmem:[#allocation8 + $0x3d0] sm:$0xff]
        %v1672 = vld [vmem:[#allocation8 + $0x3d8] sm:$0xff]
        %v1673 = vld [vmem:[#allocation8 + $0x3e0] sm:$0xff]
        %v1674 = vld [vmem:[#allocation8 + $0x3e8] sm:$0xff]
        %v1675 = vld [vmem:[#allocation8 + $0x3f0] sm:$0xff]
        %v1676 = vld [vmem:[#allocation8 + $0x3f8] sm:$0xff]
        %v1677 = vld [vmem:[#allocation8 + $0x400] sm:$0xff]
        %v1678 = vld [vmem:[#allocation8 + $0x408] sm:$0xff]
        %v1679 = vld [vmem:[#allocation8 + $0x410] sm:$0xff]
        %v1680 = vld [vmem:[#allocation8 + $0x418] sm:$0xff]
        %v1681 = vld [vmem:[#allocation8 + $0x420] sm:$0xff]
        %v1682 = vld [vmem:[#allocation8 + $0x428] sm:$0xff]
        %v1683 = vld [vmem:[#allocation8 + $0x430] sm:$0xff]
        %v1684 = vld [vmem:[#allocation8 + $0x438] sm:$0xff]
        %v1685 = vld [vmem:[#allocation8 + $0x440] sm:$0xff]
        %v1686 = vld [vmem:[#allocation8 + $0x448] sm:$0xff]
        %v1687 = vld [vmem:[#allocation8 + $0x450] sm:$0xff]
        %v1688 = vld [vmem:[#allocation8 + $0x458] sm:$0xff]
        %v1689 = vld [vmem:[#allocation8 + $0x460] sm:$0xff]
        %v1690 = vld [vmem:[#allocation8 + $0x468] sm:$0xff]
        %v1691 = vld [vmem:[#allocation8 + $0x470] sm:$0xff]
        %v1692 = vld [vmem:[#allocation8 + $0x478] sm:$0xff]
        %v1693 = vld [vmem:[#allocation8 + $0x480] sm:$0xff]
        %v1694 = vld [vmem:[#allocation8 + $0x488] sm:$0xff]
        %v1695 = vld [vmem:[#allocation8 + $0x490] sm:$0xff]
        %v1696 = vld [vmem:[#allocation8 + $0x498] sm:$0xff]
        %v1697 = vld [vmem:[#allocation8 + $0x4a0] sm:$0xff]
        %v1698 = vld [vmem:[#allocation8 + $0x4a8] sm:$0xff]
        %v1699 = vld [vmem:[#allocation8 + $0x4b0] sm:$0xff]
        %v1700 = vld [vmem:[#allocation8 + $0x4b8] sm:$0xff]
        %v1701 = vld [vmem:[#allocation8 + $0x4c0] sm:$0xff]
        %v1702 = vld [vmem:[#allocation8 + $0x4c8] sm:$0xff]
        %v1703 = vld [vmem:[#allocation8 + $0x4d0] sm:$0xff]
        %v1704 = vld [vmem:[#allocation8 + $0x4d8] sm:$0xff]
        %v1705 = vld [vmem:[#allocation8 + $0x4e0] sm:$0xff]
        %v1706 = vld [vmem:[#allocation8 + $0x4e8] sm:$0xff]
        %v1707 = vld [vmem:[#allocation8 + $0x4f0] sm:$0xff]
        %v1708 = vld [vmem:[#allocation8 + $0x4f8] sm:$0xff]
        %v1709 = vld [vmem:[#allocation8 + $0x500] sm:$0xff]
        %v1710 = vld [vmem:[#allocation8 + $0x508] sm:$0xff]
        %v1711 = vld [vmem:[#allocation8 + $0x510] sm:$0xff]
        %v1712 = vld [vmem:[#allocation8 + $0x518] sm:$0xff]
        %v1713 = vld [vmem:[#allocation8 + $0x520] sm:$0xff]
        %v1714 = vld [vmem:[#allocation8 + $0x528] sm:$0xff]
        %v1715 = vld [vmem:[#allocation8 + $0x530] sm:$0xff]
        %v1716 = vld [vmem:[#allocation8 + $0x538] sm:$0xff]
        %v1717 = vld [vmem:[#allocation8 + $0x540] sm:$0xff]
        %v1718 = vld [vmem:[#allocation8 + $0x548] sm:$0xff]
        %v1719 = vld [vmem:[#allocation8 + $0x550] sm:$0xff]
        %v1720 = vld [vmem:[#allocation8 + $0x558] sm:$0xff]
        %v1721 = vld [vmem:[#allocation8 + $0x560] sm:$0xff]
        %v1722 = vld [vmem:[#allocation8 + $0x568] sm:$0xff]
        %v1723 = vld [vmem:[#allocation8 + $0x570] sm:$0xff]
        %v1724 = vld [vmem:[#allocation8 + $0x578] sm:$0xff]
        %v1725 = vld [vmem:[#allocation8 + $0x580] sm:$0xff]
        %v1726 = vld [vmem:[#allocation8 + $0x588] sm:$0xff]
        %v1727 = vld [vmem:[#allocation8 + $0x590] sm:$0xff]
        %v1728 = vld [vmem:[#allocation8 + $0x598] sm:$0xff]
        %v1729 = vld [vmem:[#allocation8 + $0x5a0] sm:$0xff]
        %v1730 = vld [vmem:[#allocation8 + $0x5a8] sm:$0xff]
        %v1731 = vld [vmem:[#allocation8 + $0x5b0] sm:$0xff]
        %v1732 = vld [vmem:[#allocation8 + $0x5b8] sm:$0xff]
        %v1733 = vld [vmem:[#allocation8 + $0x5c0] sm:$0xff]
        %v1734 = vld [vmem:[#allocation8 + $0x5c8] sm:$0xff]
        %v1735 = vld [vmem:[#allocation8 + $0x5d0] sm:$0xff]
        %v1736 = vld [vmem:[#allocation8 + $0x5d8] sm:$0xff]
        %v1737 = vld [vmem:[#allocation8 + $0x5e0] sm:$0xff]
        %v1738 = vld [vmem:[#allocation8 + $0x5e8] sm:$0xff]
        %v1739 = vld [vmem:[#allocation8 + $0x5f0] sm:$0xff]
        %v1740 = vld [vmem:[#allocation8 + $0x5f8] sm:$0xff]
        %v1741 = vld [vmem:[#allocation8 + $0x600] sm:$0xff]
        %v1742 = vld [vmem:[#allocation8 + $0x608] sm:$0xff]
        %v1743 = vld [vmem:[#allocation8 + $0x610] sm:$0xff]
        %v1744 = vld [vmem:[#allocation8 + $0x618] sm:$0xff]
        %v1745 = vld [vmem:[#allocation8 + $0x620] sm:$0xff]
        %v1746 = vld [vmem:[#allocation8 + $0x628] sm:$0xff]
        %v1747 = vld [vmem:[#allocation8 + $0x630] sm:$0xff]
        %v1748 = vld [vmem:[#allocation8 + $0x638] sm:$0xff]
        %v1749 = vld [vmem:[#allocation8 + $0x640] sm:$0xff]
        %v1750 = vld [vmem:[#allocation8 + $0x648] sm:$0xff]
        %v1751 = vld [vmem:[#allocation8 + $0x650] sm:$0xff]
        %v1752 = vld [vmem:[#allocation8 + $0x658] sm:$0xff]
        %v1753 = vld [vmem:[#allocation8 + $0x660] sm:$0xff]
        %v1754 = vld [vmem:[#allocation8 + $0x668] sm:$0xff]
        %v1755 = vld [vmem:[#allocation8 + $0x670] sm:$0xff]
        %v1756 = vld [vmem:[#allocation8 + $0x678] sm:$0xff]
        %v1757 = vld [vmem:[#allocation8 + $0x680] sm:$0xff]
        %v1758 = vld [vmem:[#allocation8 + $0x688] sm:$0xff]
        %v1759 = vld [vmem:[#allocation8 + $0x690] sm:$0xff]
        %v1760 = vld [vmem:[#allocation8 + $0x698] sm:$0xff]
        %v1761 = vld [vmem:[#allocation8 + $0x6a0] sm:$0xff]
        %v1762 = vld [vmem:[#allocation8 + $0x6a8] sm:$0xff]
        %v1763 = vld [vmem:[#allocation8 + $0x6b0] sm:$0xff]
        %v1764 = vld [vmem:[#allocation8 + $0x6b8] sm:$0xff]
        %v1765 = vld [vmem:[#allocation8 + $0x6c0] sm:$0xff]
        %v1766 = vld [vmem:[#allocation8 + $0x6c8] sm:$0xff]
        %v1767 = vld [vmem:[#allocation8 + $0x6d0] sm:$0xff]
        %v1768 = vld [vmem:[#allocation8 + $0x6d8] sm:$0xff]
        %v1769 = vld [vmem:[#allocation8 + $0x6e0] sm:$0xff]
        %v1770 = vld [vmem:[#allocation8 + $0x6e8] sm:$0xff]
        %v1771 = vld [vmem:[#allocation8 + $0x6f0] sm:$0xff]
        %v1772 = vld [vmem:[#allocation8 + $0x6f8] sm:$0xff]
        %v1773 = vld [vmem:[#allocation8 + $0x700] sm:$0xff]
        %v1774 = vld [vmem:[#allocation8 + $0x708] sm:$0xff]
        %v1775 = vld [vmem:[#allocation8 + $0x710] sm:$0xff]
        %v1776 = vld [vmem:[#allocation8 + $0x718] sm:$0xff]
        %v1777 = vld [vmem:[#allocation8 + $0x720] sm:$0xff]
        %v1778 = vld [vmem:[#allocation8 + $0x728] sm:$0xff]
        %v1779 = vld [vmem:[#allocation8 + $0x730] sm:$0xff]
        %v1780 = vld [vmem:[#allocation8 + $0x738] sm:$0xff]
        %v1781 = vld [vmem:[#allocation8 + $0x740] sm:$0xff]
        %v1782 = vld [vmem:[#allocation8 + $0x748] sm:$0xff]
        %v1783 = vld [vmem:[#allocation8 + $0x750] sm:$0xff]
        %v1784 = vld [vmem:[#allocation8 + $0x758] sm:$0xff]
        %v1785 = vld [vmem:[#allocation8 + $0x760] sm:$0xff]
        %v1786 = vld [vmem:[#allocation8 + $0x768] sm:$0xff]
        %v1787 = vld [vmem:[#allocation8 + $0x770] sm:$0xff]
        %v1788 = vld [vmem:[#allocation8 + $0x778] sm:$0xff]
        %v1789 = vld [vmem:[#allocation8 + $0x780] sm:$0xff]
        %v1790 = vld [vmem:[#allocation8 + $0x788] sm:$0xff]
        %v1791 = vld [vmem:[#allocation8 + $0x790] sm:$0xff]
        %v1792 = vld [vmem:[#allocation8 + $0x798] sm:$0xff]
        %v1793 = vld [vmem:[#allocation8 + $0x7a0] sm:$0xff]
        %v1794 = vld [vmem:[#allocation8 + $0x7a8] sm:$0xff]
        %v1795 = vld [vmem:[#allocation8 + $0x7b0] sm:$0xff]
        %v1796 = vld [vmem:[#allocation8 + $0x7b8] sm:$0xff]
        %v1797 = vld [vmem:[#allocation8 + $0x7c0] sm:$0xff]
        %v1798 = vld [vmem:[#allocation8 + $0x7c8] sm:$0xff]
        %v1799 = vld [vmem:[#allocation8 + $0x7d0] sm:$0xff]
        %v1800 = vld [vmem:[#allocation8 + $0x7d8] sm:$0xff]
        %v1801 = vld [vmem:[#allocation8 + $0x7e0] sm:$0xff]
        %v1802 = vld [vmem:[#allocation8 + $0x7e8] sm:$0xff]
        %v1803 = vld [vmem:[#allocation8 + $0x7f0] sm:$0xff]
        %v1804 = vld [vmem:[#allocation8 + $0x7f8] sm:$0xff]
        %v1805 = vld [vmem:[%s6] sm:$0xf]
        %v1807 = vperm.slane %v1805, 0
        %v1808 = vperm.slane %v1805, 1
        %v1809 = vperm.slane %v1805, 2
        %v1810 = vperm.slane %v1805, 3
        %1815 = vmatpush.msra.mxu0 %v1609
        %1816 = vmatpush.msra.mxu0 %v1605
        %1817 = vmatpush.msra.mxu0 %v1601
        %1818 = vmatpush.msra.mxu0 %v1597
        %1819 = vmatpush.msra.mxu0 %v1593
        %1820 = vmatpush.msra.mxu0 %v1589
        %1821 = vmatpush.msra.mxu0 %v1585
        %1822 = vmatpush.msra.mxu0 %v1581
        %1823 = vmatpush.msra.mxu0 %v1577
        %1824 = vmatpush.msra.mxu0 %v1573
        %1825 = vmatpush.msra.mxu0 %v1569
        %1826 = vmatpush.msra.mxu0 %v1565
        %1827 = vmatpush.msra.mxu0 %v1561
        %1828 = vmatpush.msra.mxu0 %v1557
        %1829 = vmatpush.msra.mxu0 %v1553
        %1830 = vmatpush.msra.mxu0 %v1549
        %1831 = vmatmul.f32.gmra.mxu0 %v1545
        %v1832 = vpop.f32.mrf.mxu0
        %v1833 = vadd.f32 %v1807, %v1832
        %1834 = vdwg.mxu0
        %1835 = vmatpush.msra.mxu0 %v1673
        %1836 = vmatpush.msra.mxu0 %v1669
        %1837 = vmatpush.msra.mxu0 %v1665
        %1838 = vmatpush.msra.mxu0 %v1661
        %1839 = vmatpush.msra.mxu0 %v1657
        %1840 = vmatpush.msra.mxu0 %v1653
        %1841 = vmatpush.msra.mxu0 %v1649
        %1842 = vmatpush.msra.mxu0 %v1645
        %1843 = vmatpush.msra.mxu0 %v1641
        %1844 = vmatpush.msra.mxu0 %v1637
        %1845 = vmatpush.msra.mxu0 %v1633
        %1846 = vmatpush.msra.mxu0 %v1629
        %1847 = vmatpush.msra.mxu0 %v1625
        %1848 = vmatpush.msra.mxu0 %v1621
        %1849 = vmatpush.msra.mxu0 %v1617
        %1850 = vmatpush.msra.mxu0 %v1613
        %1851 = vmatmul.f32.gmra.mxu0 %v1546
        %v1852 = vpop.f32.mrf.mxu0
        %v1853 = vadd.f32 %v1833, %v1852
        %1854 = vdwg.mxu0
        %1855 = vmatpush.msra.mxu0 %v1737
        %1856 = vmatpush.msra.mxu0 %v1733
        %1857 = vmatpush.msra.mxu0 %v1729
        %1858 = vmatpush.msra.mxu0 %v1725
        %1859 = vmatpush.msra.mxu0 %v1721
        %1860 = vmatpush.msra.mxu0 %v1717
        %1861 = vmatpush.msra.mxu0 %v1713
        %1862 = vmatpush.msra.mxu0 %v1709
        %1863 = vmatpush.msra.mxu0 %v1705
        %1864 = vmatpush.msra.mxu0 %v1701
        %1865 = vmatpush.msra.mxu0 %v1697
        %1866 = vmatpush.msra.mxu0 %v1693
        %1867 = vmatpush.msra.mxu0 %v1689
        %1868 = vmatpush.msra.mxu0 %v1685
        %1869 = vmatpush.msra.mxu0 %v1681
        %1870 = vmatpush.msra.mxu0 %v1677
        %1871 = vmatmul.f32.gmra.mxu0 %v1547
        %v1872 = vpop.f32.mrf.mxu0
        %v1873 = vadd.f32 %v1853, %v1872
        %1874 = vdwg.mxu0
        %1875 = vmatpush.msra.mxu0 %v1801
        %1876 = vmatpush.msra.mxu0 %v1797
        %1877 = vmatpush.msra.mxu0 %v1793
        %1878 = vmatpush.msra.mxu0 %v1789
        %1879 = vmatpush.msra.mxu0 %v1785
        %1880 = vmatpush.msra.mxu0 %v1781
        %1881 = vmatpush.msra.mxu0 %v1777
        %1882 = vmatpush.msra.mxu0 %v1773
        %1883 = vmatpush.msra.mxu0 %v1769
        %1884 = vmatpush.msra.mxu0 %v1765
        %1885 = vmatpush.msra.mxu0 %v1761
        %1886 = vmatpush.msra.mxu0 %v1757
        %1887 = vmatpush.msra.mxu0 %v1753
        %1888 = vmatpush.msra.mxu0 %v1749
        %1889 = vmatpush.msra.mxu0 %v1745
        %1890 = vmatpush.msra.mxu0 %v1741
        %1891 = vmatmul.f32.gmra.mxu0 %v1548
        %v1892 = vpop.f32.mrf.mxu0
        %v1893 = vadd.f32 %v1873, %v1892
        %1894 = vdwg.mxu0
        %1895 = vmatpush.msra.mxu0 %v1610
        %1896 = vmatpush.msra.mxu0 %v1606
        %1897 = vmatpush.msra.mxu0 %v1602
        %1898 = vmatpush.msra.mxu0 %v1598
        %1899 = vmatpush.msra.mxu0 %v1594
        %1900 = vmatpush.msra.mxu0 %v1590
        %1901 = vmatpush.msra.mxu0 %v1586
        %1902 = vmatpush.msra.mxu0 %v1582
        %1903 = vmatpush.msra.mxu0 %v1578
        %1904 = vmatpush.msra.mxu0 %v1574
        %1905 = vmatpush.msra.mxu0 %v1570
        %1906 = vmatpush.msra.mxu0 %v1566
        %1907 = vmatpush.msra.mxu0 %v1562
        %1908 = vmatpush.msra.mxu0 %v1558
        %1909 = vmatpush.msra.mxu0 %v1554
        %1910 = vmatpush.msra.mxu0 %v1550
        %1911 = vmatmul.f32.gmra.mxu0 %v1545
        %v1912 = vpop.f32.mrf.mxu0
        %v1913 = vadd.f32 %v1808, %v1912
        %1914 = vdwg.mxu0
        %1915 = vmatpush.msra.mxu0 %v1674
        %1916 = vmatpush.msra.mxu0 %v1670
        %1917 = vmatpush.msra.mxu0 %v1666
        %1918 = vmatpush.msra.mxu0 %v1662
        %1919 = vmatpush.msra.mxu0 %v1658
        %1920 = vmatpush.msra.mxu0 %v1654
        %1921 = vmatpush.msra.mxu0 %v1650
        %1922 = vmatpush.msra.mxu0 %v1646
        %1923 = vmatpush.msra.mxu0 %v1642
        %1924 = vmatpush.msra.mxu0 %v1638
        %1925 = vmatpush.msra.mxu0 %v1634
        %1926 = vmatpush.msra.mxu0 %v1630
        %1927 = vmatpush.msra.mxu0 %v1626
        %1928 = vmatpush.msra.mxu0 %v1622
        %1929 = vmatpush.msra.mxu0 %v1618
        %1930 = vmatpush.msra.mxu0 %v1614
        %1931 = vmatmul.f32.gmra.mxu0 %v1546
        %v1932 = vpop.f32.mrf.mxu0
        %v1933 = vadd.f32 %v1913, %v1932
        %1934 = vdwg.mxu0
        %1935 = vmatpush.msra.mxu0 %v1738
        %1936 = vmatpush.msra.mxu0 %v1734
        %1937 = vmatpush.msra.mxu0 %v1730
        %1938 = vmatpush.msra.mxu0 %v1726
        %1939 = vmatpush.msra.mxu0 %v1722
        %1940 = vmatpush.msra.mxu0 %v1718
        %1941 = vmatpush.msra.mxu0 %v1714
        %1942 = vmatpush.msra.mxu0 %v1710
        %1943 = vmatpush.msra.mxu0 %v1706
        %1944 = vmatpush.msra.mxu0 %v1702
        %1945 = vmatpush.msra.mxu0 %v1698
        %1946 = vmatpush.msra.mxu0 %v1694
        %1947 = vmatpush.msra.mxu0 %v1690
        %1948 = vmatpush.msra.mxu0 %v1686
        %1949 = vmatpush.msra.mxu0 %v1682
        %1950 = vmatpush.msra.mxu0 %v1678
        %1951 = vmatmul.f32.gmra.mxu0 %v1547
        %v1952 = vpop.f32.mrf.mxu0
        %v1953 = vadd.f32 %v1933, %v1952
        %1954 = vdwg.mxu0
        %1955 = vmatpush.msra.mxu0 %v1802
        %1956 = vmatpush.msra.mxu0 %v1798
        %1957 = vmatpush.msra.mxu0 %v1794
        %1958 = vmatpush.msra.mxu0 %v1790
        %1959 = vmatpush.msra.mxu0 %v1786
        %1960 = vmatpush.msra.mxu0 %v1782
        %1961 = vmatpush.msra.mxu0 %v1778
        %1962 = vmatpush.msra.mxu0 %v1774
        %1963 = vmatpush.msra.mxu0 %v1770
        %1964 = vmatpush.msra.mxu0 %v1766
        %1965 = vmatpush.msra.mxu0 %v1762
        %1966 = vmatpush.msra.mxu0 %v1758
        %1967 = vmatpush.msra.mxu0 %v1754
        %1968 = vmatpush.msra.mxu0 %v1750
        %1969 = vmatpush.msra.mxu0 %v1746
        %1970 = vmatpush.msra.mxu0 %v1742
        %1971 = vmatmul.f32.gmra.mxu0 %v1548
        %v1972 = vpop.f32.mrf.mxu0
        %v1973 = vadd.f32 %v1953, %v1972
        %1974 = vdwg.mxu0
        %1975 = vmatpush.msra.mxu0 %v1611
        %1976 = vmatpush.msra.mxu0 %v1607
        %1977 = vmatpush.msra.mxu0 %v1603
        %1978 = vmatpush.msra.mxu0 %v1599
        %1979 = vmatpush.msra.mxu0 %v1595
        %1980 = vmatpush.msra.mxu0 %v1591
        %1981 = vmatpush.msra.mxu0 %v1587
        %1982 = vmatpush.msra.mxu0 %v1583
        %1983 = vmatpush.msra.mxu0 %v1579
        %1984 = vmatpush.msra.mxu0 %v1575
        %1985 = vmatpush.msra.mxu0 %v1571
        %1986 = vmatpush.msra.mxu0 %v1567
        %1987 = vmatpush.msra.mxu0 %v1563
        %1988 = vmatpush.msra.mxu0 %v1559
        %1989 = vmatpush.msra.mxu0 %v1555
        %1990 = vmatpush.msra.mxu0 %v1551
        %1991 = vmatmul.f32.gmra.mxu0 %v1545
        %v1992 = vpop.f32.mrf.mxu0
        %v1993 = vadd.f32 %v1809, %v1992
        %1994 = vdwg.mxu0
        %1995 = vmatpush.msra.mxu0 %v1675
        %1996 = vmatpush.msra.mxu0 %v1671
        %1997 = vmatpush.msra.mxu0 %v1667
        %1998 = vmatpush.msra.mxu0 %v1663
        %1999 = vmatpush.msra.mxu0 %v1659
        %2000 = vmatpush.msra.mxu0 %v1655
        %2001 = vmatpush.msra.mxu0 %v1651
        %2002 = vmatpush.msra.mxu0 %v1647
        %2003 = vmatpush.msra.mxu0 %v1643
        %2004 = vmatpush.msra.mxu0 %v1639
        %2005 = vmatpush.msra.mxu0 %v1635
        %2006 = vmatpush.msra.mxu0 %v1631
        %2007 = vmatpush.msra.mxu0 %v1627
        %2008 = vmatpush.msra.mxu0 %v1623
        %2009 = vmatpush.msra.mxu0 %v1619
        %2010 = vmatpush.msra.mxu0 %v1615
        %2011 = vmatmul.f32.gmra.mxu0 %v1546
        %v2012 = vpop.f32.mrf.mxu0
        %v2013 = vadd.f32 %v1993, %v2012
        %2014 = vdwg.mxu0
        %2015 = vmatpush.msra.mxu0 %v1739
        %2016 = vmatpush.msra.mxu0 %v1735
        %2017 = vmatpush.msra.mxu0 %v1731
        %2018 = vmatpush.msra.mxu0 %v1727
        %2019 = vmatpush.msra.mxu0 %v1723
        %2020 = vmatpush.msra.mxu0 %v1719
        %2021 = vmatpush.msra.mxu0 %v1715
        %2022 = vmatpush.msra.mxu0 %v1711
        %2023 = vmatpush.msra.mxu0 %v1707
        %2024 = vmatpush.msra.mxu0 %v1703
        %2025 = vmatpush.msra.mxu0 %v1699
        %2026 = vmatpush.msra.mxu0 %v1695
        %2027 = vmatpush.msra.mxu0 %v1691
        %2028 = vmatpush.msra.mxu0 %v1687
        %2029 = vmatpush.msra.mxu0 %v1683
        %2030 = vmatpush.msra.mxu0 %v1679
        %2031 = vmatmul.f32.gmra.mxu0 %v1547
        %v2032 = vpop.f32.mrf.mxu0
        %v2033 = vadd.f32 %v2013, %v2032
        %2034 = vdwg.mxu0
        %2035 = vmatpush.msra.mxu0 %v1803
        %2036 = vmatpush.msra.mxu0 %v1799
        %2037 = vmatpush.msra.mxu0 %v1795
        %2038 = vmatpush.msra.mxu0 %v1791
        %2039 = vmatpush.msra.mxu0 %v1787
        %2040 = vmatpush.msra.mxu0 %v1783
        %2041 = vmatpush.msra.mxu0 %v1779
        %2042 = vmatpush.msra.mxu0 %v1775
        %2043 = vmatpush.msra.mxu0 %v1771
        %2044 = vmatpush.msra.mxu0 %v1767
        %2045 = vmatpush.msra.mxu0 %v1763
        %2046 = vmatpush.msra.mxu0 %v1759
        %2047 = vmatpush.msra.mxu0 %v1755
        %2048 = vmatpush.msra.mxu0 %v1751
        %2049 = vmatpush.msra.mxu0 %v1747
        %2050 = vmatpush.msra.mxu0 %v1743
        %2051 = vmatmul.f32.gmra.mxu0 %v1548
        %v2052 = vpop.f32.mrf.mxu0
        %v2053 = vadd.f32 %v2033, %v2052
        %2054 = vdwg.mxu0
        %2055 = vmatpush.msra.mxu0 %v1612
        %2056 = vmatpush.msra.mxu0 %v1608
        %2057 = vmatpush.msra.mxu0 %v1604
        %2058 = vmatpush.msra.mxu0 %v1600
        %2059 = vmatpush.msra.mxu0 %v1596
        %2060 = vmatpush.msra.mxu0 %v1592
        %2061 = vmatpush.msra.mxu0 %v1588
        %2062 = vmatpush.msra.mxu0 %v1584
        %2063 = vmatpush.msra.mxu0 %v1580
        %2064 = vmatpush.msra.mxu0 %v1576
        %2065 = vmatpush.msra.mxu0 %v1572
        %2066 = vmatpush.msra.mxu0 %v1568
        %2067 = vmatpush.msra.mxu0 %v1564
        %2068 = vmatpush.msra.mxu0 %v1560
        %2069 = vmatpush.msra.mxu0 %v1556
        %2070 = vmatpush.msra.mxu0 %v1552
        %2071 = vmatmul.f32.gmra.mxu0 %v1545
        %v2072 = vpop.f32.mrf.mxu0
        %v2073 = vadd.f32 %v1810, %v2072
        %2074 = vdwg.mxu0
        %2075 = vmatpush.msra.mxu0 %v1676
        %2076 = vmatpush.msra.mxu0 %v1672
        %2077 = vmatpush.msra.mxu0 %v1668
        %2078 = vmatpush.msra.mxu0 %v1664
        %2079 = vmatpush.msra.mxu0 %v1660
        %2080 = vmatpush.msra.mxu0 %v1656
        %2081 = vmatpush.msra.mxu0 %v1652
        %2082 = vmatpush.msra.mxu0 %v1648
        %2083 = vmatpush.msra.mxu0 %v1644
        %2084 = vmatpush.msra.mxu0 %v1640
        %2085 = vmatpush.msra.mxu0 %v1636
        %2086 = vmatpush.msra.mxu0 %v1632
        %2087 = vmatpush.msra.mxu0 %v1628
        %2088 = vmatpush.msra.mxu0 %v1624
        %2089 = vmatpush.msra.mxu0 %v1620
        %2090 = vmatpush.msra.mxu0 %v1616
        %2091 = vmatmul.f32.gmra.mxu0 %v1546
        %v2092 = vpop.f32.mrf.mxu0
        %v2093 = vadd.f32 %v2073, %v2092
        %2094 = vdwg.mxu0
        %2095 = vmatpush.msra.mxu0 %v1740
        %2096 = vmatpush.msra.mxu0 %v1736
        %2097 = vmatpush.msra.mxu0 %v1732
        %2098 = vmatpush.msra.mxu0 %v1728
        %2099 = vmatpush.msra.mxu0 %v1724
        %2100 = vmatpush.msra.mxu0 %v1720
        %2101 = vmatpush.msra.mxu0 %v1716
        %2102 = vmatpush.msra.mxu0 %v1712
        %2103 = vmatpush.msra.mxu0 %v1708
        %2104 = vmatpush.msra.mxu0 %v1704
        %2105 = vmatpush.msra.mxu0 %v1700
        %2106 = vmatpush.msra.mxu0 %v1696
        %2107 = vmatpush.msra.mxu0 %v1692
        %2108 = vmatpush.msra.mxu0 %v1688
        %2109 = vmatpush.msra.mxu0 %v1684
        %2110 = vmatpush.msra.mxu0 %v1680
        %2111 = vmatmul.f32.gmra.mxu0 %v1547
        %v2112 = vpop.f32.mrf.mxu0
        %v2113 = vadd.f32 %v2093, %v2112
        %2114 = vdwg.mxu0
        %2115 = vmatpush.msra.mxu0 %v1804
        %2116 = vmatpush.msra.mxu0 %v1800
        %2117 = vmatpush.msra.mxu0 %v1796
        %2118 = vmatpush.msra.mxu0 %v1792
        %2119 = vmatpush.msra.mxu0 %v1788
        %2120 = vmatpush.msra.mxu0 %v1784
        %2121 = vmatpush.msra.mxu0 %v1780
        %2122 = vmatpush.msra.mxu0 %v1776
        %2123 = vmatpush.msra.mxu0 %v1772
        %2124 = vmatpush.msra.mxu0 %v1768
        %2125 = vmatpush.msra.mxu0 %v1764
        %2126 = vmatpush.msra.mxu0 %v1760
        %2127 = vmatpush.msra.mxu0 %v1756
        %2128 = vmatpush.msra.mxu0 %v1752
        %2129 = vmatpush.msra.mxu0 %v1748
        %2130 = vmatpush.msra.mxu0 %v1744
        %2131 = vmatmul.f32.gmra.mxu0 %v1548
        %v2132 = vpop.f32.mrf.mxu0
        %v2133 = vadd.f32 %v2113, %v2132
        %2134 = vdwg.mxu0
        %v2135 = vmax.f32 %v1893, 0.0
        %v2136 = vmax.f32 %v1973, 0.0
        %v2137 = vmax.f32 %v2053, 0.0
        %v2138 = vmax.f32 %v2133, 0.0
        %v2139 = vld [vmem:[#allocation9] sm:$0xff]
        %v2140 = vld [vmem:[#allocation9 + $0x8] sm:$0xff]
        %v2141 = vld [vmem:[#allocation9 + $0x10] sm:$0xff]
        %v2142 = vld [vmem:[#allocation9 + $0x18] sm:$0xff]
        %v2143 = vld [vmem:[#allocation9 + $0x20] sm:$0xff]
        %v2144 = vld [vmem:[#allocation9 + $0x28] sm:$0xff]
        %v2145 = vld [vmem:[#allocation9 + $0x30] sm:$0xff]
        %v2146 = vld [vmem:[#allocation9 + $0x38] sm:$0xff]
        %v2147 = vld [vmem:[#allocation9 + $0x40] sm:$0xff]
        %v2148 = vld [vmem:[#allocation9 + $0x48] sm:$0xff]
        %v2149 = vld [vmem:[#allocation9 + $0x50] sm:$0xff]
        %v2150 = vld [vmem:[#allocation9 + $0x58] sm:$0xff]
        %v2151 = vld [vmem:[#allocation9 + $0x60] sm:$0xff]
        %v2152 = vld [vmem:[#allocation9 + $0x68] sm:$0xff]
        %v2153 = vld [vmem:[#allocation9 + $0x70] sm:$0xff]
        %v2154 = vld [vmem:[#allocation9 + $0x78] sm:$0xff]
        %v2155 = vld [vmem:[#allocation9 + $0x80] sm:$0xff]
        %v2156 = vld [vmem:[#allocation9 + $0x88] sm:$0xff]
        %v2157 = vld [vmem:[#allocation9 + $0x90] sm:$0xff]
        %v2158 = vld [vmem:[#allocation9 + $0x98] sm:$0xff]
        %v2159 = vld [vmem:[#allocation9 + $0xa0] sm:$0xff]
        %v2160 = vld [vmem:[#allocation9 + $0xa8] sm:$0xff]
        %v2161 = vld [vmem:[#allocation9 + $0xb0] sm:$0xff]
        %v2162 = vld [vmem:[#allocation9 + $0xb8] sm:$0xff]
        %v2163 = vld [vmem:[#allocation9 + $0xc0] sm:$0xff]
        %v2164 = vld [vmem:[#allocation9 + $0xc8] sm:$0xff]
        %v2165 = vld [vmem:[#allocation9 + $0xd0] sm:$0xff]
        %v2166 = vld [vmem:[#allocation9 + $0xd8] sm:$0xff]
        %v2167 = vld [vmem:[#allocation9 + $0xe0] sm:$0xff]
        %v2168 = vld [vmem:[#allocation9 + $0xe8] sm:$0xff]
        %v2169 = vld [vmem:[#allocation9 + $0xf0] sm:$0xff]
        %v2170 = vld [vmem:[#allocation9 + $0xf8] sm:$0xff]
        %v2171 = vld [vmem:[#allocation9 + $0x100] sm:$0xff]
        %v2172 = vld [vmem:[#allocation9 + $0x108] sm:$0xff]
        %v2173 = vld [vmem:[#allocation9 + $0x110] sm:$0xff]
        %v2174 = vld [vmem:[#allocation9 + $0x118] sm:$0xff]
        %v2175 = vld [vmem:[#allocation9 + $0x120] sm:$0xff]
        %v2176 = vld [vmem:[#allocation9 + $0x128] sm:$0xff]
        %v2177 = vld [vmem:[#allocation9 + $0x130] sm:$0xff]
        %v2178 = vld [vmem:[#allocation9 + $0x138] sm:$0xff]
        %v2179 = vld [vmem:[#allocation9 + $0x140] sm:$0xff]
        %v2180 = vld [vmem:[#allocation9 + $0x148] sm:$0xff]
        %v2181 = vld [vmem:[#allocation9 + $0x150] sm:$0xff]
        %v2182 = vld [vmem:[#allocation9 + $0x158] sm:$0xff]
        %v2183 = vld [vmem:[#allocation9 + $0x160] sm:$0xff]
        %v2184 = vld [vmem:[#allocation9 + $0x168] sm:$0xff]
        %v2185 = vld [vmem:[#allocation9 + $0x170] sm:$0xff]
        %v2186 = vld [vmem:[#allocation9 + $0x178] sm:$0xff]
        %v2187 = vld [vmem:[#allocation9 + $0x180] sm:$0xff]
        %v2188 = vld [vmem:[#allocation9 + $0x188] sm:$0xff]
        %v2189 = vld [vmem:[#allocation9 + $0x190] sm:$0xff]
        %v2190 = vld [vmem:[#allocation9 + $0x198] sm:$0xff]
        %v2191 = vld [vmem:[#allocation9 + $0x1a0] sm:$0xff]
        %v2192 = vld [vmem:[#allocation9 + $0x1a8] sm:$0xff]
        %v2193 = vld [vmem:[#allocation9 + $0x1b0] sm:$0xff]
        %v2194 = vld [vmem:[#allocation9 + $0x1b8] sm:$0xff]
        %v2195 = vld [vmem:[#allocation9 + $0x1c0] sm:$0xff]
        %v2196 = vld [vmem:[#allocation9 + $0x1c8] sm:$0xff]
        %v2197 = vld [vmem:[#allocation9 + $0x1d0] sm:$0xff]
        %v2198 = vld [vmem:[#allocation9 + $0x1d8] sm:$0xff]
        %v2199 = vld [vmem:[#allocation9 + $0x1e0] sm:$0xff]
        %v2200 = vld [vmem:[#allocation9 + $0x1e8] sm:$0xff]
        %v2201 = vld [vmem:[#allocation9 + $0x1f0] sm:$0xff]
        %v2202 = vld [vmem:[#allocation9 + $0x1f8] sm:$0xff]
        %v2203 = vld [vmem:[#allocation9 + $0x200] sm:$0xff]
        %v2204 = vld [vmem:[#allocation9 + $0x208] sm:$0xff]
        %v2205 = vld [vmem:[#allocation9 + $0x210] sm:$0xff]
        %v2206 = vld [vmem:[#allocation9 + $0x218] sm:$0xff]
        %v2207 = vld [vmem:[#allocation9 + $0x220] sm:$0xff]
        %v2208 = vld [vmem:[#allocation9 + $0x228] sm:$0xff]
        %v2209 = vld [vmem:[#allocation9 + $0x230] sm:$0xff]
        %v2210 = vld [vmem:[#allocation9 + $0x238] sm:$0xff]
        %v2211 = vld [vmem:[#allocation9 + $0x240] sm:$0xff]
        %v2212 = vld [vmem:[#allocation9 + $0x248] sm:$0xff]
        %v2213 = vld [vmem:[#allocation9 + $0x250] sm:$0xff]
        %v2214 = vld [vmem:[#allocation9 + $0x258] sm:$0xff]
        %v2215 = vld [vmem:[#allocation9 + $0x260] sm:$0xff]
        %v2216 = vld [vmem:[#allocation9 + $0x268] sm:$0xff]
        %v2217 = vld [vmem:[#allocation9 + $0x270] sm:$0xff]
        %v2218 = vld [vmem:[#allocation9 + $0x278] sm:$0xff]
        %v2219 = vld [vmem:[#allocation9 + $0x280] sm:$0xff]
        %v2220 = vld [vmem:[#allocation9 + $0x288] sm:$0xff]
        %v2221 = vld [vmem:[#allocation9 + $0x290] sm:$0xff]
        %v2222 = vld [vmem:[#allocation9 + $0x298] sm:$0xff]
        %v2223 = vld [vmem:[#allocation9 + $0x2a0] sm:$0xff]
        %v2224 = vld [vmem:[#allocation9 + $0x2a8] sm:$0xff]
        %v2225 = vld [vmem:[#allocation9 + $0x2b0] sm:$0xff]
        %v2226 = vld [vmem:[#allocation9 + $0x2b8] sm:$0xff]
        %v2227 = vld [vmem:[#allocation9 + $0x2c0] sm:$0xff]
        %v2228 = vld [vmem:[#allocation9 + $0x2c8] sm:$0xff]
        %v2229 = vld [vmem:[#allocation9 + $0x2d0] sm:$0xff]
        %v2230 = vld [vmem:[#allocation9 + $0x2d8] sm:$0xff]
        %v2231 = vld [vmem:[#allocation9 + $0x2e0] sm:$0xff]
        %v2232 = vld [vmem:[#allocation9 + $0x2e8] sm:$0xff]
        %v2233 = vld [vmem:[#allocation9 + $0x2f0] sm:$0xff]
        %v2234 = vld [vmem:[#allocation9 + $0x2f8] sm:$0xff]
        %v2235 = vld [vmem:[#allocation9 + $0x300] sm:$0xff]
        %v2236 = vld [vmem:[#allocation9 + $0x308] sm:$0xff]
        %v2237 = vld [vmem:[#allocation9 + $0x310] sm:$0xff]
        %v2238 = vld [vmem:[#allocation9 + $0x318] sm:$0xff]
        %v2239 = vld [vmem:[#allocation9 + $0x320] sm:$0xff]
        %v2240 = vld [vmem:[#allocation9 + $0x328] sm:$0xff]
        %v2241 = vld [vmem:[#allocation9 + $0x330] sm:$0xff]
        %v2242 = vld [vmem:[#allocation9 + $0x338] sm:$0xff]
        %v2243 = vld [vmem:[#allocation9 + $0x340] sm:$0xff]
        %v2244 = vld [vmem:[#allocation9 + $0x348] sm:$0xff]
        %v2245 = vld [vmem:[#allocation9 + $0x350] sm:$0xff]
        %v2246 = vld [vmem:[#allocation9 + $0x358] sm:$0xff]
        %v2247 = vld [vmem:[#allocation9 + $0x360] sm:$0xff]
        %v2248 = vld [vmem:[#allocation9 + $0x368] sm:$0xff]
        %v2249 = vld [vmem:[#allocation9 + $0x370] sm:$0xff]
        %v2250 = vld [vmem:[#allocation9 + $0x378] sm:$0xff]
        %v2251 = vld [vmem:[#allocation9 + $0x380] sm:$0xff]
        %v2252 = vld [vmem:[#allocation9 + $0x388] sm:$0xff]
        %v2253 = vld [vmem:[#allocation9 + $0x390] sm:$0xff]
        %v2254 = vld [vmem:[#allocation9 + $0x398] sm:$0xff]
        %v2255 = vld [vmem:[#allocation9 + $0x3a0] sm:$0xff]
        %v2256 = vld [vmem:[#allocation9 + $0x3a8] sm:$0xff]
        %v2257 = vld [vmem:[#allocation9 + $0x3b0] sm:$0xff]
        %v2258 = vld [vmem:[#allocation9 + $0x3b8] sm:$0xff]
        %v2259 = vld [vmem:[#allocation9 + $0x3c0] sm:$0xff]
        %v2260 = vld [vmem:[#allocation9 + $0x3c8] sm:$0xff]
        %v2261 = vld [vmem:[#allocation9 + $0x3d0] sm:$0xff]
        %v2262 = vld [vmem:[#allocation9 + $0x3d8] sm:$0xff]
        %v2263 = vld [vmem:[#allocation9 + $0x3e0] sm:$0xff]
        %v2264 = vld [vmem:[#allocation9 + $0x3e8] sm:$0xff]
        %v2265 = vld [vmem:[#allocation9 + $0x3f0] sm:$0xff]
        %v2266 = vld [vmem:[#allocation9 + $0x3f8] sm:$0xff]
        %v2267 = vld [vmem:[#allocation9 + $0x400] sm:$0xff]
        %v2268 = vld [vmem:[#allocation9 + $0x408] sm:$0xff]
        %v2269 = vld [vmem:[#allocation9 + $0x410] sm:$0xff]
        %v2270 = vld [vmem:[#allocation9 + $0x418] sm:$0xff]
        %v2271 = vld [vmem:[#allocation9 + $0x420] sm:$0xff]
        %v2272 = vld [vmem:[#allocation9 + $0x428] sm:$0xff]
        %v2273 = vld [vmem:[#allocation9 + $0x430] sm:$0xff]
        %v2274 = vld [vmem:[#allocation9 + $0x438] sm:$0xff]
        %v2275 = vld [vmem:[#allocation9 + $0x440] sm:$0xff]
        %v2276 = vld [vmem:[#allocation9 + $0x448] sm:$0xff]
        %v2277 = vld [vmem:[#allocation9 + $0x450] sm:$0xff]
        %v2278 = vld [vmem:[#allocation9 + $0x458] sm:$0xff]
        %v2279 = vld [vmem:[#allocation9 + $0x460] sm:$0xff]
        %v2280 = vld [vmem:[#allocation9 + $0x468] sm:$0xff]
        %v2281 = vld [vmem:[#allocation9 + $0x470] sm:$0xff]
        %v2282 = vld [vmem:[#allocation9 + $0x478] sm:$0xff]
        %v2283 = vld [vmem:[#allocation9 + $0x480] sm:$0xff]
        %v2284 = vld [vmem:[#allocation9 + $0x488] sm:$0xff]
        %v2285 = vld [vmem:[#allocation9 + $0x490] sm:$0xff]
        %v2286 = vld [vmem:[#allocation9 + $0x498] sm:$0xff]
        %v2287 = vld [vmem:[#allocation9 + $0x4a0] sm:$0xff]
        %v2288 = vld [vmem:[#allocation9 + $0x4a8] sm:$0xff]
        %v2289 = vld [vmem:[#allocation9 + $0x4b0] sm:$0xff]
        %v2290 = vld [vmem:[#allocation9 + $0x4b8] sm:$0xff]
        %v2291 = vld [vmem:[#allocation9 + $0x4c0] sm:$0xff]
        %v2292 = vld [vmem:[#allocation9 + $0x4c8] sm:$0xff]
        %v2293 = vld [vmem:[#allocation9 + $0x4d0] sm:$0xff]
        %v2294 = vld [vmem:[#allocation9 + $0x4d8] sm:$0xff]
        %v2295 = vld [vmem:[#allocation9 + $0x4e0] sm:$0xff]
        %v2296 = vld [vmem:[#allocation9 + $0x4e8] sm:$0xff]
        %v2297 = vld [vmem:[#allocation9 + $0x4f0] sm:$0xff]
        %v2298 = vld [vmem:[#allocation9 + $0x4f8] sm:$0xff]
        %v2299 = vld [vmem:[#allocation9 + $0x500] sm:$0xff]
        %v2300 = vld [vmem:[#allocation9 + $0x508] sm:$0xff]
        %v2301 = vld [vmem:[#allocation9 + $0x510] sm:$0xff]
        %v2302 = vld [vmem:[#allocation9 + $0x518] sm:$0xff]
        %v2303 = vld [vmem:[#allocation9 + $0x520] sm:$0xff]
        %v2304 = vld [vmem:[#allocation9 + $0x528] sm:$0xff]
        %v2305 = vld [vmem:[#allocation9 + $0x530] sm:$0xff]
        %v2306 = vld [vmem:[#allocation9 + $0x538] sm:$0xff]
        %v2307 = vld [vmem:[#allocation9 + $0x540] sm:$0xff]
        %v2308 = vld [vmem:[#allocation9 + $0x548] sm:$0xff]
        %v2309 = vld [vmem:[#allocation9 + $0x550] sm:$0xff]
        %v2310 = vld [vmem:[#allocation9 + $0x558] sm:$0xff]
        %v2311 = vld [vmem:[#allocation9 + $0x560] sm:$0xff]
        %v2312 = vld [vmem:[#allocation9 + $0x568] sm:$0xff]
        %v2313 = vld [vmem:[#allocation9 + $0x570] sm:$0xff]
        %v2314 = vld [vmem:[#allocation9 + $0x578] sm:$0xff]
        %v2315 = vld [vmem:[#allocation9 + $0x580] sm:$0xff]
        %v2316 = vld [vmem:[#allocation9 + $0x588] sm:$0xff]
        %v2317 = vld [vmem:[#allocation9 + $0x590] sm:$0xff]
        %v2318 = vld [vmem:[#allocation9 + $0x598] sm:$0xff]
        %v2319 = vld [vmem:[#allocation9 + $0x5a0] sm:$0xff]
        %v2320 = vld [vmem:[#allocation9 + $0x5a8] sm:$0xff]
        %v2321 = vld [vmem:[#allocation9 + $0x5b0] sm:$0xff]
        %v2322 = vld [vmem:[#allocation9 + $0x5b8] sm:$0xff]
        %v2323 = vld [vmem:[#allocation9 + $0x5c0] sm:$0xff]
        %v2324 = vld [vmem:[#allocation9 + $0x5c8] sm:$0xff]
        %v2325 = vld [vmem:[#allocation9 + $0x5d0] sm:$0xff]
        %v2326 = vld [vmem:[#allocation9 + $0x5d8] sm:$0xff]
        %v2327 = vld [vmem:[#allocation9 + $0x5e0] sm:$0xff]
        %v2328 = vld [vmem:[#allocation9 + $0x5e8] sm:$0xff]
        %v2329 = vld [vmem:[#allocation9 + $0x5f0] sm:$0xff]
        %v2330 = vld [vmem:[#allocation9 + $0x5f8] sm:$0xff]
        %v2331 = vld [vmem:[#allocation9 + $0x600] sm:$0xff]
        %v2332 = vld [vmem:[#allocation9 + $0x608] sm:$0xff]
        %v2333 = vld [vmem:[#allocation9 + $0x610] sm:$0xff]
        %v2334 = vld [vmem:[#allocation9 + $0x618] sm:$0xff]
        %v2335 = vld [vmem:[#allocation9 + $0x620] sm:$0xff]
        %v2336 = vld [vmem:[#allocation9 + $0x628] sm:$0xff]
        %v2337 = vld [vmem:[#allocation9 + $0x630] sm:$0xff]
        %v2338 = vld [vmem:[#allocation9 + $0x638] sm:$0xff]
        %v2339 = vld [vmem:[#allocation9 + $0x640] sm:$0xff]
        %v2340 = vld [vmem:[#allocation9 + $0x648] sm:$0xff]
        %v2341 = vld [vmem:[#allocation9 + $0x650] sm:$0xff]
        %v2342 = vld [vmem:[#allocation9 + $0x658] sm:$0xff]
        %v2343 = vld [vmem:[#allocation9 + $0x660] sm:$0xff]
        %v2344 = vld [vmem:[#allocation9 + $0x668] sm:$0xff]
        %v2345 = vld [vmem:[#allocation9 + $0x670] sm:$0xff]
        %v2346 = vld [vmem:[#allocation9 + $0x678] sm:$0xff]
        %v2347 = vld [vmem:[#allocation9 + $0x680] sm:$0xff]
        %v2348 = vld [vmem:[#allocation9 + $0x688] sm:$0xff]
        %v2349 = vld [vmem:[#allocation9 + $0x690] sm:$0xff]
        %v2350 = vld [vmem:[#allocation9 + $0x698] sm:$0xff]
        %v2351 = vld [vmem:[#allocation9 + $0x6a0] sm:$0xff]
        %v2352 = vld [vmem:[#allocation9 + $0x6a8] sm:$0xff]
        %v2353 = vld [vmem:[#allocation9 + $0x6b0] sm:$0xff]
        %v2354 = vld [vmem:[#allocation9 + $0x6b8] sm:$0xff]
        %v2355 = vld [vmem:[#allocation9 + $0x6c0] sm:$0xff]
        %v2356 = vld [vmem:[#allocation9 + $0x6c8] sm:$0xff]
        %v2357 = vld [vmem:[#allocation9 + $0x6d0] sm:$0xff]
        %v2358 = vld [vmem:[#allocation9 + $0x6d8] sm:$0xff]
        %v2359 = vld [vmem:[#allocation9 + $0x6e0] sm:$0xff]
        %v2360 = vld [vmem:[#allocation9 + $0x6e8] sm:$0xff]
        %v2361 = vld [vmem:[#allocation9 + $0x6f0] sm:$0xff]
        %v2362 = vld [vmem:[#allocation9 + $0x6f8] sm:$0xff]
        %v2363 = vld [vmem:[#allocation9 + $0x700] sm:$0xff]
        %v2364 = vld [vmem:[#allocation9 + $0x708] sm:$0xff]
        %v2365 = vld [vmem:[#allocation9 + $0x710] sm:$0xff]
        %v2366 = vld [vmem:[#allocation9 + $0x718] sm:$0xff]
        %v2367 = vld [vmem:[#allocation9 + $0x720] sm:$0xff]
        %v2368 = vld [vmem:[#allocation9 + $0x728] sm:$0xff]
        %v2369 = vld [vmem:[#allocation9 + $0x730] sm:$0xff]
        %v2370 = vld [vmem:[#allocation9 + $0x738] sm:$0xff]
        %v2371 = vld [vmem:[#allocation9 + $0x740] sm:$0xff]
        %v2372 = vld [vmem:[#allocation9 + $0x748] sm:$0xff]
        %v2373 = vld [vmem:[#allocation9 + $0x750] sm:$0xff]
        %v2374 = vld [vmem:[#allocation9 + $0x758] sm:$0xff]
        %v2375 = vld [vmem:[#allocation9 + $0x760] sm:$0xff]
        %v2376 = vld [vmem:[#allocation9 + $0x768] sm:$0xff]
        %v2377 = vld [vmem:[#allocation9 + $0x770] sm:$0xff]
        %v2378 = vld [vmem:[#allocation9 + $0x778] sm:$0xff]
        %v2379 = vld [vmem:[#allocation9 + $0x780] sm:$0xff]
        %v2380 = vld [vmem:[#allocation9 + $0x788] sm:$0xff]
        %v2381 = vld [vmem:[#allocation9 + $0x790] sm:$0xff]
        %v2382 = vld [vmem:[#allocation9 + $0x798] sm:$0xff]
        %v2383 = vld [vmem:[#allocation9 + $0x7a0] sm:$0xff]
        %v2384 = vld [vmem:[#allocation9 + $0x7a8] sm:$0xff]
        %v2385 = vld [vmem:[#allocation9 + $0x7b0] sm:$0xff]
        %v2386 = vld [vmem:[#allocation9 + $0x7b8] sm:$0xff]
        %v2387 = vld [vmem:[#allocation9 + $0x7c0] sm:$0xff]
        %v2388 = vld [vmem:[#allocation9 + $0x7c8] sm:$0xff]
        %v2389 = vld [vmem:[#allocation9 + $0x7d0] sm:$0xff]
        %v2390 = vld [vmem:[#allocation9 + $0x7d8] sm:$0xff]
        %v2391 = vld [vmem:[#allocation9 + $0x7e0] sm:$0xff]
        %v2392 = vld [vmem:[#allocation9 + $0x7e8] sm:$0xff]
        %v2393 = vld [vmem:[#allocation9 + $0x7f0] sm:$0xff]
        %v2394 = vld [vmem:[#allocation9 + $0x7f8] sm:$0xff]
        %2395 = vmatpush.msra.mxu0 %v2199
        %2396 = vmatpush.msra.mxu0 %v2195
        %2397 = vmatpush.msra.mxu0 %v2191
        %2398 = vmatpush.msra.mxu0 %v2187
        %2399 = vmatpush.msra.mxu0 %v2183
        %2400 = vmatpush.msra.mxu0 %v2179
        %2401 = vmatpush.msra.mxu0 %v2175
        %2402 = vmatpush.msra.mxu0 %v2171
        %2403 = vmatpush.msra.mxu0 %v2167
        %2404 = vmatpush.msra.mxu0 %v2163
        %2405 = vmatpush.msra.mxu0 %v2159
        %2406 = vmatpush.msra.mxu0 %v2155
        %2407 = vmatpush.msra.mxu0 %v2151
        %2408 = vmatpush.msra.mxu0 %v2147
        %2409 = vmatpush.msra.mxu0 %v2143
        %2410 = vmatpush.msra.mxu0 %v2139
        %2411 = vmatmul.f32.gmra.mxu0 %v2135
        %v2412 = vpop.f32.mrf.mxu0
        %v2413 = vadd.f32 0.0, %v2412
        %2414 = vdwg.mxu0
        %2415 = vmatpush.msra.mxu0 %v2263
        %2416 = vmatpush.msra.mxu0 %v2259
        %2417 = vmatpush.msra.mxu0 %v2255
        %2418 = vmatpush.msra.mxu0 %v2251
        %2419 = vmatpush.msra.mxu0 %v2247
        %2420 = vmatpush.msra.mxu0 %v2243
        %2421 = vmatpush.msra.mxu0 %v2239
        %2422 = vmatpush.msra.mxu0 %v2235
        %2423 = vmatpush.msra.mxu0 %v2231
        %2424 = vmatpush.msra.mxu0 %v2227
        %2425 = vmatpush.msra.mxu0 %v2223
        %2426 = vmatpush.msra.mxu0 %v2219
        %2427 = vmatpush.msra.mxu0 %v2215
        %2428 = vmatpush.msra.mxu0 %v2211
        %2429 = vmatpush.msra.mxu0 %v2207
        %2430 = vmatpush.msra.mxu0 %v2203
        %2431 = vmatmul.f32.gmra.mxu0 %v2136
        %v2432 = vpop.f32.mrf.mxu0
        %v2433 = vadd.f32 %v2413, %v2432
        %2434 = vdwg.mxu0
        %2435 = vmatpush.msra.mxu0 %v2327
        %2436 = vmatpush.msra.mxu0 %v2323
        %2437 = vmatpush.msra.mxu0 %v2319
        %2438 = vmatpush.msra.mxu0 %v2315
        %2439 = vmatpush.msra.mxu0 %v2311
        %2440 = vmatpush.msra.mxu0 %v2307
        %2441 = vmatpush.msra.mxu0 %v2303
        %2442 = vmatpush.msra.mxu0 %v2299
        %2443 = vmatpush.msra.mxu0 %v2295
        %2444 = vmatpush.msra.mxu0 %v2291
        %2445 = vmatpush.msra.mxu0 %v2287
        %2446 = vmatpush.msra.mxu0 %v2283
        %2447 = vmatpush.msra.mxu0 %v2279
        %2448 = vmatpush.msra.mxu0 %v2275
        %2449 = vmatpush.msra.mxu0 %v2271
        %2450 = vmatpush.msra.mxu0 %v2267
        %2451 = vmatmul.f32.gmra.mxu0 %v2137
        %v2452 = vpop.f32.mrf.mxu0
        %v2453 = vadd.f32 %v2433, %v2452
        %2454 = vdwg.mxu0
        %2455 = vmatpush.msra.mxu0 %v2391
        %2456 = vmatpush.msra.mxu0 %v2387
        %2457 = vmatpush.msra.mxu0 %v2383
        %2458 = vmatpush.msra.mxu0 %v2379
        %2459 = vmatpush.msra.mxu0 %v2375
        %2460 = vmatpush.msra.mxu0 %v2371
        %2461 = vmatpush.msra.mxu0 %v2367
        %2462 = vmatpush.msra.mxu0 %v2363
        %2463 = vmatpush.msra.mxu0 %v2359
        %2464 = vmatpush.msra.mxu0 %v2355
        %2465 = vmatpush.msra.mxu0 %v2351
        %2466 = vmatpush.msra.mxu0 %v2347
        %2467 = vmatpush.msra.mxu0 %v2343
        %2468 = vmatpush.msra.mxu0 %v2339
        %2469 = vmatpush.msra.mxu0 %v2335
        %2470 = vmatpush.msra.mxu0 %v2331
        %2471 = vmatmul.f32.gmra.mxu0 %v2138
        %v2472 = vpop.f32.mrf.mxu0
        %v2473 = vadd.f32 %v2453, %v2472
        %2474 = vdwg.mxu0
        %2475 = vmatpush.msra.mxu0 %v2200
        %2476 = vmatpush.msra.mxu0 %v2196
        %2477 = vmatpush.msra.mxu0 %v2192
        %2478 = vmatpush.msra.mxu0 %v2188
        %2479 = vmatpush.msra.mxu0 %v2184
        %2480 = vmatpush.msra.mxu0 %v2180
        %2481 = vmatpush.msra.mxu0 %v2176
        %2482 = vmatpush.msra.mxu0 %v2172
        %2483 = vmatpush.msra.mxu0 %v2168
        %2484 = vmatpush.msra.mxu0 %v2164
        %2485 = vmatpush.msra.mxu0 %v2160
        %2486 = vmatpush.msra.mxu0 %v2156
        %2487 = vmatpush.msra.mxu0 %v2152
        %2488 = vmatpush.msra.mxu0 %v2148
        %2489 = vmatpush.msra.mxu0 %v2144
        %2490 = vmatpush.msra.mxu0 %v2140
        %2491 = vmatmul.f32.gmra.mxu0 %v2135
        %v2492 = vpop.f32.mrf.mxu0
        %v2493 = vadd.f32 0.0, %v2492
        %2494 = vdwg.mxu0
        %2495 = vmatpush.msra.mxu0 %v2264
        %2496 = vmatpush.msra.mxu0 %v2260
        %2497 = vmatpush.msra.mxu0 %v2256
        %2498 = vmatpush.msra.mxu0 %v2252
        %2499 = vmatpush.msra.mxu0 %v2248
        %2500 = vmatpush.msra.mxu0 %v2244
        %2501 = vmatpush.msra.mxu0 %v2240
        %2502 = vmatpush.msra.mxu0 %v2236
        %2503 = vmatpush.msra.mxu0 %v2232
        %2504 = vmatpush.msra.mxu0 %v2228
        %2505 = vmatpush.msra.mxu0 %v2224
        %2506 = vmatpush.msra.mxu0 %v2220
        %2507 = vmatpush.msra.mxu0 %v2216
        %2508 = vmatpush.msra.mxu0 %v2212
        %2509 = vmatpush.msra.mxu0 %v2208
        %2510 = vmatpush.msra.mxu0 %v2204
        %2511 = vmatmul.f32.gmra.mxu0 %v2136
        %v2512 = vpop.f32.mrf.mxu0
        %v2513 = vadd.f32 %v2493, %v2512
        %2514 = vdwg.mxu0
        %2515 = vmatpush.msra.mxu0 %v2328
        %2516 = vmatpush.msra.mxu0 %v2324
        %2517 = vmatpush.msra.mxu0 %v2320
        %2518 = vmatpush.msra.mxu0 %v2316
        %2519 = vmatpush.msra.mxu0 %v2312
        %2520 = vmatpush.msra.mxu0 %v2308
        %2521 = vmatpush.msra.mxu0 %v2304
        %2522 = vmatpush.msra.mxu0 %v2300
        %2523 = vmatpush.msra.mxu0 %v2296
        %2524 = vmatpush.msra.mxu0 %v2292
        %2525 = vmatpush.msra.mxu0 %v2288
        %2526 = vmatpush.msra.mxu0 %v2284
        %2527 = vmatpush.msra.mxu0 %v2280
        %2528 = vmatpush.msra.mxu0 %v2276
        %2529 = vmatpush.msra.mxu0 %v2272
        %2530 = vmatpush.msra.mxu0 %v2268
        %2531 = vmatmul.f32.gmra.mxu0 %v2137
        %v2532 = vpop.f32.mrf.mxu0
        %v2533 = vadd.f32 %v2513, %v2532
        %2534 = vdwg.mxu0
        %2535 = vmatpush.msra.mxu0 %v2392
        %2536 = vmatpush.msra.mxu0 %v2388
        %2537 = vmatpush.msra.mxu0 %v2384
        %2538 = vmatpush.msra.mxu0 %v2380
        %2539 = vmatpush.msra.mxu0 %v2376
        %2540 = vmatpush.msra.mxu0 %v2372
        %2541 = vmatpush.msra.mxu0 %v2368
        %2542 = vmatpush.msra.mxu0 %v2364
        %2543 = vmatpush.msra.mxu0 %v2360
        %2544 = vmatpush.msra.mxu0 %v2356
        %2545 = vmatpush.msra.mxu0 %v2352
        %2546 = vmatpush.msra.mxu0 %v2348
        %2547 = vmatpush.msra.mxu0 %v2344
        %2548 = vmatpush.msra.mxu0 %v2340
        %2549 = vmatpush.msra.mxu0 %v2336
        %2550 = vmatpush.msra.mxu0 %v2332
        %2551 = vmatmul.f32.gmra.mxu0 %v2138
        %v2552 = vpop.f32.mrf.mxu0
        %v2553 = vadd.f32 %v2533, %v2552
        %2554 = vdwg.mxu0
        %2555 = vmatpush.msra.mxu0 %v2201
        %2556 = vmatpush.msra.mxu0 %v2197
        %2557 = vmatpush.msra.mxu0 %v2193
        %2558 = vmatpush.msra.mxu0 %v2189
        %2559 = vmatpush.msra.mxu0 %v2185
        %2560 = vmatpush.msra.mxu0 %v2181
        %2561 = vmatpush.msra.mxu0 %v2177
        %2562 = vmatpush.msra.mxu0 %v2173
        %2563 = vmatpush.msra.mxu0 %v2169
        %2564 = vmatpush.msra.mxu0 %v2165
        %2565 = vmatpush.msra.mxu0 %v2161
        %2566 = vmatpush.msra.mxu0 %v2157
        %2567 = vmatpush.msra.mxu0 %v2153
        %2568 = vmatpush.msra.mxu0 %v2149
        %2569 = vmatpush.msra.mxu0 %v2145
        %2570 = vmatpush.msra.mxu0 %v2141
        %2571 = vmatmul.f32.gmra.mxu0 %v2135
        %v2572 = vpop.f32.mrf.mxu0
        %v2573 = vadd.f32 0.0, %v2572
        %2574 = vdwg.mxu0
        %2575 = vmatpush.msra.mxu0 %v2265
        %2576 = vmatpush.msra.mxu0 %v2261
        %2577 = vmatpush.msra.mxu0 %v2257
        %2578 = vmatpush.msra.mxu0 %v2253
        %2579 = vmatpush.msra.mxu0 %v2249
        %2580 = vmatpush.msra.mxu0 %v2245
        %2581 = vmatpush.msra.mxu0 %v2241
        %2582 = vmatpush.msra.mxu0 %v2237
        %2583 = vmatpush.msra.mxu0 %v2233
        %2584 = vmatpush.msra.mxu0 %v2229
        %2585 = vmatpush.msra.mxu0 %v2225
        %2586 = vmatpush.msra.mxu0 %v2221
        %2587 = vmatpush.msra.mxu0 %v2217
        %2588 = vmatpush.msra.mxu0 %v2213
        %2589 = vmatpush.msra.mxu0 %v2209
        %2590 = vmatpush.msra.mxu0 %v2205
        %2591 = vmatmul.f32.gmra.mxu0 %v2136
        %v2592 = vpop.f32.mrf.mxu0
        %v2593 = vadd.f32 %v2573, %v2592
        %2594 = vdwg.mxu0
        %2595 = vmatpush.msra.mxu0 %v2329
        %2596 = vmatpush.msra.mxu0 %v2325
        %2597 = vmatpush.msra.mxu0 %v2321
        %2598 = vmatpush.msra.mxu0 %v2317
        %2599 = vmatpush.msra.mxu0 %v2313
        %2600 = vmatpush.msra.mxu0 %v2309
        %2601 = vmatpush.msra.mxu0 %v2305
        %2602 = vmatpush.msra.mxu0 %v2301
        %2603 = vmatpush.msra.mxu0 %v2297
        %2604 = vmatpush.msra.mxu0 %v2293
        %2605 = vmatpush.msra.mxu0 %v2289
        %2606 = vmatpush.msra.mxu0 %v2285
        %2607 = vmatpush.msra.mxu0 %v2281
        %2608 = vmatpush.msra.mxu0 %v2277
        %2609 = vmatpush.msra.mxu0 %v2273
        %2610 = vmatpush.msra.mxu0 %v2269
        %2611 = vmatmul.f32.gmra.mxu0 %v2137
        %v2612 = vpop.f32.mrf.mxu0
        %v2613 = vadd.f32 %v2593, %v2612
        %2614 = vdwg.mxu0
        %2615 = vmatpush.msra.mxu0 %v2393
        %2616 = vmatpush.msra.mxu0 %v2389
        %2617 = vmatpush.msra.mxu0 %v2385
        %2618 = vmatpush.msra.mxu0 %v2381
        %2619 = vmatpush.msra.mxu0 %v2377
        %2620 = vmatpush.msra.mxu0 %v2373
        %2621 = vmatpush.msra.mxu0 %v2369
        %2622 = vmatpush.msra.mxu0 %v2365
        %2623 = vmatpush.msra.mxu0 %v2361
        %2624 = vmatpush.msra.mxu0 %v2357
        %2625 = vmatpush.msra.mxu0 %v2353
        %2626 = vmatpush.msra.mxu0 %v2349
        %2627 = vmatpush.msra.mxu0 %v2345
        %2628 = vmatpush.msra.mxu0 %v2341
        %2629 = vmatpush.msra.mxu0 %v2337
        %2630 = vmatpush.msra.mxu0 %v2333
        %2631 = vmatmul.f32.gmra.mxu0 %v2138
        %v2632 = vpop.f32.mrf.mxu0
        %v2633 = vadd.f32 %v2613, %v2632
        %2634 = vdwg.mxu0
        %2635 = vmatpush.msra.mxu0 %v2202
        %2636 = vmatpush.msra.mxu0 %v2198
        %2637 = vmatpush.msra.mxu0 %v2194
        %2638 = vmatpush.msra.mxu0 %v2190
        %2639 = vmatpush.msra.mxu0 %v2186
        %2640 = vmatpush.msra.mxu0 %v2182
        %2641 = vmatpush.msra.mxu0 %v2178
        %2642 = vmatpush.msra.mxu0 %v2174
        %2643 = vmatpush.msra.mxu0 %v2170
        %2644 = vmatpush.msra.mxu0 %v2166
        %2645 = vmatpush.msra.mxu0 %v2162
        %2646 = vmatpush.msra.mxu0 %v2158
        %2647 = vmatpush.msra.mxu0 %v2154
        %2648 = vmatpush.msra.mxu0 %v2150
        %2649 = vmatpush.msra.mxu0 %v2146
        %2650 = vmatpush.msra.mxu0 %v2142
        %2651 = vmatmul.f32.gmra.mxu0 %v2135
        %v2652 = vpop.f32.mrf.mxu0
        %v2653 = vadd.f32 0.0, %v2652
        %2654 = vdwg.mxu0
        %2655 = vmatpush.msra.mxu0 %v2266
        %2656 = vmatpush.msra.mxu0 %v2262
        %2657 = vmatpush.msra.mxu0 %v2258
        %2658 = vmatpush.msra.mxu0 %v2254
        %2659 = vmatpush.msra.mxu0 %v2250
        %2660 = vmatpush.msra.mxu0 %v2246
        %2661 = vmatpush.msra.mxu0 %v2242
        %2662 = vmatpush.msra.mxu0 %v2238
        %2663 = vmatpush.msra.mxu0 %v2234
        %2664 = vmatpush.msra.mxu0 %v2230
        %2665 = vmatpush.msra.mxu0 %v2226
        %2666 = vmatpush.msra.mxu0 %v2222
        %2667 = vmatpush.msra.mxu0 %v2218
        %2668 = vmatpush.msra.mxu0 %v2214
        %2669 = vmatpush.msra.mxu0 %v2210
        %2670 = vmatpush.msra.mxu0 %v2206
        %2671 = vmatmul.f32.gmra.mxu0 %v2136
        %v2672 = vpop.f32.mrf.mxu0
        %v2673 = vadd.f32 %v2653, %v2672
        %2674 = vdwg.mxu0
        %2675 = vmatpush.msra.mxu0 %v2330
        %2676 = vmatpush.msra.mxu0 %v2326
        %2677 = vmatpush.msra.mxu0 %v2322
        %2678 = vmatpush.msra.mxu0 %v2318
        %2679 = vmatpush.msra.mxu0 %v2314
        %2680 = vmatpush.msra.mxu0 %v2310
        %2681 = vmatpush.msra.mxu0 %v2306
        %2682 = vmatpush.msra.mxu0 %v2302
        %2683 = vmatpush.msra.mxu0 %v2298
        %2684 = vmatpush.msra.mxu0 %v2294
        %2685 = vmatpush.msra.mxu0 %v2290
        %2686 = vmatpush.msra.mxu0 %v2286
        %2687 = vmatpush.msra.mxu0 %v2282
        %2688 = vmatpush.msra.mxu0 %v2278
        %2689 = vmatpush.msra.mxu0 %v2274
        %2690 = vmatpush.msra.mxu0 %v2270
        %2691 = vmatmul.f32.gmra.mxu0 %v2137
        %v2692 = vpop.f32.mrf.mxu0
        %v2693 = vadd.f32 %v2673, %v2692
        %2694 = vdwg.mxu0
        %2695 = vmatpush.msra.mxu0 %v2394
        %2696 = vmatpush.msra.mxu0 %v2390
        %2697 = vmatpush.msra.mxu0 %v2386
        %2698 = vmatpush.msra.mxu0 %v2382
        %2699 = vmatpush.msra.mxu0 %v2378
        %2700 = vmatpush.msra.mxu0 %v2374
        %2701 = vmatpush.msra.mxu0 %v2370
        %2702 = vmatpush.msra.mxu0 %v2366
        %2703 = vmatpush.msra.mxu0 %v2362
        %2704 = vmatpush.msra.mxu0 %v2358
        %2705 = vmatpush.msra.mxu0 %v2354
        %2706 = vmatpush.msra.mxu0 %v2350
        %2707 = vmatpush.msra.mxu0 %v2346
        %2708 = vmatpush.msra.mxu0 %v2342
        %2709 = vmatpush.msra.mxu0 %v2338
        %2710 = vmatpush.msra.mxu0 %v2334
        %2711 = vmatmul.f32.gmra.mxu0 %v2138
        %v2712 = vpop.f32.mrf.mxu0
        %v2713 = vadd.f32 %v2693, %v2712
        %2714 = vdwg.mxu0
        %v2715 = vld [vmem:[#allocation11] sm:$0xff]
        %v2716 = vld [vmem:[#allocation11 + $0x8] sm:$0xff]
        %v2717 = vld [vmem:[#allocation11 + $0x10] sm:$0xff]
        %v2718 = vld [vmem:[#allocation11 + $0x18] sm:$0xff]
        %v2719 = vld [vmem:[#allocation11 + $0x20] sm:$0xff]
        %v2720 = vld [vmem:[#allocation11 + $0x28] sm:$0xff]
        %v2721 = vld [vmem:[#allocation11 + $0x30] sm:$0xff]
        %v2722 = vld [vmem:[#allocation11 + $0x38] sm:$0xff]
        %v2723 = vld [vmem:[#allocation11 + $0x40] sm:$0xff]
        %v2724 = vld [vmem:[#allocation11 + $0x48] sm:$0xff]
        %v2725 = vld [vmem:[#allocation11 + $0x50] sm:$0xff]
        %v2726 = vld [vmem:[#allocation11 + $0x58] sm:$0xff]
        %v2727 = vld [vmem:[#allocation11 + $0x60] sm:$0xff]
        %v2728 = vld [vmem:[#allocation11 + $0x68] sm:$0xff]
        %v2729 = vld [vmem:[#allocation11 + $0x70] sm:$0xff]
        %v2730 = vld [vmem:[#allocation11 + $0x78] sm:$0xff]
        %v2731 = vld [vmem:[#allocation11 + $0x80] sm:$0xff]
        %v2732 = vld [vmem:[#allocation11 + $0x88] sm:$0xff]
        %v2733 = vld [vmem:[#allocation11 + $0x90] sm:$0xff]
        %v2734 = vld [vmem:[#allocation11 + $0x98] sm:$0xff]
        %v2735 = vld [vmem:[#allocation11 + $0xa0] sm:$0xff]
        %v2736 = vld [vmem:[#allocation11 + $0xa8] sm:$0xff]
        %v2737 = vld [vmem:[#allocation11 + $0xb0] sm:$0xff]
        %v2738 = vld [vmem:[#allocation11 + $0xb8] sm:$0xff]
        %v2739 = vld [vmem:[#allocation11 + $0xc0] sm:$0xff]
        %v2740 = vld [vmem:[#allocation11 + $0xc8] sm:$0xff]
        %v2741 = vld [vmem:[#allocation11 + $0xd0] sm:$0xff]
        %v2742 = vld [vmem:[#allocation11 + $0xd8] sm:$0xff]
        %v2743 = vld [vmem:[#allocation11 + $0xe0] sm:$0xff]
        %v2744 = vld [vmem:[#allocation11 + $0xe8] sm:$0xff]
        %v2745 = vld [vmem:[#allocation11 + $0xf0] sm:$0xff]
        %v2746 = vld [vmem:[#allocation11 + $0xf8] sm:$0xff]
        %2748 = vrot.lane.b32.xlu0 %v2473, 64
        %v2749 = vpop.permute.xlu0 %2748
        %v2751 = vmax.f32 %v2473, %v2749
        %v2752 = vmax.f32 %v2751, %v2553
        %2754 = vrot.lane.b32.xlu0 %v2553, 64
        %v2755 = vpop.permute.xlu0 %2754
        %v2757 = vmax.f32 %v2752, %v2755
        %v2758 = vmax.f32 %v2757, %v2633
        %2760 = vrot.lane.b32.xlu0 %v2633, 64
        %v2761 = vpop.permute.xlu0 %2760
        %v2763 = vmax.f32 %v2758, %v2761
        %v2764 = vmax.f32 %v2763, %v2713
        %2766 = vrot.lane.b32.xlu0 %v2713, 64
        %v2767 = vpop.permute.xlu0 %2766
        %v2769 = vmax.f32 %v2764, %v2767
        %vm2770 = vcmask 523264
        %v2772 = vsel %vm2770, %v2769, 0
        %2774 = vmatpush.msra.mxu0 0.0
        %2775 = vmatpush.msra.mxu0 0.0
        %2776 = vmatpush.msra.mxu0 0.0
        %2777 = vmatpush.msra.mxu0 0.0
        %2778 = vmatpush.msra.mxu0 0.0
        %2779 = vmatpush.msra.mxu0 0.0
        %2780 = vmatpush.msra.mxu0 0.0
        %2781 = vmatpush.msra.mxu0 0.0
        %2782 = vmatpush.msra.mxu0 %v2743
        %2783 = vmatpush.msra.mxu0 %v2739
        %2784 = vmatpush.msra.mxu0 %v2735
        %2785 = vmatpush.msra.mxu0 %v2731
        %2786 = vmatpush.msra.mxu0 %v2727
        %2787 = vmatpush.msra.mxu0 %v2723
        %2788 = vmatpush.msra.mxu0 %v2719
        %2789 = vmatpush.msra.mxu0 %v2715
        %2790 = vmatmul.f32.gmra.mxu0 %v2772
        %v2791 = vpop.f32.mrf.mxu0
        %v2792 = vadd.f32 0.0, %v2791
        %2793 = vdwg.mxu0
        %2794 = vmatpush.msra.mxu0 0.0
        %2795 = vmatpush.msra.mxu0 0.0
        %2796 = vmatpush.msra.mxu0 0.0
        %2797 = vmatpush.msra.mxu0 0.0
        %2798 = vmatpush.msra.mxu0 0.0
        %2799 = vmatpush.msra.mxu0 0.0
        %2800 = vmatpush.msra.mxu0 0.0
        %2801 = vmatpush.msra.mxu0 0.0
        %2802 = vmatpush.msra.mxu0 %v2744
        %2803 = vmatpush.msra.mxu0 %v2740
        %2804 = vmatpush.msra.mxu0 %v2736
        %2805 = vmatpush.msra.mxu0 %v2732
        %2806 = vmatpush.msra.mxu0 %v2728
        %2807 = vmatpush.msra.mxu0 %v2724
        %2808 = vmatpush.msra.mxu0 %v2720
        %2809 = vmatpush.msra.mxu0 %v2716
        %2810 = vmatmul.f32.gmra.mxu0 %v2772
        %v2811 = vpop.f32.mrf.mxu0
        %v2812 = vadd.f32 0.0, %v2811
        %2813 = vdwg.mxu0
        %2814 = vmatpush.msra.mxu0 0.0
        %2815 = vmatpush.msra.mxu0 0.0
        %2816 = vmatpush.msra.mxu0 0.0
        %2817 = vmatpush.msra.mxu0 0.0
        %2818 = vmatpush.msra.mxu0 0.0
        %2819 = vmatpush.msra.mxu0 0.0
        %2820 = vmatpush.msra.mxu0 0.0
        %2821 = vmatpush.msra.mxu0 0.0
        %2822 = vmatpush.msra.mxu0 %v2745
        %2823 = vmatpush.msra.mxu0 %v2741
        %2824 = vmatpush.msra.mxu0 %v2737
        %2825 = vmatpush.msra.mxu0 %v2733
        %2826 = vmatpush.msra.mxu0 %v2729
        %2827 = vmatpush.msra.mxu0 %v2725
        %2828 = vmatpush.msra.mxu0 %v2721
        %2829 = vmatpush.msra.mxu0 %v2717
        %2830 = vmatmul.f32.gmra.mxu0 %v2772
        %v2831 = vpop.f32.mrf.mxu0
        %v2832 = vadd.f32 0.0, %v2831
        %2833 = vdwg.mxu0
        %2834 = vmatpush.msra.mxu0 0.0
        %2835 = vmatpush.msra.mxu0 0.0
        %2836 = vmatpush.msra.mxu0 0.0
        %2837 = vmatpush.msra.mxu0 0.0
        %2838 = vmatpush.msra.mxu0 0.0
        %2839 = vmatpush.msra.mxu0 0.0
        %2840 = vmatpush.msra.mxu0 0.0
        %2841 = vmatpush.msra.mxu0 0.0
        %2842 = vmatpush.msra.mxu0 %v2746
        %2843 = vmatpush.msra.mxu0 %v2742
        %2844 = vmatpush.msra.mxu0 %v2738
        %2845 = vmatpush.msra.mxu0 %v2734
        %2846 = vmatpush.msra.mxu0 %v2730
        %2847 = vmatpush.msra.mxu0 %v2726
        %2848 = vmatpush.msra.mxu0 %v2722
        %2849 = vmatpush.msra.mxu0 %v2718
        %2850 = vmatmul.f32.gmra.mxu0 %v2772
        %v2851 = vpop.f32.mrf.mxu0
        %v2852 = vadd.f32 0.0, %v2851
        %2853 = vdwg.mxu0
        %v2854 = vadd.f32 %v2473, %v2792
        %v2855 = vadd.f32 %v2553, %v2812
        %v2856 = vadd.f32 %v2633, %v2832
        %v2857 = vadd.f32 %v2713, %v2852
        %2859 = vrot.lane.b32.xlu0 %v2854, 64
        %v2860 = vpop.permute.xlu0 %2859
        %v2862 = vmax.f32 %v2854, %v2860
        %v2863 = vmax.f32 %v2862, %v2855
        %2865 = vrot.lane.b32.xlu0 %v2855, 64
        %v2866 = vpop.permute.xlu0 %2865
        %v2868 = vmax.f32 %v2863, %v2866
        %v2869 = vmax.f32 %v2868, %v2856
        %2871 = vrot.lane.b32.xlu0 %v2856, 64
        %v2872 = vpop.permute.xlu0 %2871
        %v2874 = vmax.f32 %v2869, %v2872
        %v2875 = vmax.f32 %v2874, %v2857
        %2877 = vrot.lane.b32.xlu0 %v2857, 64
        %v2878 = vpop.permute.xlu0 %2877
        %v2880 = vmax.f32 %v2875, %v2878
        %v2882 = vsel %vm2770, %v2880, 0
        %2884 = vmatpush.msra.mxu0 0.0
        %2885 = vmatpush.msra.mxu0 0.0
        %2886 = vmatpush.msra.mxu0 0.0
        %2887 = vmatpush.msra.mxu0 0.0
        %2888 = vmatpush.msra.mxu0 0.0
        %2889 = vmatpush.msra.mxu0 0.0
        %2890 = vmatpush.msra.mxu0 0.0
        %2891 = vmatpush.msra.mxu0 0.0
        %2892 = vmatpush.msra.mxu0 %v2743
        %2893 = vmatpush.msra.mxu0 %v2739
        %2894 = vmatpush.msra.mxu0 %v2735
        %2895 = vmatpush.msra.mxu0 %v2731
        %2896 = vmatpush.msra.mxu0 %v2727
        %2897 = vmatpush.msra.mxu0 %v2723
        %2898 = vmatpush.msra.mxu0 %v2719
        %2899 = vmatpush.msra.mxu0 %v2715
        %2900 = vmatmul.f32.gmra.mxu0 %v2882
        %v2901 = vpop.f32.mrf.mxu0
        %v2902 = vadd.f32 0.0, %v2901
        %2903 = vdwg.mxu0
        %2904 = vmatpush.msra.mxu0 0.0
        %2905 = vmatpush.msra.mxu0 0.0
        %2906 = vmatpush.msra.mxu0 0.0
        %2907 = vmatpush.msra.mxu0 0.0
        %2908 = vmatpush.msra.mxu0 0.0
        %2909 = vmatpush.msra.mxu0 0.0
        %2910 = vmatpush.msra.mxu0 0.0
        %2911 = vmatpush.msra.mxu0 0.0
        %2912 = vmatpush.msra.mxu0 %v2744
        %2913 = vmatpush.msra.mxu0 %v2740
        %2914 = vmatpush.msra.mxu0 %v2736
        %2915 = vmatpush.msra.mxu0 %v2732
        %2916 = vmatpush.msra.mxu0 %v2728
        %2917 = vmatpush.msra.mxu0 %v2724
        %2918 = vmatpush.msra.mxu0 %v2720
        %2919 = vmatpush.msra.mxu0 %v2716
        %2920 = vmatmul.f32.gmra.mxu0 %v2882
        %v2921 = vpop.f32.mrf.mxu0
        %v2922 = vadd.f32 0.0, %v2921
        %2923 = vdwg.mxu0
        %2924 = vmatpush.msra.mxu0 0.0
        %2925 = vmatpush.msra.mxu0 0.0
        %2926 = vmatpush.msra.mxu0 0.0
        %2927 = vmatpush.msra.mxu0 0.0
        %2928 = vmatpush.msra.mxu0 0.0
        %2929 = vmatpush.msra.mxu0 0.0
        %2930 = vmatpush.msra.mxu0 0.0
        %2931 = vmatpush.msra.mxu0 0.0
        %2932 = vmatpush.msra.mxu0 %v2745
        %2933 = vmatpush.msra.mxu0 %v2741
        %2934 = vmatpush.msra.mxu0 %v2737
        %2935 = vmatpush.msra.mxu0 %v2733
        %2936 = vmatpush.msra.mxu0 %v2729
        %2937 = vmatpush.msra.mxu0 %v2725
        %2938 = vmatpush.msra.mxu0 %v2721
        %2939 = vmatpush.msra.mxu0 %v2717
        %2940 = vmatmul.f32.gmra.mxu0 %v2882
        %v2941 = vpop.f32.mrf.mxu0
        %v2942 = vadd.f32 0.0, %v2941
        %2943 = vdwg.mxu0
        %2944 = vmatpush.msra.mxu0 0.0
        %2945 = vmatpush.msra.mxu0 0.0
        %2946 = vmatpush.msra.mxu0 0.0
        %2947 = vmatpush.msra.mxu0 0.0
        %2948 = vmatpush.msra.mxu0 0.0
        %2949 = vmatpush.msra.mxu0 0.0
        %2950 = vmatpush.msra.mxu0 0.0
        %2951 = vmatpush.msra.mxu0 0.0
        %2952 = vmatpush.msra.mxu0 %v2746
        %2953 = vmatpush.msra.mxu0 %v2742
        %2954 = vmatpush.msra.mxu0 %v2738
        %2955 = vmatpush.msra.mxu0 %v2734
        %2956 = vmatpush.msra.mxu0 %v2730
        %2957 = vmatpush.msra.mxu0 %v2726
        %2958 = vmatpush.msra.mxu0 %v2722
        %2959 = vmatpush.msra.mxu0 %v2718
        %2960 = vmatmul.f32.gmra.mxu0 %v2882
        %v2961 = vpop.f32.mrf.mxu0
        %v2962 = vadd.f32 0.0, %v2961
        %2963 = vdwg.mxu0
        %v2964 = vadd.f32 %v2473, %v2902
        %v2965 = vadd.f32 %v2553, %v2922
        %v2966 = vadd.f32 %v2633, %v2942
        %v2967 = vadd.f32 %v2713, %v2962
        %2969 = vrot.lane.b32.xlu0 %v2964, 64
        %v2970 = vpop.permute.xlu0 %2969
        %v2972 = vmax.f32 %v2964, %v2970
        %v2973 = vmax.f32 %v2972, %v2965
        %2975 = vrot.lane.b32.xlu0 %v2965, 64
        %v2976 = vpop.permute.xlu0 %2975
        %v2978 = vmax.f32 %v2973, %v2976
        %v2979 = vmax.f32 %v2978, %v2966
        %2981 = vrot.lane.b32.xlu0 %v2966, 64
        %v2982 = vpop.permute.xlu0 %2981
        %v2984 = vmax.f32 %v2979, %v2982
        %v2985 = vmax.f32 %v2984, %v2967
        %2987 = vrot.lane.b32.xlu0 %v2967, 64
        %v2988 = vpop.permute.xlu0 %2987
        %v2990 = vmax.f32 %v2985, %v2988
        %v2992 = vsel %vm2770, %v2990, 0
        %2994 = vmatpush.msra.mxu0 0.0
        %2995 = vmatpush.msra.mxu0 0.0
        %2996 = vmatpush.msra.mxu0 0.0
        %2997 = vmatpush.msra.mxu0 0.0
        %2998 = vmatpush.msra.mxu0 0.0
        %2999 = vmatpush.msra.mxu0 0.0
        %3000 = vmatpush.msra.mxu0 0.0
        %3001 = vmatpush.msra.mxu0 0.0
        %3002 = vmatpush.msra.mxu0 %v2743
        %3003 = vmatpush.msra.mxu0 %v2739
        %3004 = vmatpush.msra.mxu0 %v2735
        %3005 = vmatpush.msra.mxu0 %v2731
        %3006 = vmatpush.msra.mxu0 %v2727
        %3007 = vmatpush.msra.mxu0 %v2723
        %3008 = vmatpush.msra.mxu0 %v2719
        %3009 = vmatpush.msra.mxu0 %v2715
        %3010 = vmatmul.f32.gmra.mxu0 %v2992
        %v3011 = vpop.f32.mrf.mxu0
        %v3012 = vadd.f32 0.0, %v3011
        %3013 = vdwg.mxu0
        %3014 = vmatpush.msra.mxu0 0.0
        %3015 = vmatpush.msra.mxu0 0.0
        %3016 = vmatpush.msra.mxu0 0.0
        %3017 = vmatpush.msra.mxu0 0.0
        %3018 = vmatpush.msra.mxu0 0.0
        %3019 = vmatpush.msra.mxu0 0.0
        %3020 = vmatpush.msra.mxu0 0.0
        %3021 = vmatpush.msra.mxu0 0.0
        %3022 = vmatpush.msra.mxu0 %v2744
        %3023 = vmatpush.msra.mxu0 %v2740
        %3024 = vmatpush.msra.mxu0 %v2736
        %3025 = vmatpush.msra.mxu0 %v2732
        %3026 = vmatpush.msra.mxu0 %v2728
        %3027 = vmatpush.msra.mxu0 %v2724
        %3028 = vmatpush.msra.mxu0 %v2720
        %3029 = vmatpush.msra.mxu0 %v2716
        %3030 = vmatmul.f32.gmra.mxu0 %v2992
        %v3031 = vpop.f32.mrf.mxu0
        %v3032 = vadd.f32 0.0, %v3031
        %3033 = vdwg.mxu0
        %3034 = vmatpush.msra.mxu0 0.0
        %3035 = vmatpush.msra.mxu0 0.0
        %3036 = vmatpush.msra.mxu0 0.0
        %3037 = vmatpush.msra.mxu0 0.0
        %3038 = vmatpush.msra.mxu0 0.0
        %3039 = vmatpush.msra.mxu0 0.0
        %3040 = vmatpush.msra.mxu0 0.0
        %3041 = vmatpush.msra.mxu0 0.0
        %3042 = vmatpush.msra.mxu0 %v2745
        %3043 = vmatpush.msra.mxu0 %v2741
        %3044 = vmatpush.msra.mxu0 %v2737
        %3045 = vmatpush.msra.mxu0 %v2733
        %3046 = vmatpush.msra.mxu0 %v2729
        %3047 = vmatpush.msra.mxu0 %v2725
        %3048 = vmatpush.msra.mxu0 %v2721
        %3049 = vmatpush.msra.mxu0 %v2717
        %3050 = vmatmul.f32.gmra.mxu0 %v2992
        %v3051 = vpop.f32.mrf.mxu0
        %v3052 = vadd.f32 0.0, %v3051
        %3053 = vdwg.mxu0
        %3054 = vmatpush.msra.mxu0 0.0
        %3055 = vmatpush.msra.mxu0 0.0
        %3056 = vmatpush.msra.mxu0 0.0
        %3057 = vmatpush.msra.mxu0 0.0
        %3058 = vmatpush.msra.mxu0 0.0
        %3059 = vmatpush.msra.mxu0 0.0
        %3060 = vmatpush.msra.mxu0 0.0
        %3061 = vmatpush.msra.mxu0 0.0
        %3062 = vmatpush.msra.mxu0 %v2746
        %3063 = vmatpush.msra.mxu0 %v2742
        %3064 = vmatpush.msra.mxu0 %v2738
        %3065 = vmatpush.msra.mxu0 %v2734
        %3066 = vmatpush.msra.mxu0 %v2730
        %3067 = vmatpush.msra.mxu0 %v2726
        %3068 = vmatpush.msra.mxu0 %v2722
        %3069 = vmatpush.msra.mxu0 %v2718
        %3070 = vmatmul.f32.gmra.mxu0 %v2992
        %v3071 = vpop.f32.mrf.mxu0
        %v3072 = vadd.f32 0.0, %v3071
        %3073 = vdwg.mxu0
        %v3074 = vadd.f32 %v2473, %v3012
        %v3075 = vadd.f32 %v2553, %v3032
        %v3076 = vadd.f32 %v2633, %v3052
        %v3077 = vadd.f32 %v2713, %v3072
        %3079 = vrot.lane.b32.xlu0 %v3074, 64
        %v3080 = vpop.permute.xlu0 %3079
        %v3082 = vmax.f32 %v3074, %v3080
        %v3083 = vmax.f32 %v3082, %v3075
        %3085 = vrot.lane.b32.xlu0 %v3075, 64
        %v3086 = vpop.permute.xlu0 %3085
        %v3088 = vmax.f32 %v3083, %v3086
        %v3089 = vmax.f32 %v3088, %v3076
        %3091 = vrot.lane.b32.xlu0 %v3076, 64
        %v3092 = vpop.permute.xlu0 %3091
        %v3094 = vmax.f32 %v3089, %v3092
        %v3095 = vmax.f32 %v3094, %v3077
        %3097 = vrot.lane.b32.xlu0 %v3077, 64
        %v3098 = vpop.permute.xlu0 %3097
        %v3100 = vmax.f32 %v3095, %v3098
        %v3101 = vld [vmem:[%s9] sm:$0xff]
        %v3102 = vld [vmem:[%s9 + $0x8] sm:$0xff]
        %v3103 = vld [vmem:[%s9 + $0x10] sm:$0xff]
        %v3104 = vld [vmem:[%s9 + $0x18] sm:$0xff]
        %v3105 = vld [vmem:[%s9 + $0x20] sm:$0xff]
        %v3106 = vld [vmem:[%s9 + $0x28] sm:$0xff]
        %v3107 = vld [vmem:[%s9 + $0x30] sm:$0xff]
        %v3108 = vld [vmem:[%s9 + $0x38] sm:$0xff]
        %v3109 = vld [vmem:[#allocation2] sm:$0x1]
        %v3111 = vsel %vm2770, %v3100, 0
        %3113 = vmatpush.msra.mxu0 0.0
        %3114 = vmatpush.msra.mxu0 0.0
        %3115 = vmatpush.msra.mxu0 0.0
        %3116 = vmatpush.msra.mxu0 0.0
        %3117 = vmatpush.msra.mxu0 0.0
        %3118 = vmatpush.msra.mxu0 0.0
        %3119 = vmatpush.msra.mxu0 0.0
        %3120 = vmatpush.msra.mxu0 0.0
        %3121 = vmatpush.msra.mxu0 %v3108
        %3122 = vmatpush.msra.mxu0 %v3107
        %3123 = vmatpush.msra.mxu0 %v3106
        %3124 = vmatpush.msra.mxu0 %v3105
        %3125 = vmatpush.msra.mxu0 %v3104
        %3126 = vmatpush.msra.mxu0 %v3103
        %3127 = vmatpush.msra.mxu0 %v3102
        %3128 = vmatpush.msra.mxu0 %v3101
        %3129 = vmatmul.f32.gmra.mxu0 %v3111
        %v3130 = vpop.f32.mrf.mxu0
        %v3131 = vadd.f32 %v3109, %v3130
        %3132 = vdwg.mxu0
        %vm3133 = vcmask 0
        %3134 = vst.msk [vmem:[%s650] sm:$0x1] %vm3133, %v3131
        %v3135 = vld [vmem:[%s647] sm:$0x1]
        %v3136 = vld [vmem:[%s12] sm:$0xff]
        %v3137 = vld [vmem:[%s12 + $0x8] sm:$0xff]
        %v3138 = vld [vmem:[%s12 + $0x10] sm:$0xff]
        %v3139 = vld [vmem:[%s13] sm:$0x1]
        %vm3140 = vcmask 195584
        %v3142 = vsel %vm3140, %v3135, 0
        %3144 = vmatpush.msra.mxu0 0.0
        %3145 = vmatpush.msra.mxu0 0.0
        %3146 = vmatpush.msra.mxu0 0.0
        %3147 = vmatpush.msra.mxu0 0.0
        %3148 = vmatpush.msra.mxu0 0.0
        %3149 = vmatpush.msra.mxu0 0.0
        %3150 = vmatpush.msra.mxu0 0.0
        %3151 = vmatpush.msra.mxu0 0.0
        %3152 = vmatpush.msra.mxu0 0.0
        %3153 = vmatpush.msra.mxu0 0.0
        %3154 = vmatpush.msra.mxu0 0.0
        %3155 = vmatpush.msra.mxu0 0.0
        %3156 = vmatpush.msra.mxu0 0.0
        %3157 = vmatpush.msra.mxu0 %v3138
        %3158 = vmatpush.msra.mxu0 %v3137
        %3159 = vmatpush.msra.mxu0 %v3136
        %3160 = vmatmul.f32.gmra.mxu0 %v3142
        %v3161 = vpop.f32.mrf.mxu0
        %v3162 = vadd.f32 %v3139, %v3161
        %3163 = vdwg.mxu0
        %v3164 = vmax.f32 %v3162, 0.0
        %v3165 = vld [vmem:[%s14] sm:$0xff]
        %v3166 = vld [vmem:[%s14 + $0x8] sm:$0xff]
        %v3167 = vld [vmem:[%s14 + $0x10] sm:$0xff]
        %v3168 = vld [vmem:[%s14 + $0x18] sm:$0xff]
        %v3169 = vld [vmem:[%s14 + $0x20] sm:$0xff]
        %v3170 = vld [vmem:[%s14 + $0x28] sm:$0xff]
        %v3171 = vld [vmem:[%s14 + $0x30] sm:$0xff]
        %v3172 = vld [vmem:[%s14 + $0x38] sm:$0xff]
        %v3173 = vld [vmem:[%s14 + $0x40] sm:$0xff]
        %v3174 = vld [vmem:[%s14 + $0x48] sm:$0xff]
        %v3175 = vld [vmem:[%s14 + $0x50] sm:$0xff]
        %v3176 = vld [vmem:[%s14 + $0x58] sm:$0xff]
        %v3177 = vld [vmem:[%s14 + $0x60] sm:$0xf]
        %v3178 = vld [vmem:[%s15] sm:$0x1]
        %vm3179 = vcmask 818176
        %v3181 = vsel %vm3179, %v3164, 0
        %vm3183 = vcmask 1043456
        %v3185 = vsel %vm3183, %v3177, 0
        %3187 = vmatpush.msra.mxu0 0.0
        %3188 = vmatpush.msra.mxu0 0.0
        %3189 = vmatpush.msra.mxu0 0.0
        %3190 = vmatpush.msra.mxu0 %v3185
        %3191 = vmatpush.msra.mxu0 %v3176
        %3192 = vmatpush.msra.mxu0 %v3175
        %3193 = vmatpush.msra.mxu0 %v3174
        %3194 = vmatpush.msra.mxu0 %v3173
        %3195 = vmatpush.msra.mxu0 %v3172
        %3196 = vmatpush.msra.mxu0 %v3171
        %3197 = vmatpush.msra.mxu0 %v3170
        %3198 = vmatpush.msra.mxu0 %v3169
        %3199 = vmatpush.msra.mxu0 %v3168
        %3200 = vmatpush.msra.mxu0 %v3167
        %3201 = vmatpush.msra.mxu0 %v3166
        %3202 = vmatpush.msra.mxu0 %v3165
        %3203 = vmatmul.f32.gmra.mxu0 %v3181
        %v3204 = vpop.f32.mrf.mxu0
        %v3205 = vadd.f32 %v3178, %v3204
        %3206 = vdwg.mxu0
        %v3207 = vmax.f32 %v3205, 0.0
        %vm3208 = vcmask 73728
        %3209 = vst.msk [vmem:[%s640] sm:$0x1] %vm3208, %v3207
        %p3210 = scmp.lt.s32.totalorder %s37, 1
        %s3211 = scalar_select %p3210, %s37, 1
        %s3212 = scalar_lea.vmem %s16, %s3211
        %s3213 = sand.u32 %s417, 1
        %s3214 = scalar_lea.sflag [#allocation5], %s3213
        %s3215 = sand.u32 %s417, 1
        %s3216 = scalar_lea.vmem [#allocation12], %s3215
        // Predicated region
        $region105: #{tpu_custom_call.1} parent=83 // pred_check
          %p3217 = pneg %p401
        $region106: #{tpu_custom_call.1} parent=83 // pred_check_branch
          %3219 = sbr.rel (%p3217) target = $region108
        $region107: #{tpu_custom_call.1} parent=83 // pred_region
          _
        $region108: #{tpu_custom_call.1} parent=83 // pred_fallthru
          _
        // Predicated region
        $region109: #{tpu_custom_call.1} parent=83 // pred_check
          %p3220 = pneg %p427
        $region110: #{tpu_custom_call.1} parent=83 // pred_check_branch
          %3222 = sbr.rel (%p3220) target = $region112
        $region111: #{tpu_custom_call.1} parent=83 // pred_region
          %3224 = vsyncadd %s3214, 0
          %s3225 = scalar_lea.hbm %s17, %s37
          %s3227 = sshll.u32 %s3216, 4
          %s3228 = int_to_ptr.vmem [resolvable:$true] %s3227
          %s3229 = sshll.u32 %s3225, 4
          %s3230 = int_to_ptr.hbm [resolvable:$true] %s3229
          %3232 = dma.vmem_to_hbm [thread:$0]  %s3228, 16, %s3230, %s3214
        $region112: #{tpu_custom_call.1} parent=83 // pred_fallthru
          _
      $region84: #{tpu_custom_call.1} parent=5 // pred_fallthru
        _
      %p3233 = scmp.le.s32.totalorder 2, %s32
      // Predicated region
      $region113: #{tpu_custom_call.1} parent=5 // pred_check
        %p3234 = pneg %p3233
      $region114: #{tpu_custom_call.1} parent=5 // pred_check_branch
        %3236 = sbr.rel (%p3234) target = $region116
      $region115: #{tpu_custom_call.1} parent=5 // pred_region
        %s3237 = ssub.s32 %s32, 2
        // Predicated region
        $region117: #{tpu_custom_call.1} parent=115 // pred_check
          %p3238 = pneg %p407
        $region118: #{tpu_custom_call.1} parent=115 // pred_check_branch
          %3240 = sbr.rel (%p3238) target = $region120
        $region119: #{tpu_custom_call.1} parent=115 // pred_region
          %p3241 = scmp.lt.s32.totalorder %s38, 1
          %s3242 = scalar_select %p3241, %s38, 1
          %s3243 = scalar_lea.vmem %s16, %s3242
        $region120: #{tpu_custom_call.1} parent=115 // pred_fallthru
          _
        // Predicated region
        $region121: #{tpu_custom_call.1} parent=115 // pred_check
          %p3244 = pneg %p433
        $region122: #{tpu_custom_call.1} parent=115 // pred_check_branch
          %3246 = sbr.rel (%p3244) target = $region124
        $region123: #{tpu_custom_call.1} parent=115 // pred_region
          %s3247 = sand.u32 %s418, 1
          %s3248 = scalar_lea.sflag [#allocation5], %s3247
          %s3249 = sand.u32 %s418, 1
          %s3250 = scalar_lea.vmem [#allocation12], %s3249
          %3252 = dma.done %s3248, 16
        $region124: #{tpu_custom_call.1} parent=115 // pred_fallthru
          _
      $region116: #{tpu_custom_call.1} parent=5 // pred_fallthru
        _
    $region6: #{tpu_custom_call.1} parent=1 // loop_footer
      %s36 = sadd.s32 1, %s32
    $region7: #{tpu_custom_call.1} parent=1 // loop_footer_branch
      %31 = sbr.rel target = $region3
    $region8: #{tpu_custom_call.1} parent=1 // loop_exit
      _
    %3253 = vsyncpa [#allocation4], 1
    %s3254 = scalar_lea.sflag [#allocation4], 1
    %3255 = vsyncpa %s3254, 1
    %3256 = vsyncpa [#allocation7], 1
    %3257 = vsyncpa [#allocation10], 1
    %3258 = vsyncpa [#allocation5], 1
    %s3259 = scalar_lea.sflag [#allocation5], 1
    %3260 = vsyncpa %s3259, 1

</llo_original>
